<compile_context>
chip_gen: v5e
topology: v5e:2x2
jax: 0.10.0
libtpu: 0.0.40
codegen_flags: <defaults>
</compile_context>

<pallas_src>
import functools

import jax
import jax.numpy as jnp
import numpy as np
from jax.experimental import pallas as pl
from jax.experimental.pallas import tpu as pltpu  # noqa: F401  (kept for TPU-specific tuning hooks)

LANE = 128


def _round_up(n, m=LANE):
    return ((n + m - 1) // m) * m


# ----------------------------------------------------------------------------
# Fused Pallas kernel: whole GCNED forward in one invocation (grid = ()).
# ----------------------------------------------------------------------------
def gcned_fused_kernel(x_ref, adj_ref,
                       e1w_ref, e1b_ref, e2w_ref, e2b_ref,
                       d1w_ref, d1b_ref, d2w_ref, d2b_ref,
                       z_ref, xrec_ref,
                       *, support, latent_dims):
    def gcn(feat, w_ref, b_ref, leaky):
        # Compute dtype for the MXU inputs (f32 or bf16); accumulation is f32.
        cdt = w_ref.dtype
        feat_c = feat.astype(cdt)
        # adj[s] @ feat for each support, lane-concat (layout-only: Fin_p is a
        # multiple of 128) -> single K = S*Fin_p contraction on the MXU.
        af_cat = jnp.concatenate(
            [jnp.dot(adj_ref[s], feat_c, preferred_element_type=jnp.float32)
             for s in range(support)],
            axis=1)
        w_flat = w_ref[...].reshape(-1, w_ref.shape[-1])      # (S*Fin_p, Fout_p), free reshape
        y = jnp.dot(af_cat.astype(cdt), w_flat,
                    preferred_element_type=jnp.float32) + b_ref[...]
        if leaky:
            y = jnp.where(y > 0, y, 0.01 * y)                  # F.leaky_relu, slope 0.01
        return y

    # ---- encode (dropout = identity at inference) ----
    h = gcn(x_ref[...], e1w_ref, e1b_ref, leaky=True)
    z_raw = gcn(h, e2w_ref, e2b_ref, leaky=False)

    # ---- l2_activate, fused (padded lanes excluded from min/max/norm) ----
    lane = jax.lax.broadcasted_iota(jnp.int32, z_raw.shape, 1)
    valid = lane < latent_dims
    zmax = jnp.max(jnp.where(valid, z_raw, -jnp.inf), axis=1, keepdims=True)
    zmin = jnp.min(jnp.where(valid, z_raw, jnp.inf), axis=1, keepdims=True)
    denom = zmax - zmin
    safe_denom = jnp.where(denom > 0, denom, 1.0)
    inv_denom = pl.reciprocal(safe_denom, approx=False)        # EUP, off the VALU path
    # torch.nan_to_num((z-zmin)/(zmax-zmin), 0): numerator is 0 whenever denom==0
    z_std = jnp.where(valid & (denom > 0), (z_raw - zmin) * inv_denom, 0.0)
    sumsq = jnp.sum(z_std * z_std, axis=1, keepdims=True)
    # F.normalize(p=2, dim=1): x / max(||x||, 1e-12) == x * rsqrt(max(sumsq, 1e-24))
    z = z_std * jax.lax.rsqrt(jnp.maximum(sumsq, 1e-24))
    z_ref[...] = z

    # ---- decode ----
    d = gcn(z, d1w_ref, d1b_ref, leaky=True)
    xrec_ref[...] = gcn(d, d2w_ref, d2b_ref, leaky=False)


# ----------------------------------------------------------------------------
# One-time parameter padding (hoisted out of the per-call forward path)
# ----------------------------------------------------------------------------
def pad_params(params, compute_dtype=jnp.float32):
    """Zero-pad weights/biases to 128-lane multiples ONCE at init.

    Weights are optionally pre-cast to `compute_dtype` (e.g. bf16) for the MXU;
    biases stay f32 (they feed the f32 epilogue).  Zero padding is exact
    through matmul / bias / leaky_relu and is masked out of l2_activate.
    """
    def pad_w(w):
        fin_p, fout_p = _round_up(w.shape[1]), _round_up(w.shape[2])
        w = jnp.pad(w, ((0, 0), (0, fin_p - w.shape[1]), (0, fout_p - w.shape[2])))
        return w.astype(compute_dtype)

    def pad_b(b):
        fout_p = _round_up(b.shape[1])
        return jnp.pad(b, ((0, 0), (0, fout_p - b.shape[1]))).astype(jnp.float32)

    return {
        "enc1_w": pad_w(params["enc1_w"]), "enc1_b": pad_b(params["enc1_b"]),
        "enc2_w": pad_w(params["enc2_w"]), "enc2_b": pad_b(params["enc2_b"]),
        "dec1_w": pad_w(params["dec1_w"]), "dec1_b": pad_b(params["dec1_b"]),
        "dec2_w": pad_w(params["dec2_w"]), "dec2_b": pad_b(params["dec2_b"]),
    }


# ----------------------------------------------------------------------------
# Jitted forward on pre-padded params.  Returns lane-PADDED (z, x_rec).
# ----------------------------------------------------------------------------
@functools.partial(jax.jit, static_argnames=("support", "latent_dims"))
def gcned_forward_padded(x, adj, pp, *, support, latent_dims):
    """GCNED.forward.  Slice [:, :latent_dims] / [:, :feature_dims] at the
    consumer; padded outputs avoid extra per-call XLA slice ops."""
    N, F = x.shape
    compute_dtype = pp["enc1_w"].dtype
    Fp = pp["dec2_w"].shape[-1]
    Lp = pp["enc2_w"].shape[-1]

    xp = jnp.pad(x, ((0, 0), (0, Fp - F)))
    adj_c = adj.astype(compute_dtype)   # no-op in the f32 path

    kernel = functools.partial(gcned_fused_kernel,
                               support=support, latent_dims=latent_dims)
    z_pad, xrec_pad = pl.pallas_call(
        kernel,
        out_shape=(jax.ShapeDtypeStruct((N, Lp), jnp.float32),
                   jax.ShapeDtypeStruct((N, Fp), jnp.float32)),
    )(xp, adj_c,
      pp["enc1_w"], pp["enc1_b"], pp["enc2_w"], pp["enc2_b"],
      pp["dec1_w"], pp["dec1_b"], pp["dec2_w"], pp["dec2_b"])
    return z_pad, xrec_pad


# ----------------------------------------------------------------------------
# Pure-JAX reference (mirrors the PyTorch math) for a correctness check
# ----------------------------------------------------------------------------
def _ref_gcn_layer(adj, feat, weight, bias, apply_leaky):
    S = adj.shape[0]
    supports = jnp.concatenate([adj[s] @ feat for s in range(S)], axis=1)
    w_flat = weight.reshape(S * feat.shape[1], weight.shape[-1])
    out = supports @ w_flat + bias[0]
    if apply_leaky:
        out = jnp.where(out > 0, out, 0.01 * out)
    return out


def _ref_l2_activate(z):
    zmax = jnp.max(z, axis=1, keepdims=True)
    zmin = jnp.min(z, axis=1, keepdims=True)
    denom = zmax - zmin
    z_std = jnp.where(denom > 0, (z - zmin) / jnp.where(denom > 0, denom, 1.0), 0.0)
    norm = jnp.sqrt(jnp.sum(z_std * z_std, axis=1, keepdims=True))
    return z_std / jnp.maximum(norm, 1e-12)


def _ref_forward(x, adj, p):
    h = _ref_gcn_layer(adj, x, p["enc1_w"], p["enc1_b"], True)
    z = _ref_l2_activate(_ref_gcn_layer(adj, h, p["enc2_w"], p["enc2_b"], False))
    d = _ref_gcn_layer(adj, z, p["dec1_w"], p["dec1_b"], True)
    xr = _ref_gcn_layer(adj, d, p["dec2_w"], p["dec2_b"], False)
    return z, xr


# ----------------------------------------------------------------------------
# Parameter construction (deterministic, synthetic init)
# ----------------------------------------------------------------------------
def make_params(key, feature_dims, support, latent_dims, hidden_dims):
    def layer(key, fin, fout, kind):
        kw, kb = jax.random.split(key)
        if kind == "kaiming":
            std = np.sqrt(2.0 / fout)  # torch kaiming_normal_ on 2-D: fan_in = size(1)
            w = std * jax.random.normal(kw, (support, fin, fout), jnp.float32)
        else:  # xavier_uniform
            a = np.sqrt(6.0 / (fin * support + fout))
            w = jax.random.uniform(kw, (support, fin, fout), jnp.float32, -a, a)
        stdv = 1.0 / np.sqrt(fout)
        b = jax.random.uniform(kb, (1, fout), jnp.float32, -stdv, stdv)
        return w, b

    k1, k2, k3, k4 = jax.random.split(key, 4)
    e1w, e1b = layer(k1, feature_dims, hidden_dims, "kaiming")
    e2w, e2b = layer(k2, hidden_dims, latent_dims, "xavier")
    d1w, d1b = layer(k3, latent_dims, hidden_dims, "kaiming")
    d2w, d2b = layer(k4, hidden_dims, feature_dims, "xavier")
    return {"enc1_w": e1w, "enc1_b": e1b, "enc2_w": e2w, "enc2_b": e2b,
            "dec1_w": d1w, "dec1_b": d1b, "dec2_w": d2w, "dec2_b": d2b}


if __name__ == "__main__":
    # Small synthetic shapes consistent with the module
    N_NODES, FEATURE_DIMS, SUPPORT = 128, 32, 3
    LATENT_DIMS, HIDDEN_DIMS = 8, 64

    root = jax.random.PRNGKey(0)
    k_x, k_adj, k_p = jax.random.split(root, 3)

    x = jax.random.normal(k_x, (N_NODES, FEATURE_DIMS), jnp.float32)

    # Chebyshev-like basis: T0 = I, T1 = normalized symmetric matrix, T2 = 2*T1@T1 - I
    a = jax.random.uniform(k_adj, (N_NODES, N_NODES), jnp.float32)
    a = (a + a.T) * 0.5
    a = a / jnp.sum(a, axis=1, keepdims=True)
    eye = jnp.eye(N_NODES, dtype=jnp.float32)
    adj = jnp.stack([eye, a, 2.0 * (a @ a) - eye], axis=0)[:SUPPORT]

    params = make_params(k_p, FEATURE_DIMS, SUPPORT, LATENT_DIMS, HIDDEN_DIMS)

    # ---- default f32 path: padding hoisted to init, tight validation ----
    pp32 = pad_params(params, jnp.float32)
    z_pad, xr_pad = jax.block_until_ready(
        gcned_forward_padded(x, adj, pp32, support=SUPPORT, latent_dims=LATENT_DIMS))
    z = np.asarray(z_pad)[:, :LATENT_DIMS]
    x_rec = np.asarray(xr_pad)[:, :FEATURE_DIMS]

    z_ref, xr_ref = _ref_forward(x, adj, params)
    assert z.shape == (N_NODES, LATENT_DIMS) and x_rec.shape == (N_NODES, FEATURE_DIMS)
    np.testing.assert_allclose(z, np.asarray(z_ref), rtol=1e-4, atol=2e-4)
    np.testing.assert_allclose(x_rec, np.asarray(xr_ref), rtol=1e-4, atol=2e-4)

    # ---- optional bf16 MXU-input path (f32 accumulation): sanity check only ----
    pp_bf16 = pad_params(params, jnp.bfloat16)
    zb_pad, xb_pad = jax.block_until_ready(
        gcned_forward_padded(x, adj, pp_bf16, support=SUPPORT, latent_dims=LATENT_DIMS))
    assert bool(jnp.all(jnp.isfinite(zb_pad))) and bool(jnp.all(jnp.isfinite(xb_pad)))
    assert float(jnp.max(jnp.abs(zb_pad[:, :LATENT_DIMS] - z_ref))) < 0.25

    print("KERNEL_OK")
</pallas_src>

<mosaic_0001>
module attributes {stable_mosaic.version = 11 : i64} {
  func.func @gcned_fused_kernel(%arg0: memref<128x128xf32, #tpu.memory_space<vmem>>, %arg1: memref<3x128x128xf32, #tpu.memory_space<vmem>>, %arg2: memref<3x128x128xf32, #tpu.memory_space<vmem>>, %arg3: memref<1x128xf32, #tpu.memory_space<vmem>>, %arg4: memref<3x128x128xf32, #tpu.memory_space<vmem>>, %arg5: memref<1x128xf32, #tpu.memory_space<vmem>>, %arg6: memref<3x128x128xf32, #tpu.memory_space<vmem>>, %arg7: memref<1x128xf32, #tpu.memory_space<vmem>>, %arg8: memref<3x128x128xf32, #tpu.memory_space<vmem>>, %arg9: memref<1x128xf32, #tpu.memory_space<vmem>>, %arg10: memref<128x128xf32, #tpu.memory_space<vmem>>, %arg11: memref<128x128xf32, #tpu.memory_space<vmem>>) attributes {dimension_semantics = [], scalar_prefetch = 0 : i64, scratch_operands = 0 : i64, tpu.core_type = #tpu.core_type<tc>} {
    %c0 = arith.constant 0 : index
    %c0_0 = arith.constant 0 : index
    %0 = vector.load %arg0[%c0, %c0_0] : memref<128x128xf32, #tpu.memory_space<vmem>>, vector<128x128xf32>
    %c0_1 = arith.constant 0 : index
    %c0_2 = arith.constant 0 : index
    %c0_3 = arith.constant 0 : index
    %1 = vector.load %arg1[%c0_1, %c0_2, %c0_3] : memref<3x128x128xf32, #tpu.memory_space<vmem>>, vector<1x128x128xf32>
    %2 = vector.shape_cast %1 : vector<1x128x128xf32> to vector<128x128xf32>
    %cst = arith.constant dense<0.000000e+00> : vector<128x128xf32>
    %3 = tpu.matmul %2, %0, %cst {dimension_numbers = #tpu.dot_dimension_numbers<[1], [0], [0], [1], [0, 0, 1, 1], [], []>} : vector<128x128xf32>, vector<128x128xf32>, vector<128x128xf32> -> vector<128x128xf32>
    %c1 = arith.constant 1 : index
    %c0_4 = arith.constant 0 : index
    %c0_5 = arith.constant 0 : index
    %4 = vector.load %arg1[%c1, %c0_4, %c0_5] : memref<3x128x128xf32, #tpu.memory_space<vmem>>, vector<1x128x128xf32>
    %5 = vector.shape_cast %4 : vector<1x128x128xf32> to vector<128x128xf32>
    %cst_6 = arith.constant dense<0.000000e+00> : vector<128x128xf32>
    %6 = tpu.matmul %5, %0, %cst_6 {dimension_numbers = #tpu.dot_dimension_numbers<[1], [0], [0], [1], [0, 0, 1, 1], [], []>} : vector<128x128xf32>, vector<128x128xf32>, vector<128x128xf32> -> vector<128x128xf32>
    %c2 = arith.constant 2 : index
    %c0_7 = arith.constant 0 : index
    %c0_8 = arith.constant 0 : index
    %7 = vector.load %arg1[%c2, %c0_7, %c0_8] : memref<3x128x128xf32, #tpu.memory_space<vmem>>, vector<1x128x128xf32>
    %8 = vector.shape_cast %7 : vector<1x128x128xf32> to vector<128x128xf32>
    %cst_9 = arith.constant dense<0.000000e+00> : vector<128x128xf32>
    %9 = tpu.matmul %8, %0, %cst_9 {dimension_numbers = #tpu.dot_dimension_numbers<[1], [0], [0], [1], [0, 0, 1, 1], [], []>} : vector<128x128xf32>, vector<128x128xf32>, vector<128x128xf32> -> vector<128x128xf32>
    %10 = tpu.concatenate %3, %6, %9 in 1 : vector<128x128xf32>, vector<128x128xf32>, vector<128x128xf32> -> vector<128x384xf32>
    %c0_10 = arith.constant 0 : index
    %c0_11 = arith.constant 0 : index
    %c0_12 = arith.constant 0 : index
    %11 = vector.load %arg2[%c0_10, %c0_11, %c0_12] : memref<3x128x128xf32, #tpu.memory_space<vmem>>, vector<3x128x128xf32>
    %12 = vector.shape_cast %11 : vector<3x128x128xf32> to vector<384x128xf32>
    %cst_13 = arith.constant dense<0.000000e+00> : vector<128x128xf32>
    %13 = tpu.matmul %10, %12, %cst_13 {dimension_numbers = #tpu.dot_dimension_numbers<[1], [0], [0], [1], [0, 0, 1, 1], [], []>} : vector<128x384xf32>, vector<384x128xf32>, vector<128x128xf32> -> vector<128x128xf32>
    %c0_14 = arith.constant 0 : index
    %c0_15 = arith.constant 0 : index
    %14 = vector.load %arg3[%c0_14, %c0_15] : memref<1x128xf32, #tpu.memory_space<vmem>>, vector<1x128xf32>
    %15 = vector.broadcast %14 : vector<1x128xf32> to vector<128x128xf32>
    %16 = arith.addf %13, %15 : vector<128x128xf32>
    %cst_16 = arith.constant 0.000000e+00 : f32
    %17 = vector.broadcast %cst_16 : f32 to vector<128x128xf32>
    %18 = arith.cmpf ogt, %16, %17 : vector<128x128xf32>
    %cst_17 = arith.constant 0.00999999977 : f32
    %19 = vector.broadcast %cst_17 : f32 to vector<128x128xf32>
    %20 = arith.mulf %19, %16 : vector<128x128xf32>
    %21 = arith.select %18, %16, %20 : vector<128x128xi1>, vector<128x128xf32>
    %c0_18 = arith.constant 0 : index
    %c0_19 = arith.constant 0 : index
    %c0_20 = arith.constant 0 : index
    %22 = vector.load %arg1[%c0_18, %c0_19, %c0_20] : memref<3x128x128xf32, #tpu.memory_space<vmem>>, vector<1x128x128xf32>
    %23 = vector.shape_cast %22 : vector<1x128x128xf32> to vector<128x128xf32>
    %cst_21 = arith.constant dense<0.000000e+00> : vector<128x128xf32>
    %24 = tpu.matmul %23, %21, %cst_21 {dimension_numbers = #tpu.dot_dimension_numbers<[1], [0], [0], [1], [0, 0, 1, 1], [], []>} : vector<128x128xf32>, vector<128x128xf32>, vector<128x128xf32> -> vector<128x128xf32>
    %c1_22 = arith.constant 1 : index
    %c0_23 = arith.constant 0 : index
    %c0_24 = arith.constant 0 : index
    %25 = vector.load %arg1[%c1_22, %c0_23, %c0_24] : memref<3x128x128xf32, #tpu.memory_space<vmem>>, vector<1x128x128xf32>
    %26 = vector.shape_cast %25 : vector<1x128x128xf32> to vector<128x128xf32>
    %cst_25 = arith.constant dense<0.000000e+00> : vector<128x128xf32>
    %27 = tpu.matmul %26, %21, %cst_25 {dimension_numbers = #tpu.dot_dimension_numbers<[1], [0], [0], [1], [0, 0, 1, 1], [], []>} : vector<128x128xf32>, vector<128x128xf32>, vector<128x128xf32> -> vector<128x128xf32>
    %c2_26 = arith.constant 2 : index
    %c0_27 = arith.constant 0 : index
    %c0_28 = arith.constant 0 : index
    %28 = vector.load %arg1[%c2_26, %c0_27, %c0_28] : memref<3x128x128xf32, #tpu.memory_space<vmem>>, vector<1x128x128xf32>
    %29 = vector.shape_cast %28 : vector<1x128x128xf32> to vector<128x128xf32>
    %cst_29 = arith.constant dense<0.000000e+00> : vector<128x128xf32>
    %30 = tpu.matmul %29, %21, %cst_29 {dimension_numbers = #tpu.dot_dimension_numbers<[1], [0], [0], [1], [0, 0, 1, 1], [], []>} : vector<128x128xf32>, vector<128x128xf32>, vector<128x128xf32> -> vector<128x128xf32>
    %31 = tpu.concatenate %24, %27, %30 in 1 : vector<128x128xf32>, vector<128x128xf32>, vector<128x128xf32> -> vector<128x384xf32>
    %c0_30 = arith.constant 0 : index
    %c0_31 = arith.constant 0 : index
    %c0_32 = arith.constant 0 : index
    %32 = vector.load %arg4[%c0_30, %c0_31, %c0_32] : memref<3x128x128xf32, #tpu.memory_space<vmem>>, vector<3x128x128xf32>
    %33 = vector.shape_cast %32 : vector<3x128x128xf32> to vector<384x128xf32>
    %cst_33 = arith.constant dense<0.000000e+00> : vector<128x128xf32>
    %34 = tpu.matmul %31, %33, %cst_33 {dimension_numbers = #tpu.dot_dimension_numbers<[1], [0], [0], [1], [0, 0, 1, 1], [], []>} : vector<128x384xf32>, vector<384x128xf32>, vector<128x128xf32> -> vector<128x128xf32>
    %c0_34 = arith.constant 0 : index
    %c0_35 = arith.constant 0 : index
    %35 = vector.load %arg5[%c0_34, %c0_35] : memref<1x128xf32, #tpu.memory_space<vmem>>, vector<1x128xf32>
    %36 = vector.broadcast %35 : vector<1x128xf32> to vector<128x128xf32>
    %37 = arith.addf %34, %36 : vector<128x128xf32>
    %38 = tpu.iota {dimensions = array<i32: 1>} : vector<128x128xi32>
    %c8_i32 = arith.constant 8 : i32
    %39 = vector.broadcast %c8_i32 : i32 to vector<128x128xi32>
    %40 = arith.cmpi slt, %38, %39 : vector<128x128xi32>
    %cst_36 = arith.constant 0xFF800000 : f32
    %41 = vector.broadcast %cst_36 : f32 to vector<128x128xf32>
    %42 = arith.select %40, %37, %41 : vector<128x128xi1>, vector<128x128xf32>
    %cst_37 = arith.constant dense<0xFF800000> : vector<128xf32>
    %43 = vector.multi_reduction <maximumf>, %42, %cst_37 [1] : vector<128x128xf32> to vector<128xf32>
    %44 = vector.shape_cast %43 : vector<128xf32> to vector<128x1xf32>
    %cst_38 = arith.constant 0x7F800000 : f32
    %45 = vector.broadcast %cst_38 : f32 to vector<128x128xf32>
    %46 = arith.select %40, %37, %45 : vector<128x128xi1>, vector<128x128xf32>
    %cst_39 = arith.constant dense<0x7F800000> : vector<128xf32>
    %47 = vector.multi_reduction <minimumf>, %46, %cst_39 [1] : vector<128x128xf32> to vector<128xf32>
    %48 = vector.shape_cast %47 : vector<128xf32> to vector<128x1xf32>
    %49 = arith.subf %44, %48 : vector<128x1xf32>
    %cst_40 = arith.constant 0.000000e+00 : f32
    %50 = vector.broadcast %cst_40 : f32 to vector<128x1xf32>
    %51 = arith.cmpf ogt, %49, %50 : vector<128x1xf32>
    %cst_41 = arith.constant 1.000000e+00 : f32
    %52 = vector.broadcast %cst_41 : f32 to vector<128x1xf32>
    %53 = arith.select %51, %49, %52 : vector<128x1xi1>, vector<128x1xf32>
    %54 = tpu.reciprocal %53 : vector<128x1xf32> -> vector<128x1xf32>
    %cst_42 = arith.constant 0.000000e+00 : f32
    %55 = vector.broadcast %cst_42 : f32 to vector<128x1xf32>
    %56 = arith.cmpf ogt, %49, %55 : vector<128x1xf32>
    %57 = vector.broadcast %56 : vector<128x1xi1> to vector<128x128xi1>
    %58 = arith.andi %40, %57 : vector<128x128xi1>
    %59 = vector.broadcast %48 : vector<128x1xf32> to vector<128x128xf32>
    %60 = arith.subf %37, %59 : vector<128x128xf32>
    %61 = vector.broadcast %54 : vector<128x1xf32> to vector<128x128xf32>
    %62 = arith.mulf %60, %61 : vector<128x128xf32>
    %cst_43 = arith.constant 0.000000e+00 : f32
    %63 = vector.broadcast %cst_43 : f32 to vector<128x128xf32>
    %64 = arith.select %58, %62, %63 : vector<128x128xi1>, vector<128x128xf32>
    %65 = arith.mulf %64, %64 : vector<128x128xf32>
    %cst_44 = arith.constant dense<0.000000e+00> : vector<128xf32>
    %66 = vector.multi_reduction <add>, %65, %cst_44 [1] : vector<128x128xf32> to vector<128xf32>
    %67 = vector.shape_cast %66 : vector<128xf32> to vector<128x1xf32>
    %cst_45 = arith.constant 1.000000e-24 : f32
    %68 = vector.broadcast %cst_45 : f32 to vector<128x1xf32>
    %69 = arith.maximumf %67, %68 : vector<128x1xf32>
    %70 = math.rsqrt %69 : vector<128x1xf32>
    %71 = vector.broadcast %70 : vector<128x1xf32> to vector<128x128xf32>
    %72 = arith.mulf %64, %71 : vector<128x128xf32>
    %c0_46 = arith.constant 0 : index
    %c0_47 = arith.constant 0 : index
    %73 = vector.load %arg10[%c0_46, %c0_47] : memref<128x128xf32, #tpu.memory_space<vmem>>, vector<128x128xf32>
    tpu.vector_store %arg10[%c0_46, %c0_47], %72 {strides = array<i32>} : memref<128x128xf32, #tpu.memory_space<vmem>>, vector<128x128xf32>,
    %c0_48 = arith.constant 0 : index
    %c0_49 = arith.constant 0 : index
    %c0_50 = arith.constant 0 : index
    %74 = vector.load %arg1[%c0_48, %c0_49, %c0_50] : memref<3x128x128xf32, #tpu.memory_space<vmem>>, vector<1x128x128xf32>
    %75 = vector.shape_cast %74 : vector<1x128x128xf32> to vector<128x128xf32>
    %cst_51 = arith.constant dense<0.000000e+00> : vector<128x128xf32>
    %76 = tpu.matmul %75, %72, %cst_51 {dimension_numbers = #tpu.dot_dimension_numbers<[1], [0], [0], [1], [0, 0, 1, 1], [], []>} : vector<128x128xf32>, vector<128x128xf32>, vector<128x128xf32> -> vector<128x128xf32>
    %c1_52 = arith.constant 1 : index
    %c0_53 = arith.constant 0 : index
    %c0_54 = arith.constant 0 : index
    %77 = vector.load %arg1[%c1_52, %c0_53, %c0_54] : memref<3x128x128xf32, #tpu.memory_space<vmem>>, vector<1x128x128xf32>
    %78 = vector.shape_cast %77 : vector<1x128x128xf32> to vector<128x128xf32>
    %cst_55 = arith.constant dense<0.000000e+00> : vector<128x128xf32>
    %79 = tpu.matmul %78, %72, %cst_55 {dimension_numbers = #tpu.dot_dimension_numbers<[1], [0], [0], [1], [0, 0, 1, 1], [], []>} : vector<128x128xf32>, vector<128x128xf32>, vector<128x128xf32> -> vector<128x128xf32>
    %c2_56 = arith.constant 2 : index
    %c0_57 = arith.constant 0 : index
    %c0_58 = arith.constant 0 : index
    %80 = vector.load %arg1[%c2_56, %c0_57, %c0_58] : memref<3x128x128xf32, #tpu.memory_space<vmem>>, vector<1x128x128xf32>
    %81 = vector.shape_cast %80 : vector<1x128x128xf32> to vector<128x128xf32>
    %cst_59 = arith.constant dense<0.000000e+00> : vector<128x128xf32>
    %82 = tpu.matmul %81, %72, %cst_59 {dimension_numbers = #tpu.dot_dimension_numbers<[1], [0], [0], [1], [0, 0, 1, 1], [], []>} : vector<128x128xf32>, vector<128x128xf32>, vector<128x128xf32> -> vector<128x128xf32>
    %83 = tpu.concatenate %76, %79, %82 in 1 : vector<128x128xf32>, vector<128x128xf32>, vector<128x128xf32> -> vector<128x384xf32>
    %c0_60 = arith.constant 0 : index
    %c0_61 = arith.constant 0 : index
    %c0_62 = arith.constant 0 : index
    %84 = vector.load %arg6[%c0_60, %c0_61, %c0_62] : memref<3x128x128xf32, #tpu.memory_space<vmem>>, vector<3x128x128xf32>
    %85 = vector.shape_cast %84 : vector<3x128x128xf32> to vector<384x128xf32>
    %cst_63 = arith.constant dense<0.000000e+00> : vector<128x128xf32>
    %86 = tpu.matmul %83, %85, %cst_63 {dimension_numbers = #tpu.dot_dimension_numbers<[1], [0], [0], [1], [0, 0, 1, 1], [], []>} : vector<128x384xf32>, vector<384x128xf32>, vector<128x128xf32> -> vector<128x128xf32>
    %c0_64 = arith.constant 0 : index
    %c0_65 = arith.constant 0 : index
    %87 = vector.load %arg7[%c0_64, %c0_65] : memref<1x128xf32, #tpu.memory_space<vmem>>, vector<1x128xf32>
    %88 = vector.broadcast %87 : vector<1x128xf32> to vector<128x128xf32>
    %89 = arith.addf %86, %88 : vector<128x128xf32>
    %cst_66 = arith.constant 0.000000e+00 : f32
    %90 = vector.broadcast %cst_66 : f32 to vector<128x128xf32>
    %91 = arith.cmpf ogt, %89, %90 : vector<128x128xf32>
    %cst_67 = arith.constant 0.00999999977 : f32
    %92 = vector.broadcast %cst_67 : f32 to vector<128x128xf32>
    %93 = arith.mulf %92, %89 : vector<128x128xf32>
    %94 = arith.select %91, %89, %93 : vector<128x128xi1>, vector<128x128xf32>
    %c0_68 = arith.constant 0 : index
    %c0_69 = arith.constant 0 : index
    %c0_70 = arith.constant 0 : index
    %95 = vector.load %arg1[%c0_68, %c0_69, %c0_70] : memref<3x128x128xf32, #tpu.memory_space<vmem>>, vector<1x128x128xf32>
    %96 = vector.shape_cast %95 : vector<1x128x128xf32> to vector<128x128xf32>
    %cst_71 = arith.constant dense<0.000000e+00> : vector<128x128xf32>
    %97 = tpu.matmul %96, %94, %cst_71 {dimension_numbers = #tpu.dot_dimension_numbers<[1], [0], [0], [1], [0, 0, 1, 1], [], []>} : vector<128x128xf32>, vector<128x128xf32>, vector<128x128xf32> -> vector<128x128xf32>
    %c1_72 = arith.constant 1 : index
    %c0_73 = arith.constant 0 : index
    %c0_74 = arith.constant 0 : index
    %98 = vector.load %arg1[%c1_72, %c0_73, %c0_74] : memref<3x128x128xf32, #tpu.memory_space<vmem>>, vector<1x128x128xf32>
    %99 = vector.shape_cast %98 : vector<1x128x128xf32> to vector<128x128xf32>
    %cst_75 = arith.constant dense<0.000000e+00> : vector<128x128xf32>
    %100 = tpu.matmul %99, %94, %cst_75 {dimension_numbers = #tpu.dot_dimension_numbers<[1], [0], [0], [1], [0, 0, 1, 1], [], []>} : vector<128x128xf32>, vector<128x128xf32>, vector<128x128xf32> -> vector<128x128xf32>
    %c2_76 = arith.constant 2 : index
    %c0_77 = arith.constant 0 : index
    %c0_78 = arith.constant 0 : index
    %101 = vector.load %arg1[%c2_76, %c0_77, %c0_78] : memref<3x128x128xf32, #tpu.memory_space<vmem>>, vector<1x128x128xf32>
    %102 = vector.shape_cast %101 : vector<1x128x128xf32> to vector<128x128xf32>
    %cst_79 = arith.constant dense<0.000000e+00> : vector<128x128xf32>
    %103 = tpu.matmul %102, %94, %cst_79 {dimension_numbers = #tpu.dot_dimension_numbers<[1], [0], [0], [1], [0, 0, 1, 1], [], []>} : vector<128x128xf32>, vector<128x128xf32>, vector<128x128xf32> -> vector<128x128xf32>
    %104 = tpu.concatenate %97, %100, %103 in 1 : vector<128x128xf32>, vector<128x128xf32>, vector<128x128xf32> -> vector<128x384xf32>
    %c0_80 = arith.constant 0 : index
    %c0_81 = arith.constant 0 : index
    %c0_82 = arith.constant 0 : index
    %105 = vector.load %arg8[%c0_80, %c0_81, %c0_82] : memref<3x128x128xf32, #tpu.memory_space<vmem>>, vector<3x128x128xf32>
    %106 = vector.shape_cast %105 : vector<3x128x128xf32> to vector<384x128xf32>
    %cst_83 = arith.constant dense<0.000000e+00> : vector<128x128xf32>
    %107 = tpu.matmul %104, %106, %cst_83 {dimension_numbers = #tpu.dot_dimension_numbers<[1], [0], [0], [1], [0, 0, 1, 1], [], []>} : vector<128x384xf32>, vector<384x128xf32>, vector<128x128xf32> -> vector<128x128xf32>
    %c0_84 = arith.constant 0 : index
    %c0_85 = arith.constant 0 : index
    %108 = vector.load %arg9[%c0_84, %c0_85] : memref<1x128xf32, #tpu.memory_space<vmem>>, vector<1x128xf32>
    %109 = vector.broadcast %108 : vector<1x128xf32> to vector<128x128xf32>
    %110 = arith.addf %107, %109 : vector<128x128xf32>
    %c0_86 = arith.constant 0 : index
    %c0_87 = arith.constant 0 : index
    %111 = vector.load %arg11[%c0_86, %c0_87] : memref<128x128xf32, #tpu.memory_space<vmem>>, vector<128x128xf32>
    tpu.vector_store %arg11[%c0_86, %c0_87], %110 {strides = array<i32>} : memref<128x128xf32, #tpu.memory_space<vmem>>, vector<128x128xf32>,
    return
  }
}

</mosaic_0001>

<llo_original>
// kernel: gcned_forward_padded.1
$region0: #{gcned_forward_padded.1}
  #allocation0 [shape = 'u32[]', space=smem, size = 0x4, offset = 0x4, fixed_abs, tag = 'smem constant byte address 0x4 - core index']
  #allocation1 [shape = 'u32[72,128]{1,0:T(1,128)}', space=vmem, size = 0x9000, scoped, tag = 'internal scratch']
  %s0 = inlined_call_operand.vmem [shape: f32[128,128], index: 0, kind: input, shape index: {}]
  %s1 = inlined_call_operand.vmem [shape: f32[3,128,128], index: 1, kind: input, shape index: {}]
  %s2 = inlined_call_operand.hbm [shape: f32[3,128,128], index: 2, kind: input, shape index: {}]
  %s3 = inlined_call_operand.vmem [shape: f32[1,128], index: 3, kind: input, shape index: {}]
  %s4 = inlined_call_operand.hbm [shape: f32[3,128,128], index: 4, kind: input, shape index: {}]
  %s5 = inlined_call_operand.vmem [shape: f32[1,128], index: 5, kind: input, shape index: {}]
  %s6 = inlined_call_operand.hbm [shape: f32[3,128,128], index: 6, kind: input, shape index: {}]
  %s7 = inlined_call_operand.vmem [shape: f32[1,128], index: 7, kind: input, shape index: {}]
  %s8 = inlined_call_operand.hbm [shape: f32[3,128,128], index: 8, kind: input, shape index: {}]
  %s9 = inlined_call_operand.vmem [shape: f32[1,128], index: 9, kind: input, shape index: {}]
  %s10 = inlined_call_operand.hbm [shape: f32[128,128], index: 10, kind: output, shape index: {0}]
  %s11 = inlined_call_operand.hbm [shape: f32[128,128], index: 11, kind: output, shape index: {1}]
  %12 = xla_tuple %s10, %s11
  %s13 = sld [smem:[#allocation0]]
  $region74: #{gcned_forward_padded.1} parent=0
    _
  %s15 = ssub.s32 1, %s13
  %s16 = scalar_select 0, %s15, %s13
  $region1: #{gcned_forward_padded.1} parent=0
    #allocation2 [shape = 'u8[196608]{0}', space=vmem, size = 0x30000, scoped, tag = 'input window, operand 2, single buffered']
    #allocation3 [shape = 's32[1]{0}', space=sflag, size = 0x4, scoped, tag = 'scoped memory for gcned_forward_padded.1']
    #allocation4 [shape = 's32[1]{0}', space=sflag, size = 0x4, scoped, tag = 'scoped memory for gcned_forward_padded.1']
    #allocation5 [shape = 'u8[196608]{0}', space=vmem, size = 0x30000, scoped, tag = 'input window, operand 4, single buffered']
    #allocation6 [shape = 's32[1]{0}', space=sflag, size = 0x4, scoped, tag = 'scoped memory for gcned_forward_padded.1']
    #allocation7 [shape = 'u8[196608]{0}', space=vmem, size = 0x30000, scoped, tag = 'input window, operand 6, single buffered']
    #allocation8 [shape = 'u8[196608]{0}', space=vmem, size = 0x30000, scoped, tag = 'input window, operand 8, single buffered']
    #allocation9 [shape = 's32[1]{0}', space=sflag, size = 0x4, scoped, tag = 'scoped memory for gcned_forward_padded.1']
    #allocation10 [shape = 'u8[65536]{0}', space=vmem, size = 0x10000, scoped, tag = 'output window, operand 0, single buffered']
    #allocation11 [shape = 'u8[65536]{0}', space=vmem, size = 0x10000, scoped, tag = 'output window, operand 1, single buffered']
    #allocation12 [shape = 's32[1]{0}', space=sflag, size = 0x4, scoped, tag = 'scoped memory for gcned_forward_padded.1']
    %17 = vsyncpa [#allocation3], 0
    %18 = vsyncpa [#allocation6], 0
    %19 = vsyncpa [#allocation9], 0
    %20 = vsyncpa [#allocation4], 0
    %21 = vsyncpa [#allocation12], 0
    // Predicated region
    $region2: #{gcned_forward_padded.1} parent=1 // pred_check
      _
    $region3: #{gcned_forward_padded.1} parent=1 // pred_check_branch
      %23 = sbr.rel (0) target = $region5
    $region4: #{gcned_forward_padded.1} parent=1 // pred_region
      _
    $region5: #{gcned_forward_padded.1} parent=1 // pred_fallthru
      _
    // Predicated region
    $region6: #{gcned_forward_padded.1} parent=1 // pred_check
      _
    $region7: #{gcned_forward_padded.1} parent=1 // pred_check_branch
      %25 = sbr.rel (0) target = $region9
    $region8: #{gcned_forward_padded.1} parent=1 // pred_region
      _
    $region9: #{gcned_forward_padded.1} parent=1 // pred_fallthru
      _
    // Predicated region
    $region10: #{gcned_forward_padded.1} parent=1 // pred_check
      _
    $region11: #{gcned_forward_padded.1} parent=1 // pred_check_branch
      %27 = sbr.rel (0) target = $region13
    $region12: #{gcned_forward_padded.1} parent=1 // pred_region
      %29 = vsyncadd [#allocation3], 0
      %s30 = sshll.u32 %s2, 4
      %s31 = int_to_ptr.hbm [resolvable:$true] %s30
      %s32 = sshll.u32 [#allocation2], 4
      %s33 = int_to_ptr.vmem [resolvable:$true] %s32
      %38 = dma.hbm_to_vmem [thread:$0]  %s31, 6144, %s33, [#allocation3], 128, 128, 8
    $region13: #{gcned_forward_padded.1} parent=1 // pred_fallthru
      _
    // Predicated region
    $region14: #{gcned_forward_padded.1} parent=1 // pred_check
      _
    $region15: #{gcned_forward_padded.1} parent=1 // pred_check_branch
      %40 = sbr.rel (0) target = $region17
    $region16: #{gcned_forward_padded.1} parent=1 // pred_region
      _
    $region17: #{gcned_forward_padded.1} parent=1 // pred_fallthru
      _
    // Predicated region
    $region18: #{gcned_forward_padded.1} parent=1 // pred_check
      _
    $region19: #{gcned_forward_padded.1} parent=1 // pred_check_branch
      %42 = sbr.rel (0) target = $region21
    $region20: #{gcned_forward_padded.1} parent=1 // pred_region
      %44 = vsyncadd [#allocation6], 0
      %s45 = sshll.u32 %s4, 4
      %s46 = int_to_ptr.hbm [resolvable:$true] %s45
      %s47 = sshll.u32 [#allocation5], 4
      %s48 = int_to_ptr.vmem [resolvable:$true] %s47
      %53 = dma.hbm_to_vmem [thread:$0]  %s46, 6144, %s48, [#allocation6], 128, 128, 8
    $region21: #{gcned_forward_padded.1} parent=1 // pred_fallthru
      _
    // Predicated region
    $region22: #{gcned_forward_padded.1} parent=1 // pred_check
      _
    $region23: #{gcned_forward_padded.1} parent=1 // pred_check_branch
      %55 = sbr.rel (0) target = $region25
    $region24: #{gcned_forward_padded.1} parent=1 // pred_region
      _
    $region25: #{gcned_forward_padded.1} parent=1 // pred_fallthru
      _
    // Predicated region
    $region26: #{gcned_forward_padded.1} parent=1 // pred_check
      _
    $region27: #{gcned_forward_padded.1} parent=1 // pred_check_branch
      %57 = sbr.rel (0) target = $region29
    $region28: #{gcned_forward_padded.1} parent=1 // pred_region
      %59 = vsyncadd [#allocation6], 0
      %s60 = sshll.u32 %s6, 4
      %s61 = int_to_ptr.hbm [resolvable:$true] %s60
      %s62 = sshll.u32 [#allocation7], 4
      %s63 = int_to_ptr.vmem [resolvable:$true] %s62
      %68 = dma.hbm_to_vmem [thread:$0]  %s61, 6144, %s63, [#allocation6], 128, 128, 8
    $region29: #{gcned_forward_padded.1} parent=1 // pred_fallthru
      _
    // Predicated region
    $region30: #{gcned_forward_padded.1} parent=1 // pred_check
      _
    $region31: #{gcned_forward_padded.1} parent=1 // pred_check_branch
      %70 = sbr.rel (0) target = $region33
    $region32: #{gcned_forward_padded.1} parent=1 // pred_region
      _
    $region33: #{gcned_forward_padded.1} parent=1 // pred_fallthru
      _
    // Predicated region
    $region34: #{gcned_forward_padded.1} parent=1 // pred_check
      _
    $region35: #{gcned_forward_padded.1} parent=1 // pred_check_branch
      %72 = sbr.rel (0) target = $region37
    $region36: #{gcned_forward_padded.1} parent=1 // pred_region
      %74 = vsyncadd [#allocation9], 0
      %s75 = sshll.u32 %s8, 4
      %s76 = int_to_ptr.hbm [resolvable:$true] %s75
      %s77 = sshll.u32 [#allocation8], 4
      %s78 = int_to_ptr.vmem [resolvable:$true] %s77
      %83 = dma.hbm_to_vmem [thread:$0]  %s76, 6144, %s78, [#allocation9], 128, 128, 8
    $region37: #{gcned_forward_padded.1} parent=1 // pred_fallthru
      _
    // Predicated region
    $region38: #{gcned_forward_padded.1} parent=1 // pred_check
      _
    $region39: #{gcned_forward_padded.1} parent=1 // pred_check_branch
      %85 = sbr.rel (0) target = $region41
    $region40: #{gcned_forward_padded.1} parent=1 // pred_region
      _
    $region41: #{gcned_forward_padded.1} parent=1 // pred_fallthru
      _
    // Predicated region
    $region42: #{gcned_forward_padded.1} parent=1 // pred_check
      _
    $region43: #{gcned_forward_padded.1} parent=1 // pred_check_branch
      %87 = sbr.rel (0) target = $region45
    $region44: #{gcned_forward_padded.1} parent=1 // pred_region
      %89 = dma.done [#allocation3], 6144
    $region45: #{gcned_forward_padded.1} parent=1 // pred_fallthru
      _
    // Predicated region
    $region46: #{gcned_forward_padded.1} parent=1 // pred_check
      _
    $region47: #{gcned_forward_padded.1} parent=1 // pred_check_branch
      %91 = sbr.rel (0) target = $region49
    $region48: #{gcned_forward_padded.1} parent=1 // pred_region
      %93 = dma.done [#allocation6], 6144
    $region49: #{gcned_forward_padded.1} parent=1 // pred_fallthru
      _
    // Predicated region
    $region50: #{gcned_forward_padded.1} parent=1 // pred_check
      _
    $region51: #{gcned_forward_padded.1} parent=1 // pred_check_branch
      %95 = sbr.rel (0) target = $region53
    $region52: #{gcned_forward_padded.1} parent=1 // pred_region
      %97 = dma.done [#allocation6], 6144
    $region53: #{gcned_forward_padded.1} parent=1 // pred_fallthru
      _
    // Predicated region
    $region54: #{gcned_forward_padded.1} parent=1 // pred_check
      _
    $region55: #{gcned_forward_padded.1} parent=1 // pred_check_branch
      %99 = sbr.rel (0) target = $region57
    $region56: #{gcned_forward_padded.1} parent=1 // pred_region
      %101 = dma.done [#allocation9], 6144
    $region57: #{gcned_forward_padded.1} parent=1 // pred_fallthru
      _
    %v102 = vld [vmem:[%s0] sm:$0xff]
    %v103 = vld [vmem:[%s0 + $0x8] sm:$0xff]
    %v104 = vld [vmem:[%s0 + $0x10] sm:$0xff]
    %v105 = vld [vmem:[%s0 + $0x18] sm:$0xff]
    %v106 = vld [vmem:[%s0 + $0x20] sm:$0xff]
    %v107 = vld [vmem:[%s0 + $0x28] sm:$0xff]
    %v108 = vld [vmem:[%s0 + $0x30] sm:$0xff]
    %v109 = vld [vmem:[%s0 + $0x38] sm:$0xff]
    %v110 = vld [vmem:[%s0 + $0x40] sm:$0xff]
    %v111 = vld [vmem:[%s0 + $0x48] sm:$0xff]
    %v112 = vld [vmem:[%s0 + $0x50] sm:$0xff]
    %v113 = vld [vmem:[%s0 + $0x58] sm:$0xff]
    %v114 = vld [vmem:[%s0 + $0x60] sm:$0xff]
    %v115 = vld [vmem:[%s0 + $0x68] sm:$0xff]
    %v116 = vld [vmem:[%s0 + $0x70] sm:$0xff]
    %v117 = vld [vmem:[%s0 + $0x78] sm:$0xff]
    %v118 = vld [vmem:[%s1] sm:$0xff]
    %v119 = vld [vmem:[%s1 + $0x8] sm:$0xff]
    %v120 = vld [vmem:[%s1 + $0x10] sm:$0xff]
    %v121 = vld [vmem:[%s1 + $0x18] sm:$0xff]
    %v122 = vld [vmem:[%s1 + $0x20] sm:$0xff]
    %v123 = vld [vmem:[%s1 + $0x28] sm:$0xff]
    %v124 = vld [vmem:[%s1 + $0x30] sm:$0xff]
    %v125 = vld [vmem:[%s1 + $0x38] sm:$0xff]
    %v126 = vld [vmem:[%s1 + $0x40] sm:$0xff]
    %v127 = vld [vmem:[%s1 + $0x48] sm:$0xff]
    %v128 = vld [vmem:[%s1 + $0x50] sm:$0xff]
    %v129 = vld [vmem:[%s1 + $0x58] sm:$0xff]
    %v130 = vld [vmem:[%s1 + $0x60] sm:$0xff]
    %v131 = vld [vmem:[%s1 + $0x68] sm:$0xff]
    %v132 = vld [vmem:[%s1 + $0x70] sm:$0xff]
    %v133 = vld [vmem:[%s1 + $0x78] sm:$0xff]
    %134 = vmatpush.msra.mxu0 %v117
    %135 = vmatpush.msra.mxu0 %v116
    %136 = vmatpush.msra.mxu0 %v115
    %137 = vmatpush.msra.mxu0 %v114
    %138 = vmatpush.msra.mxu0 %v113
    %139 = vmatpush.msra.mxu0 %v112
    %140 = vmatpush.msra.mxu0 %v111
    %141 = vmatpush.msra.mxu0 %v110
    %142 = vmatpush.msra.mxu0 %v109
    %143 = vmatpush.msra.mxu0 %v108
    %144 = vmatpush.msra.mxu0 %v107
    %145 = vmatpush.msra.mxu0 %v106
    %146 = vmatpush.msra.mxu0 %v105
    %147 = vmatpush.msra.mxu0 %v104
    %148 = vmatpush.msra.mxu0 %v103
    %149 = vmatpush.msra.mxu0 %v102
    %150 = vmatmul.f32.gmra.mxu0 %v118
    %v151 = vpop.f32.mrf.mxu0
    %v152 = vadd.f32 0.0, %v151
    %153 = vmatmul.f32.gmra.mxu0 %v119
    %v154 = vpop.f32.mrf.mxu0
    %v155 = vadd.f32 0.0, %v154
    %156 = vmatmul.f32.gmra.mxu0 %v120
    %v157 = vpop.f32.mrf.mxu0
    %v158 = vadd.f32 0.0, %v157
    %159 = vmatmul.f32.gmra.mxu0 %v121
    %v160 = vpop.f32.mrf.mxu0
    %v161 = vadd.f32 0.0, %v160
    %162 = vmatmul.f32.gmra.mxu0 %v122
    %v163 = vpop.f32.mrf.mxu0
    %v164 = vadd.f32 0.0, %v163
    %165 = vmatmul.f32.gmra.mxu0 %v123
    %v166 = vpop.f32.mrf.mxu0
    %v167 = vadd.f32 0.0, %v166
    %168 = vmatmul.f32.gmra.mxu0 %v124
    %v169 = vpop.f32.mrf.mxu0
    %v170 = vadd.f32 0.0, %v169
    %171 = vmatmul.f32.gmra.mxu0 %v125
    %v172 = vpop.f32.mrf.mxu0
    %v173 = vadd.f32 0.0, %v172
    %174 = vmatmul.f32.gmra.mxu0 %v126
    %v175 = vpop.f32.mrf.mxu0
    %v176 = vadd.f32 0.0, %v175
    %177 = vmatmul.f32.gmra.mxu0 %v127
    %v178 = vpop.f32.mrf.mxu0
    %v179 = vadd.f32 0.0, %v178
    %180 = vmatmul.f32.gmra.mxu0 %v128
    %v181 = vpop.f32.mrf.mxu0
    %v182 = vadd.f32 0.0, %v181
    %183 = vmatmul.f32.gmra.mxu0 %v129
    %v184 = vpop.f32.mrf.mxu0
    %v185 = vadd.f32 0.0, %v184
    %186 = vmatmul.f32.gmra.mxu0 %v130
    %v187 = vpop.f32.mrf.mxu0
    %v188 = vadd.f32 0.0, %v187
    %189 = vmatmul.f32.gmra.mxu0 %v131
    %v190 = vpop.f32.mrf.mxu0
    %v191 = vadd.f32 0.0, %v190
    %192 = vmatmul.f32.gmra.mxu0 %v132
    %v193 = vpop.f32.mrf.mxu0
    %v194 = vadd.f32 0.0, %v193
    %195 = vmatmul.f32.gmra.mxu0 %v133
    %v196 = vpop.f32.mrf.mxu0
    %v197 = vadd.f32 0.0, %v196
    %198 = vdwg.mxu0
    %s199 = scalar_lea.vmem %s1, 128
    %v200 = vld [vmem:[%s199] sm:$0xff]
    %v201 = vld [vmem:[%s199 + $0x8] sm:$0xff]
    %v202 = vld [vmem:[%s199 + $0x10] sm:$0xff]
    %v203 = vld [vmem:[%s199 + $0x18] sm:$0xff]
    %v204 = vld [vmem:[%s199 + $0x20] sm:$0xff]
    %v205 = vld [vmem:[%s199 + $0x28] sm:$0xff]
    %v206 = vld [vmem:[%s199 + $0x30] sm:$0xff]
    %v207 = vld [vmem:[%s199 + $0x38] sm:$0xff]
    %v208 = vld [vmem:[%s199 + $0x40] sm:$0xff]
    %v209 = vld [vmem:[%s199 + $0x48] sm:$0xff]
    %v210 = vld [vmem:[%s199 + $0x50] sm:$0xff]
    %v211 = vld [vmem:[%s199 + $0x58] sm:$0xff]
    %v212 = vld [vmem:[%s199 + $0x60] sm:$0xff]
    %v213 = vld [vmem:[%s199 + $0x68] sm:$0xff]
    %v214 = vld [vmem:[%s199 + $0x70] sm:$0xff]
    %v215 = vld [vmem:[%s199 + $0x78] sm:$0xff]
    %216 = vmatpush.msra.mxu0 %v117
    %217 = vmatpush.msra.mxu0 %v116
    %218 = vmatpush.msra.mxu0 %v115
    %219 = vmatpush.msra.mxu0 %v114
    %220 = vmatpush.msra.mxu0 %v113
    %221 = vmatpush.msra.mxu0 %v112
    %222 = vmatpush.msra.mxu0 %v111
    %223 = vmatpush.msra.mxu0 %v110
    %224 = vmatpush.msra.mxu0 %v109
    %225 = vmatpush.msra.mxu0 %v108
    %226 = vmatpush.msra.mxu0 %v107
    %227 = vmatpush.msra.mxu0 %v106
    %228 = vmatpush.msra.mxu0 %v105
    %229 = vmatpush.msra.mxu0 %v104
    %230 = vmatpush.msra.mxu0 %v103
    %231 = vmatpush.msra.mxu0 %v102
    %232 = vmatmul.f32.gmra.mxu0 %v200
    %v233 = vpop.f32.mrf.mxu0
    %v234 = vadd.f32 0.0, %v233
    %235 = vmatmul.f32.gmra.mxu0 %v201
    %v236 = vpop.f32.mrf.mxu0
    %v237 = vadd.f32 0.0, %v236
    %238 = vmatmul.f32.gmra.mxu0 %v202
    %v239 = vpop.f32.mrf.mxu0
    %v240 = vadd.f32 0.0, %v239
    %241 = vmatmul.f32.gmra.mxu0 %v203
    %v242 = vpop.f32.mrf.mxu0
    %v243 = vadd.f32 0.0, %v242
    %244 = vmatmul.f32.gmra.mxu0 %v204
    %v245 = vpop.f32.mrf.mxu0
    %v246 = vadd.f32 0.0, %v245
    %247 = vmatmul.f32.gmra.mxu0 %v205
    %v248 = vpop.f32.mrf.mxu0
    %v249 = vadd.f32 0.0, %v248
    %250 = vmatmul.f32.gmra.mxu0 %v206
    %v251 = vpop.f32.mrf.mxu0
    %v252 = vadd.f32 0.0, %v251
    %253 = vmatmul.f32.gmra.mxu0 %v207
    %v254 = vpop.f32.mrf.mxu0
    %v255 = vadd.f32 0.0, %v254
    %256 = vmatmul.f32.gmra.mxu0 %v208
    %v257 = vpop.f32.mrf.mxu0
    %v258 = vadd.f32 0.0, %v257
    %259 = vmatmul.f32.gmra.mxu0 %v209
    %v260 = vpop.f32.mrf.mxu0
    %v261 = vadd.f32 0.0, %v260
    %262 = vmatmul.f32.gmra.mxu0 %v210
    %v263 = vpop.f32.mrf.mxu0
    %v264 = vadd.f32 0.0, %v263
    %265 = vmatmul.f32.gmra.mxu0 %v211
    %v266 = vpop.f32.mrf.mxu0
    %v267 = vadd.f32 0.0, %v266
    %268 = vmatmul.f32.gmra.mxu0 %v212
    %v269 = vpop.f32.mrf.mxu0
    %v270 = vadd.f32 0.0, %v269
    %271 = vmatmul.f32.gmra.mxu0 %v213
    %v272 = vpop.f32.mrf.mxu0
    %v273 = vadd.f32 0.0, %v272
    %274 = vmatmul.f32.gmra.mxu0 %v214
    %v275 = vpop.f32.mrf.mxu0
    %v276 = vadd.f32 0.0, %v275
    %277 = vmatmul.f32.gmra.mxu0 %v215
    %v278 = vpop.f32.mrf.mxu0
    %v279 = vadd.f32 0.0, %v278
    %280 = vdwg.mxu0
    %s281 = scalar_lea.vmem %s1, 256
    %v282 = vld [vmem:[%s281] sm:$0xff]
    %v283 = vld [vmem:[%s281 + $0x8] sm:$0xff]
    %v284 = vld [vmem:[%s281 + $0x10] sm:$0xff]
    %v285 = vld [vmem:[%s281 + $0x18] sm:$0xff]
    %v286 = vld [vmem:[%s281 + $0x20] sm:$0xff]
    %v287 = vld [vmem:[%s281 + $0x28] sm:$0xff]
    %v288 = vld [vmem:[%s281 + $0x30] sm:$0xff]
    %v289 = vld [vmem:[%s281 + $0x38] sm:$0xff]
    %v290 = vld [vmem:[%s281 + $0x40] sm:$0xff]
    %v291 = vld [vmem:[%s281 + $0x48] sm:$0xff]
    %v292 = vld [vmem:[%s281 + $0x50] sm:$0xff]
    %v293 = vld [vmem:[%s281 + $0x58] sm:$0xff]
    %v294 = vld [vmem:[%s281 + $0x60] sm:$0xff]
    %v295 = vld [vmem:[%s281 + $0x68] sm:$0xff]
    %v296 = vld [vmem:[%s281 + $0x70] sm:$0xff]
    %v297 = vld [vmem:[%s281 + $0x78] sm:$0xff]
    %298 = vmatpush.msra.mxu0 %v117
    %299 = vmatpush.msra.mxu0 %v116
    %300 = vmatpush.msra.mxu0 %v115
    %301 = vmatpush.msra.mxu0 %v114
    %302 = vmatpush.msra.mxu0 %v113
    %303 = vmatpush.msra.mxu0 %v112
    %304 = vmatpush.msra.mxu0 %v111
    %305 = vmatpush.msra.mxu0 %v110
    %306 = vmatpush.msra.mxu0 %v109
    %307 = vmatpush.msra.mxu0 %v108
    %308 = vmatpush.msra.mxu0 %v107
    %309 = vmatpush.msra.mxu0 %v106
    %310 = vmatpush.msra.mxu0 %v105
    %311 = vmatpush.msra.mxu0 %v104
    %312 = vmatpush.msra.mxu0 %v103
    %313 = vmatpush.msra.mxu0 %v102
    %314 = vmatmul.f32.gmra.mxu0 %v282
    %v315 = vpop.f32.mrf.mxu0
    %v316 = vadd.f32 0.0, %v315
    %317 = vmatmul.f32.gmra.mxu0 %v283
    %v318 = vpop.f32.mrf.mxu0
    %v319 = vadd.f32 0.0, %v318
    %320 = vmatmul.f32.gmra.mxu0 %v284
    %v321 = vpop.f32.mrf.mxu0
    %v322 = vadd.f32 0.0, %v321
    %323 = vmatmul.f32.gmra.mxu0 %v285
    %v324 = vpop.f32.mrf.mxu0
    %v325 = vadd.f32 0.0, %v324
    %326 = vmatmul.f32.gmra.mxu0 %v286
    %v327 = vpop.f32.mrf.mxu0
    %v328 = vadd.f32 0.0, %v327
    %329 = vmatmul.f32.gmra.mxu0 %v287
    %v330 = vpop.f32.mrf.mxu0
    %v331 = vadd.f32 0.0, %v330
    %332 = vmatmul.f32.gmra.mxu0 %v288
    %v333 = vpop.f32.mrf.mxu0
    %v334 = vadd.f32 0.0, %v333
    %335 = vmatmul.f32.gmra.mxu0 %v289
    %v336 = vpop.f32.mrf.mxu0
    %v337 = vadd.f32 0.0, %v336
    %338 = vmatmul.f32.gmra.mxu0 %v290
    %v339 = vpop.f32.mrf.mxu0
    %v340 = vadd.f32 0.0, %v339
    %341 = vmatmul.f32.gmra.mxu0 %v291
    %v342 = vpop.f32.mrf.mxu0
    %v343 = vadd.f32 0.0, %v342
    %344 = vmatmul.f32.gmra.mxu0 %v292
    %v345 = vpop.f32.mrf.mxu0
    %v346 = vadd.f32 0.0, %v345
    %347 = vmatmul.f32.gmra.mxu0 %v293
    %v348 = vpop.f32.mrf.mxu0
    %v349 = vadd.f32 0.0, %v348
    %350 = vmatmul.f32.gmra.mxu0 %v294
    %v351 = vpop.f32.mrf.mxu0
    %v352 = vadd.f32 0.0, %v351
    %353 = vmatmul.f32.gmra.mxu0 %v295
    %v354 = vpop.f32.mrf.mxu0
    %v355 = vadd.f32 0.0, %v354
    %356 = vmatmul.f32.gmra.mxu0 %v296
    %v357 = vpop.f32.mrf.mxu0
    %v358 = vadd.f32 0.0, %v357
    %359 = vmatmul.f32.gmra.mxu0 %v297
    %v360 = vpop.f32.mrf.mxu0
    %v361 = vadd.f32 0.0, %v360
    %362 = vdwg.mxu0
    %v363 = vld [vmem:[#allocation2] sm:$0xff]
    %v364 = vld [vmem:[#allocation2 + $0x8] sm:$0xff]
    %v365 = vld [vmem:[#allocation2 + $0x10] sm:$0xff]
    %v366 = vld [vmem:[#allocation2 + $0x18] sm:$0xff]
    %v367 = vld [vmem:[#allocation2 + $0x20] sm:$0xff]
    %v368 = vld [vmem:[#allocation2 + $0x28] sm:$0xff]
    %v369 = vld [vmem:[#allocation2 + $0x30] sm:$0xff]
    %v370 = vld [vmem:[#allocation2 + $0x38] sm:$0xff]
    %v371 = vld [vmem:[#allocation2 + $0x40] sm:$0xff]
    %v372 = vld [vmem:[#allocation2 + $0x48] sm:$0xff]
    %v373 = vld [vmem:[#allocation2 + $0x50] sm:$0xff]
    %v374 = vld [vmem:[#allocation2 + $0x58] sm:$0xff]
    %v375 = vld [vmem:[#allocation2 + $0x60] sm:$0xff]
    %v376 = vld [vmem:[#allocation2 + $0x68] sm:$0xff]
    %v377 = vld [vmem:[#allocation2 + $0x70] sm:$0xff]
    %v378 = vld [vmem:[#allocation2 + $0x78] sm:$0xff]
    %v379 = vld [vmem:[#allocation2 + $0x80] sm:$0xff]
    %v380 = vld [vmem:[#allocation2 + $0x88] sm:$0xff]
    %v381 = vld [vmem:[#allocation2 + $0x90] sm:$0xff]
    %v382 = vld [vmem:[#allocation2 + $0x98] sm:$0xff]
    %v383 = vld [vmem:[#allocation2 + $0xa0] sm:$0xff]
    %v384 = vld [vmem:[#allocation2 + $0xa8] sm:$0xff]
    %v385 = vld [vmem:[#allocation2 + $0xb0] sm:$0xff]
    %v386 = vld [vmem:[#allocation2 + $0xb8] sm:$0xff]
    %v387 = vld [vmem:[#allocation2 + $0xc0] sm:$0xff]
    %v388 = vld [vmem:[#allocation2 + $0xc8] sm:$0xff]
    %v389 = vld [vmem:[#allocation2 + $0xd0] sm:$0xff]
    %v390 = vld [vmem:[#allocation2 + $0xd8] sm:$0xff]
    %v391 = vld [vmem:[#allocation2 + $0xe0] sm:$0xff]
    %v392 = vld [vmem:[#allocation2 + $0xe8] sm:$0xff]
    %v393 = vld [vmem:[#allocation2 + $0xf0] sm:$0xff]
    %v394 = vld [vmem:[#allocation2 + $0xf8] sm:$0xff]
    %v395 = vld [vmem:[#allocation2 + $0x100] sm:$0xff]
    %v396 = vld [vmem:[#allocation2 + $0x108] sm:$0xff]
    %v397 = vld [vmem:[#allocation2 + $0x110] sm:$0xff]
    %v398 = vld [vmem:[#allocation2 + $0x118] sm:$0xff]
    %v399 = vld [vmem:[#allocation2 + $0x120] sm:$0xff]
    %v400 = vld [vmem:[#allocation2 + $0x128] sm:$0xff]
    %v401 = vld [vmem:[#allocation2 + $0x130] sm:$0xff]
    %v402 = vld [vmem:[#allocation2 + $0x138] sm:$0xff]
    %v403 = vld [vmem:[#allocation2 + $0x140] sm:$0xff]
    %v404 = vld [vmem:[#allocation2 + $0x148] sm:$0xff]
    %v405 = vld [vmem:[#allocation2 + $0x150] sm:$0xff]
    %v406 = vld [vmem:[#allocation2 + $0x158] sm:$0xff]
    %v407 = vld [vmem:[#allocation2 + $0x160] sm:$0xff]
    %v408 = vld [vmem:[#allocation2 + $0x168] sm:$0xff]
    %v409 = vld [vmem:[#allocation2 + $0x170] sm:$0xff]
    %v410 = vld [vmem:[#allocation2 + $0x178] sm:$0xff]
    %v411 = vld [vmem:[%s3] sm:$0x1]
    %v413 = vperm.slane %v411, 0
    %415 = vmatpush.msra.mxu0 %v378
    %416 = vmatpush.msra.mxu0 %v377
    %417 = vmatpush.msra.mxu0 %v376
    %418 = vmatpush.msra.mxu0 %v375
    %419 = vmatpush.msra.mxu0 %v374
    %420 = vmatpush.msra.mxu0 %v373
    %421 = vmatpush.msra.mxu0 %v372
    %422 = vmatpush.msra.mxu0 %v371
    %423 = vmatpush.msra.mxu0 %v370
    %424 = vmatpush.msra.mxu0 %v369
    %425 = vmatpush.msra.mxu0 %v368
    %426 = vmatpush.msra.mxu0 %v367
    %427 = vmatpush.msra.mxu0 %v366
    %428 = vmatpush.msra.mxu0 %v365
    %429 = vmatpush.msra.mxu0 %v364
    %430 = vmatpush.msra.mxu0 %v363
    %431 = vmatmul.f32.gmra.mxu0 %v152
    %v432 = vpop.f32.mrf.mxu0
    %v433 = vadd.f32 %v413, %v432
    %434 = vmatmul.f32.gmra.mxu0 %v155
    %v435 = vpop.f32.mrf.mxu0
    %v436 = vadd.f32 %v413, %v435
    %437 = vmatmul.f32.gmra.mxu0 %v158
    %v438 = vpop.f32.mrf.mxu0
    %v439 = vadd.f32 %v413, %v438
    %440 = vmatmul.f32.gmra.mxu0 %v161
    %v441 = vpop.f32.mrf.mxu0
    %v442 = vadd.f32 %v413, %v441
    %443 = vmatmul.f32.gmra.mxu0 %v164
    %v444 = vpop.f32.mrf.mxu0
    %v445 = vadd.f32 %v413, %v444
    %446 = vmatmul.f32.gmra.mxu0 %v167
    %v447 = vpop.f32.mrf.mxu0
    %v448 = vadd.f32 %v413, %v447
    %449 = vmatmul.f32.gmra.mxu0 %v170
    %v450 = vpop.f32.mrf.mxu0
    %v451 = vadd.f32 %v413, %v450
    %452 = vmatmul.f32.gmra.mxu0 %v173
    %v453 = vpop.f32.mrf.mxu0
    %v454 = vadd.f32 %v413, %v453
    %455 = vmatmul.f32.gmra.mxu0 %v176
    %v456 = vpop.f32.mrf.mxu0
    %v457 = vadd.f32 %v413, %v456
    %458 = vmatmul.f32.gmra.mxu0 %v179
    %v459 = vpop.f32.mrf.mxu0
    %v460 = vadd.f32 %v413, %v459
    %461 = vmatmul.f32.gmra.mxu0 %v182
    %v462 = vpop.f32.mrf.mxu0
    %v463 = vadd.f32 %v413, %v462
    %464 = vmatmul.f32.gmra.mxu0 %v185
    %v465 = vpop.f32.mrf.mxu0
    %v466 = vadd.f32 %v413, %v465
    %467 = vmatmul.f32.gmra.mxu0 %v188
    %v468 = vpop.f32.mrf.mxu0
    %v469 = vadd.f32 %v413, %v468
    %470 = vmatmul.f32.gmra.mxu0 %v191
    %v471 = vpop.f32.mrf.mxu0
    %v472 = vadd.f32 %v413, %v471
    %473 = vmatmul.f32.gmra.mxu0 %v194
    %v474 = vpop.f32.mrf.mxu0
    %v475 = vadd.f32 %v413, %v474
    %476 = vmatmul.f32.gmra.mxu0 %v197
    %v477 = vpop.f32.mrf.mxu0
    %v478 = vadd.f32 %v413, %v477
    %479 = vdwg.mxu0
    %480 = vmatpush.msra.mxu0 %v394
    %481 = vmatpush.msra.mxu0 %v393
    %482 = vmatpush.msra.mxu0 %v392
    %483 = vmatpush.msra.mxu0 %v391
    %484 = vmatpush.msra.mxu0 %v390
    %485 = vmatpush.msra.mxu0 %v389
    %486 = vmatpush.msra.mxu0 %v388
    %487 = vmatpush.msra.mxu0 %v387
    %488 = vmatpush.msra.mxu0 %v386
    %489 = vmatpush.msra.mxu0 %v385
    %490 = vmatpush.msra.mxu0 %v384
    %491 = vmatpush.msra.mxu0 %v383
    %492 = vmatpush.msra.mxu0 %v382
    %493 = vmatpush.msra.mxu0 %v381
    %494 = vmatpush.msra.mxu0 %v380
    %495 = vmatpush.msra.mxu0 %v379
    %496 = vmatmul.f32.gmra.mxu0 %v234
    %v497 = vpop.f32.mrf.mxu0
    %v498 = vadd.f32 %v433, %v497
    %499 = vmatmul.f32.gmra.mxu0 %v237
    %v500 = vpop.f32.mrf.mxu0
    %v501 = vadd.f32 %v436, %v500
    %502 = vmatmul.f32.gmra.mxu0 %v240
    %v503 = vpop.f32.mrf.mxu0
    %v504 = vadd.f32 %v439, %v503
    %505 = vmatmul.f32.gmra.mxu0 %v243
    %v506 = vpop.f32.mrf.mxu0
    %v507 = vadd.f32 %v442, %v506
    %508 = vmatmul.f32.gmra.mxu0 %v246
    %v509 = vpop.f32.mrf.mxu0
    %v510 = vadd.f32 %v445, %v509
    %511 = vmatmul.f32.gmra.mxu0 %v249
    %v512 = vpop.f32.mrf.mxu0
    %v513 = vadd.f32 %v448, %v512
    %514 = vmatmul.f32.gmra.mxu0 %v252
    %v515 = vpop.f32.mrf.mxu0
    %v516 = vadd.f32 %v451, %v515
    %517 = vmatmul.f32.gmra.mxu0 %v255
    %v518 = vpop.f32.mrf.mxu0
    %v519 = vadd.f32 %v454, %v518
    %520 = vmatmul.f32.gmra.mxu0 %v258
    %v521 = vpop.f32.mrf.mxu0
    %v522 = vadd.f32 %v457, %v521
    %523 = vmatmul.f32.gmra.mxu0 %v261
    %v524 = vpop.f32.mrf.mxu0
    %v525 = vadd.f32 %v460, %v524
    %526 = vmatmul.f32.gmra.mxu0 %v264
    %v527 = vpop.f32.mrf.mxu0
    %v528 = vadd.f32 %v463, %v527
    %529 = vmatmul.f32.gmra.mxu0 %v267
    %v530 = vpop.f32.mrf.mxu0
    %v531 = vadd.f32 %v466, %v530
    %532 = vmatmul.f32.gmra.mxu0 %v270
    %v533 = vpop.f32.mrf.mxu0
    %v534 = vadd.f32 %v469, %v533
    %535 = vmatmul.f32.gmra.mxu0 %v273
    %v536 = vpop.f32.mrf.mxu0
    %v537 = vadd.f32 %v472, %v536
    %538 = vmatmul.f32.gmra.mxu0 %v276
    %v539 = vpop.f32.mrf.mxu0
    %v540 = vadd.f32 %v475, %v539
    %541 = vmatmul.f32.gmra.mxu0 %v279
    %v542 = vpop.f32.mrf.mxu0
    %v543 = vadd.f32 %v478, %v542
    %544 = vdwg.mxu0
    %545 = vmatpush.msra.mxu0 %v410
    %546 = vmatpush.msra.mxu0 %v409
    %547 = vmatpush.msra.mxu0 %v408
    %548 = vmatpush.msra.mxu0 %v407
    %549 = vmatpush.msra.mxu0 %v406
    %550 = vmatpush.msra.mxu0 %v405
    %551 = vmatpush.msra.mxu0 %v404
    %552 = vmatpush.msra.mxu0 %v403
    %553 = vmatpush.msra.mxu0 %v402
    %554 = vmatpush.msra.mxu0 %v401
    %555 = vmatpush.msra.mxu0 %v400
    %556 = vmatpush.msra.mxu0 %v399
    %557 = vmatpush.msra.mxu0 %v398
    %558 = vmatpush.msra.mxu0 %v397
    %559 = vmatpush.msra.mxu0 %v396
    %560 = vmatpush.msra.mxu0 %v395
    %561 = vmatmul.f32.gmra.mxu0 %v316
    %v562 = vpop.f32.mrf.mxu0
    %v563 = vadd.f32 %v498, %v562
    %564 = vmatmul.f32.gmra.mxu0 %v319
    %v565 = vpop.f32.mrf.mxu0
    %v566 = vadd.f32 %v501, %v565
    %567 = vmatmul.f32.gmra.mxu0 %v322
    %v568 = vpop.f32.mrf.mxu0
    %v569 = vadd.f32 %v504, %v568
    %570 = vmatmul.f32.gmra.mxu0 %v325
    %v571 = vpop.f32.mrf.mxu0
    %v572 = vadd.f32 %v507, %v571
    %573 = vmatmul.f32.gmra.mxu0 %v328
    %v574 = vpop.f32.mrf.mxu0
    %v575 = vadd.f32 %v510, %v574
    %576 = vmatmul.f32.gmra.mxu0 %v331
    %v577 = vpop.f32.mrf.mxu0
    %v578 = vadd.f32 %v513, %v577
    %579 = vmatmul.f32.gmra.mxu0 %v334
    %v580 = vpop.f32.mrf.mxu0
    %v581 = vadd.f32 %v516, %v580
    %582 = vmatmul.f32.gmra.mxu0 %v337
    %v583 = vpop.f32.mrf.mxu0
    %v584 = vadd.f32 %v519, %v583
    %585 = vmatmul.f32.gmra.mxu0 %v340
    %v586 = vpop.f32.mrf.mxu0
    %v587 = vadd.f32 %v522, %v586
    %588 = vmatmul.f32.gmra.mxu0 %v343
    %v589 = vpop.f32.mrf.mxu0
    %v590 = vadd.f32 %v525, %v589
    %591 = vmatmul.f32.gmra.mxu0 %v346
    %v592 = vpop.f32.mrf.mxu0
    %v593 = vadd.f32 %v528, %v592
    %594 = vmatmul.f32.gmra.mxu0 %v349
    %v595 = vpop.f32.mrf.mxu0
    %v596 = vadd.f32 %v531, %v595
    %597 = vmatmul.f32.gmra.mxu0 %v352
    %v598 = vpop.f32.mrf.mxu0
    %v599 = vadd.f32 %v534, %v598
    %600 = vmatmul.f32.gmra.mxu0 %v355
    %v601 = vpop.f32.mrf.mxu0
    %v602 = vadd.f32 %v537, %v601
    %603 = vmatmul.f32.gmra.mxu0 %v358
    %v604 = vpop.f32.mrf.mxu0
    %v605 = vadd.f32 %v540, %v604
    %606 = vmatmul.f32.gmra.mxu0 %v361
    %v607 = vpop.f32.mrf.mxu0
    %v608 = vadd.f32 %v543, %v607
    %609 = vdwg.mxu0
    %vm610 = vcmp.gt.f32.partialorder %v563, 0.0
    %vm611 = vcmp.gt.f32.partialorder %v566, 0.0
    %vm612 = vcmp.gt.f32.partialorder %v569, 0.0
    %vm613 = vcmp.gt.f32.partialorder %v572, 0.0
    %vm614 = vcmp.gt.f32.partialorder %v575, 0.0
    %vm615 = vcmp.gt.f32.partialorder %v578, 0.0
    %vm616 = vcmp.gt.f32.partialorder %v581, 0.0
    %vm617 = vcmp.gt.f32.partialorder %v584, 0.0
    %vm618 = vcmp.gt.f32.partialorder %v587, 0.0
    %vm619 = vcmp.gt.f32.partialorder %v590, 0.0
    %vm620 = vcmp.gt.f32.partialorder %v593, 0.0
    %vm621 = vcmp.gt.f32.partialorder %v596, 0.0
    %vm622 = vcmp.gt.f32.partialorder %v599, 0.0
    %vm623 = vcmp.gt.f32.partialorder %v602, 0.0
    %vm624 = vcmp.gt.f32.partialorder %v605, 0.0
    %vm625 = vcmp.gt.f32.partialorder %v608, 0.0
    %v626 = vmul.f32 %v563, 0.01
    %v627 = vmul.f32 %v566, 0.01
    %v628 = vmul.f32 %v569, 0.01
    %v629 = vmul.f32 %v572, 0.01
    %v630 = vmul.f32 %v575, 0.01
    %v631 = vmul.f32 %v578, 0.01
    %v632 = vmul.f32 %v581, 0.01
    %v633 = vmul.f32 %v584, 0.01
    %v634 = vmul.f32 %v587, 0.01
    %v635 = vmul.f32 %v590, 0.01
    %v636 = vmul.f32 %v593, 0.01
    %v637 = vmul.f32 %v596, 0.01
    %v638 = vmul.f32 %v599, 0.01
    %v639 = vmul.f32 %v602, 0.01
    %v640 = vmul.f32 %v605, 0.01
    %v641 = vmul.f32 %v608, 0.01
    %v642 = vsel %vm610, %v563, %v626
    %v643 = vsel %vm611, %v566, %v627
    %v644 = vsel %vm612, %v569, %v628
    %v645 = vsel %vm613, %v572, %v629
    %v646 = vsel %vm614, %v575, %v630
    %v647 = vsel %vm615, %v578, %v631
    %v648 = vsel %vm616, %v581, %v632
    %v649 = vsel %vm617, %v584, %v633
    %v650 = vsel %vm618, %v587, %v634
    %v651 = vsel %vm619, %v590, %v635
    %v652 = vsel %vm620, %v593, %v636
    %v653 = vsel %vm621, %v596, %v637
    %v654 = vsel %vm622, %v599, %v638
    %v655 = vsel %vm623, %v602, %v639
    %v656 = vsel %vm624, %v605, %v640
    %v657 = vsel %vm625, %v608, %v641
    %658 = vmatpush.msra.mxu0 %v657
    %659 = vmatpush.msra.mxu0 %v656
    %660 = vmatpush.msra.mxu0 %v655
    %661 = vmatpush.msra.mxu0 %v654
    %662 = vmatpush.msra.mxu0 %v653
    %663 = vmatpush.msra.mxu0 %v652
    %664 = vmatpush.msra.mxu0 %v651
    %665 = vmatpush.msra.mxu0 %v650
    %666 = vmatpush.msra.mxu0 %v649
    %667 = vmatpush.msra.mxu0 %v648
    %668 = vmatpush.msra.mxu0 %v647
    %669 = vmatpush.msra.mxu0 %v646
    %670 = vmatpush.msra.mxu0 %v645
    %671 = vmatpush.msra.mxu0 %v644
    %672 = vmatpush.msra.mxu0 %v643
    %673 = vmatpush.msra.mxu0 %v642
    %674 = vmatmul.f32.gmra.mxu0 %v118
    %v675 = vpop.f32.mrf.mxu0
    %v676 = vadd.f32 0.0, %v675
    %677 = vmatmul.f32.gmra.mxu0 %v119
    %v678 = vpop.f32.mrf.mxu0
    %v679 = vadd.f32 0.0, %v678
    %680 = vmatmul.f32.gmra.mxu0 %v120
    %v681 = vpop.f32.mrf.mxu0
    %v682 = vadd.f32 0.0, %v681
    %683 = vmatmul.f32.gmra.mxu0 %v121
    %v684 = vpop.f32.mrf.mxu0
    %v685 = vadd.f32 0.0, %v684
    %686 = vmatmul.f32.gmra.mxu0 %v122
    %v687 = vpop.f32.mrf.mxu0
    %v688 = vadd.f32 0.0, %v687
    %689 = vmatmul.f32.gmra.mxu0 %v123
    %v690 = vpop.f32.mrf.mxu0
    %v691 = vadd.f32 0.0, %v690
    %692 = vmatmul.f32.gmra.mxu0 %v124
    %v693 = vpop.f32.mrf.mxu0
    %v694 = vadd.f32 0.0, %v693
    %695 = vmatmul.f32.gmra.mxu0 %v125
    %v696 = vpop.f32.mrf.mxu0
    %v697 = vadd.f32 0.0, %v696
    %698 = vmatmul.f32.gmra.mxu0 %v126
    %v699 = vpop.f32.mrf.mxu0
    %v700 = vadd.f32 0.0, %v699
    %701 = vmatmul.f32.gmra.mxu0 %v127
    %v702 = vpop.f32.mrf.mxu0
    %v703 = vadd.f32 0.0, %v702
    %704 = vmatmul.f32.gmra.mxu0 %v128
    %v705 = vpop.f32.mrf.mxu0
    %v706 = vadd.f32 0.0, %v705
    %707 = vmatmul.f32.gmra.mxu0 %v129
    %v708 = vpop.f32.mrf.mxu0
    %v709 = vadd.f32 0.0, %v708
    %710 = vmatmul.f32.gmra.mxu0 %v130
    %v711 = vpop.f32.mrf.mxu0
    %v712 = vadd.f32 0.0, %v711
    %713 = vmatmul.f32.gmra.mxu0 %v131
    %v714 = vpop.f32.mrf.mxu0
    %v715 = vadd.f32 0.0, %v714
    %716 = vmatmul.f32.gmra.mxu0 %v132
    %v717 = vpop.f32.mrf.mxu0
    %v718 = vadd.f32 0.0, %v717
    %719 = vmatmul.f32.gmra.mxu0 %v133
    %v720 = vpop.f32.mrf.mxu0
    %v721 = vadd.f32 0.0, %v720
    %722 = vdwg.mxu0
    %723 = vmatpush.msra.mxu0 %v657
    %724 = vmatpush.msra.mxu0 %v656
    %725 = vmatpush.msra.mxu0 %v655
    %726 = vmatpush.msra.mxu0 %v654
    %727 = vmatpush.msra.mxu0 %v653
    %728 = vmatpush.msra.mxu0 %v652
    %729 = vmatpush.msra.mxu0 %v651
    %730 = vmatpush.msra.mxu0 %v650
    %731 = vmatpush.msra.mxu0 %v649
    %732 = vmatpush.msra.mxu0 %v648
    %733 = vmatpush.msra.mxu0 %v647
    %734 = vmatpush.msra.mxu0 %v646
    %735 = vmatpush.msra.mxu0 %v645
    %736 = vmatpush.msra.mxu0 %v644
    %737 = vmatpush.msra.mxu0 %v643
    %738 = vmatpush.msra.mxu0 %v642
    %739 = vmatmul.f32.gmra.mxu0 %v200
    %v740 = vpop.f32.mrf.mxu0
    %v741 = vadd.f32 0.0, %v740
    %742 = vmatmul.f32.gmra.mxu0 %v201
    %v743 = vpop.f32.mrf.mxu0
    %v744 = vadd.f32 0.0, %v743
    %745 = vmatmul.f32.gmra.mxu0 %v202
    %v746 = vpop.f32.mrf.mxu0
    %v747 = vadd.f32 0.0, %v746
    %748 = vmatmul.f32.gmra.mxu0 %v203
    %v749 = vpop.f32.mrf.mxu0
    %v750 = vadd.f32 0.0, %v749
    %751 = vmatmul.f32.gmra.mxu0 %v204
    %v752 = vpop.f32.mrf.mxu0
    %v753 = vadd.f32 0.0, %v752
    %754 = vmatmul.f32.gmra.mxu0 %v205
    %v755 = vpop.f32.mrf.mxu0
    %v756 = vadd.f32 0.0, %v755
    %757 = vmatmul.f32.gmra.mxu0 %v206
    %v758 = vpop.f32.mrf.mxu0
    %v759 = vadd.f32 0.0, %v758
    %760 = vmatmul.f32.gmra.mxu0 %v207
    %v761 = vpop.f32.mrf.mxu0
    %v762 = vadd.f32 0.0, %v761
    %763 = vmatmul.f32.gmra.mxu0 %v208
    %v764 = vpop.f32.mrf.mxu0
    %v765 = vadd.f32 0.0, %v764
    %766 = vmatmul.f32.gmra.mxu0 %v209
    %v767 = vpop.f32.mrf.mxu0
    %v768 = vadd.f32 0.0, %v767
    %769 = vmatmul.f32.gmra.mxu0 %v210
    %v770 = vpop.f32.mrf.mxu0
    %v771 = vadd.f32 0.0, %v770
    %772 = vmatmul.f32.gmra.mxu0 %v211
    %v773 = vpop.f32.mrf.mxu0
    %v774 = vadd.f32 0.0, %v773
    %775 = vmatmul.f32.gmra.mxu0 %v212
    %v776 = vpop.f32.mrf.mxu0
    %v777 = vadd.f32 0.0, %v776
    %778 = vmatmul.f32.gmra.mxu0 %v213
    %v779 = vpop.f32.mrf.mxu0
    %v780 = vadd.f32 0.0, %v779
    %781 = vmatmul.f32.gmra.mxu0 %v214
    %v782 = vpop.f32.mrf.mxu0
    %v783 = vadd.f32 0.0, %v782
    %784 = vmatmul.f32.gmra.mxu0 %v215
    %v785 = vpop.f32.mrf.mxu0
    %v786 = vadd.f32 0.0, %v785
    %787 = vdwg.mxu0
    %788 = vmatpush.msra.mxu0 %v657
    %789 = vmatpush.msra.mxu0 %v656
    %790 = vmatpush.msra.mxu0 %v655
    %791 = vmatpush.msra.mxu0 %v654
    %792 = vmatpush.msra.mxu0 %v653
    %793 = vmatpush.msra.mxu0 %v652
    %794 = vmatpush.msra.mxu0 %v651
    %795 = vmatpush.msra.mxu0 %v650
    %796 = vmatpush.msra.mxu0 %v649
    %797 = vmatpush.msra.mxu0 %v648
    %798 = vmatpush.msra.mxu0 %v647
    %799 = vmatpush.msra.mxu0 %v646
    %800 = vmatpush.msra.mxu0 %v645
    %801 = vmatpush.msra.mxu0 %v644
    %802 = vmatpush.msra.mxu0 %v643
    %803 = vmatpush.msra.mxu0 %v642
    %804 = vmatmul.f32.gmra.mxu0 %v282
    %v805 = vpop.f32.mrf.mxu0
    %v806 = vadd.f32 0.0, %v805
    %807 = vmatmul.f32.gmra.mxu0 %v283
    %v808 = vpop.f32.mrf.mxu0
    %v809 = vadd.f32 0.0, %v808
    %810 = vmatmul.f32.gmra.mxu0 %v284
    %v811 = vpop.f32.mrf.mxu0
    %v812 = vadd.f32 0.0, %v811
    %813 = vmatmul.f32.gmra.mxu0 %v285
    %v814 = vpop.f32.mrf.mxu0
    %v815 = vadd.f32 0.0, %v814
    %816 = vmatmul.f32.gmra.mxu0 %v286
    %v817 = vpop.f32.mrf.mxu0
    %v818 = vadd.f32 0.0, %v817
    %819 = vmatmul.f32.gmra.mxu0 %v287
    %v820 = vpop.f32.mrf.mxu0
    %v821 = vadd.f32 0.0, %v820
    %822 = vmatmul.f32.gmra.mxu0 %v288
    %v823 = vpop.f32.mrf.mxu0
    %v824 = vadd.f32 0.0, %v823
    %825 = vmatmul.f32.gmra.mxu0 %v289
    %v826 = vpop.f32.mrf.mxu0
    %v827 = vadd.f32 0.0, %v826
    %828 = vmatmul.f32.gmra.mxu0 %v290
    %v829 = vpop.f32.mrf.mxu0
    %v830 = vadd.f32 0.0, %v829
    %831 = vmatmul.f32.gmra.mxu0 %v291
    %v832 = vpop.f32.mrf.mxu0
    %v833 = vadd.f32 0.0, %v832
    %834 = vmatmul.f32.gmra.mxu0 %v292
    %v835 = vpop.f32.mrf.mxu0
    %v836 = vadd.f32 0.0, %v835
    %837 = vmatmul.f32.gmra.mxu0 %v293
    %v838 = vpop.f32.mrf.mxu0
    %v839 = vadd.f32 0.0, %v838
    %840 = vmatmul.f32.gmra.mxu0 %v294
    %v841 = vpop.f32.mrf.mxu0
    %v842 = vadd.f32 0.0, %v841
    %843 = vmatmul.f32.gmra.mxu0 %v295
    %v844 = vpop.f32.mrf.mxu0
    %v845 = vadd.f32 0.0, %v844
    %846 = vmatmul.f32.gmra.mxu0 %v296
    %v847 = vpop.f32.mrf.mxu0
    %v848 = vadd.f32 0.0, %v847
    %849 = vmatmul.f32.gmra.mxu0 %v297
    %v850 = vpop.f32.mrf.mxu0
    %v851 = vadd.f32 0.0, %v850
    %852 = vdwg.mxu0
    %v853 = vld [vmem:[#allocation5] sm:$0xff]
    %v854 = vld [vmem:[#allocation5 + $0x8] sm:$0xff]
    %v855 = vld [vmem:[#allocation5 + $0x10] sm:$0xff]
    %v856 = vld [vmem:[#allocation5 + $0x18] sm:$0xff]
    %v857 = vld [vmem:[#allocation5 + $0x20] sm:$0xff]
    %v858 = vld [vmem:[#allocation5 + $0x28] sm:$0xff]
    %v859 = vld [vmem:[#allocation5 + $0x30] sm:$0xff]
    %v860 = vld [vmem:[#allocation5 + $0x38] sm:$0xff]
    %v861 = vld [vmem:[#allocation5 + $0x40] sm:$0xff]
    %v862 = vld [vmem:[#allocation5 + $0x48] sm:$0xff]
    %v863 = vld [vmem:[#allocation5 + $0x50] sm:$0xff]
    %v864 = vld [vmem:[#allocation5 + $0x58] sm:$0xff]
    %v865 = vld [vmem:[#allocation5 + $0x60] sm:$0xff]
    %v866 = vld [vmem:[#allocation5 + $0x68] sm:$0xff]
    %v867 = vld [vmem:[#allocation5 + $0x70] sm:$0xff]
    %v868 = vld [vmem:[#allocation5 + $0x78] sm:$0xff]
    %v869 = vld [vmem:[#allocation5 + $0x80] sm:$0xff]
    %v870 = vld [vmem:[#allocation5 + $0x88] sm:$0xff]
    %v871 = vld [vmem:[#allocation5 + $0x90] sm:$0xff]
    %v872 = vld [vmem:[#allocation5 + $0x98] sm:$0xff]
    %v873 = vld [vmem:[#allocation5 + $0xa0] sm:$0xff]
    %v874 = vld [vmem:[#allocation5 + $0xa8] sm:$0xff]
    %v875 = vld [vmem:[#allocation5 + $0xb0] sm:$0xff]
    %v876 = vld [vmem:[#allocation5 + $0xb8] sm:$0xff]
    %v877 = vld [vmem:[#allocation5 + $0xc0] sm:$0xff]
    %v878 = vld [vmem:[#allocation5 + $0xc8] sm:$0xff]
    %v879 = vld [vmem:[#allocation5 + $0xd0] sm:$0xff]
    %v880 = vld [vmem:[#allocation5 + $0xd8] sm:$0xff]
    %v881 = vld [vmem:[#allocation5 + $0xe0] sm:$0xff]
    %v882 = vld [vmem:[#allocation5 + $0xe8] sm:$0xff]
    %v883 = vld [vmem:[#allocation5 + $0xf0] sm:$0xff]
    %v884 = vld [vmem:[#allocation5 + $0xf8] sm:$0xff]
    %v885 = vld [vmem:[#allocation5 + $0x100] sm:$0xff]
    %v886 = vld [vmem:[#allocation5 + $0x108] sm:$0xff]
    %v887 = vld [vmem:[#allocation5 + $0x110] sm:$0xff]
    %v888 = vld [vmem:[#allocation5 + $0x118] sm:$0xff]
    %v889 = vld [vmem:[#allocation5 + $0x120] sm:$0xff]
    %v890 = vld [vmem:[#allocation5 + $0x128] sm:$0xff]
    %v891 = vld [vmem:[#allocation5 + $0x130] sm:$0xff]
    %v892 = vld [vmem:[#allocation5 + $0x138] sm:$0xff]
    %v893 = vld [vmem:[#allocation5 + $0x140] sm:$0xff]
    %v894 = vld [vmem:[#allocation5 + $0x148] sm:$0xff]
    %v895 = vld [vmem:[#allocation5 + $0x150] sm:$0xff]
    %v896 = vld [vmem:[#allocation5 + $0x158] sm:$0xff]
    %v897 = vld [vmem:[#allocation5 + $0x160] sm:$0xff]
    %v898 = vld [vmem:[#allocation5 + $0x168] sm:$0xff]
    %v899 = vld [vmem:[#allocation5 + $0x170] sm:$0xff]
    %v900 = vld [vmem:[#allocation5 + $0x178] sm:$0xff]
    %v901 = vld [vmem:[%s5] sm:$0x1]
    %v903 = vperm.slane %v901, 0
    %905 = vmatpush.msra.mxu0 %v868
    %906 = vmatpush.msra.mxu0 %v867
    %907 = vmatpush.msra.mxu0 %v866
    %908 = vmatpush.msra.mxu0 %v865
    %909 = vmatpush.msra.mxu0 %v864
    %910 = vmatpush.msra.mxu0 %v863
    %911 = vmatpush.msra.mxu0 %v862
    %912 = vmatpush.msra.mxu0 %v861
    %913 = vmatpush.msra.mxu0 %v860
    %914 = vmatpush.msra.mxu0 %v859
    %915 = vmatpush.msra.mxu0 %v858
    %916 = vmatpush.msra.mxu0 %v857
    %917 = vmatpush.msra.mxu0 %v856
    %918 = vmatpush.msra.mxu0 %v855
    %919 = vmatpush.msra.mxu0 %v854
    %920 = vmatpush.msra.mxu0 %v853
    %921 = vmatmul.f32.gmra.mxu0 %v676
    %v922 = vpop.f32.mrf.mxu0
    %v923 = vadd.f32 %v903, %v922
    %924 = vmatmul.f32.gmra.mxu0 %v679
    %v925 = vpop.f32.mrf.mxu0
    %v926 = vadd.f32 %v903, %v925
    %927 = vmatmul.f32.gmra.mxu0 %v682
    %v928 = vpop.f32.mrf.mxu0
    %v929 = vadd.f32 %v903, %v928
    %930 = vmatmul.f32.gmra.mxu0 %v685
    %v931 = vpop.f32.mrf.mxu0
    %v932 = vadd.f32 %v903, %v931
    %933 = vmatmul.f32.gmra.mxu0 %v688
    %v934 = vpop.f32.mrf.mxu0
    %v935 = vadd.f32 %v903, %v934
    %936 = vmatmul.f32.gmra.mxu0 %v691
    %v937 = vpop.f32.mrf.mxu0
    %v938 = vadd.f32 %v903, %v937
    %939 = vmatmul.f32.gmra.mxu0 %v694
    %v940 = vpop.f32.mrf.mxu0
    %v941 = vadd.f32 %v903, %v940
    %942 = vmatmul.f32.gmra.mxu0 %v697
    %v943 = vpop.f32.mrf.mxu0
    %v944 = vadd.f32 %v903, %v943
    %945 = vmatmul.f32.gmra.mxu0 %v700
    %v946 = vpop.f32.mrf.mxu0
    %v947 = vadd.f32 %v903, %v946
    %948 = vmatmul.f32.gmra.mxu0 %v703
    %v949 = vpop.f32.mrf.mxu0
    %v950 = vadd.f32 %v903, %v949
    %951 = vmatmul.f32.gmra.mxu0 %v706
    %v952 = vpop.f32.mrf.mxu0
    %v953 = vadd.f32 %v903, %v952
    %954 = vmatmul.f32.gmra.mxu0 %v709
    %v955 = vpop.f32.mrf.mxu0
    %v956 = vadd.f32 %v903, %v955
    %957 = vmatmul.f32.gmra.mxu0 %v712
    %v958 = vpop.f32.mrf.mxu0
    %v959 = vadd.f32 %v903, %v958
    %960 = vmatmul.f32.gmra.mxu0 %v715
    %v961 = vpop.f32.mrf.mxu0
    %v962 = vadd.f32 %v903, %v961
    %963 = vmatmul.f32.gmra.mxu0 %v718
    %v964 = vpop.f32.mrf.mxu0
    %v965 = vadd.f32 %v903, %v964
    %966 = vmatmul.f32.gmra.mxu0 %v721
    %v967 = vpop.f32.mrf.mxu0
    %v968 = vadd.f32 %v903, %v967
    %969 = vdwg.mxu0
    %970 = vmatpush.msra.mxu0 %v884
    %971 = vmatpush.msra.mxu0 %v883
    %972 = vmatpush.msra.mxu0 %v882
    %973 = vmatpush.msra.mxu0 %v881
    %974 = vmatpush.msra.mxu0 %v880
    %975 = vmatpush.msra.mxu0 %v879
    %976 = vmatpush.msra.mxu0 %v878
    %977 = vmatpush.msra.mxu0 %v877
    %978 = vmatpush.msra.mxu0 %v876
    %979 = vmatpush.msra.mxu0 %v875
    %980 = vmatpush.msra.mxu0 %v874
    %981 = vmatpush.msra.mxu0 %v873
    %982 = vmatpush.msra.mxu0 %v872
    %983 = vmatpush.msra.mxu0 %v871
    %984 = vmatpush.msra.mxu0 %v870
    %985 = vmatpush.msra.mxu0 %v869
    %986 = vmatmul.f32.gmra.mxu0 %v741
    %v987 = vpop.f32.mrf.mxu0
    %v988 = vadd.f32 %v923, %v987
    %989 = vmatmul.f32.gmra.mxu0 %v744
    %v990 = vpop.f32.mrf.mxu0
    %v991 = vadd.f32 %v926, %v990
    %992 = vmatmul.f32.gmra.mxu0 %v747
    %v993 = vpop.f32.mrf.mxu0
    %v994 = vadd.f32 %v929, %v993
    %995 = vmatmul.f32.gmra.mxu0 %v750
    %v996 = vpop.f32.mrf.mxu0
    %v997 = vadd.f32 %v932, %v996
    %998 = vmatmul.f32.gmra.mxu0 %v753
    %v999 = vpop.f32.mrf.mxu0
    %v1000 = vadd.f32 %v935, %v999
    %1001 = vmatmul.f32.gmra.mxu0 %v756
    %v1002 = vpop.f32.mrf.mxu0
    %v1003 = vadd.f32 %v938, %v1002
    %1004 = vmatmul.f32.gmra.mxu0 %v759
    %v1005 = vpop.f32.mrf.mxu0
    %v1006 = vadd.f32 %v941, %v1005
    %1007 = vmatmul.f32.gmra.mxu0 %v762
    %v1008 = vpop.f32.mrf.mxu0
    %v1009 = vadd.f32 %v944, %v1008
    %1010 = vmatmul.f32.gmra.mxu0 %v765
    %v1011 = vpop.f32.mrf.mxu0
    %v1012 = vadd.f32 %v947, %v1011
    %1013 = vmatmul.f32.gmra.mxu0 %v768
    %v1014 = vpop.f32.mrf.mxu0
    %v1015 = vadd.f32 %v950, %v1014
    %1016 = vmatmul.f32.gmra.mxu0 %v771
    %v1017 = vpop.f32.mrf.mxu0
    %v1018 = vadd.f32 %v953, %v1017
    %1019 = vmatmul.f32.gmra.mxu0 %v774
    %v1020 = vpop.f32.mrf.mxu0
    %v1021 = vadd.f32 %v956, %v1020
    %1022 = vmatmul.f32.gmra.mxu0 %v777
    %v1023 = vpop.f32.mrf.mxu0
    %v1024 = vadd.f32 %v959, %v1023
    %1025 = vmatmul.f32.gmra.mxu0 %v780
    %v1026 = vpop.f32.mrf.mxu0
    %v1027 = vadd.f32 %v962, %v1026
    %1028 = vmatmul.f32.gmra.mxu0 %v783
    %v1029 = vpop.f32.mrf.mxu0
    %v1030 = vadd.f32 %v965, %v1029
    %1031 = vmatmul.f32.gmra.mxu0 %v786
    %v1032 = vpop.f32.mrf.mxu0
    %v1033 = vadd.f32 %v968, %v1032
    %1034 = vdwg.mxu0
    %1035 = vmatpush.msra.mxu0 %v900
    %1036 = vmatpush.msra.mxu0 %v899
    %1037 = vmatpush.msra.mxu0 %v898
    %1038 = vmatpush.msra.mxu0 %v897
    %1039 = vmatpush.msra.mxu0 %v896
    %1040 = vmatpush.msra.mxu0 %v895
    %1041 = vmatpush.msra.mxu0 %v894
    %1042 = vmatpush.msra.mxu0 %v893
    %1043 = vmatpush.msra.mxu0 %v892
    %1044 = vmatpush.msra.mxu0 %v891
    %1045 = vmatpush.msra.mxu0 %v890
    %1046 = vmatpush.msra.mxu0 %v889
    %1047 = vmatpush.msra.mxu0 %v888
    %1048 = vmatpush.msra.mxu0 %v887
    %1049 = vmatpush.msra.mxu0 %v886
    %1050 = vmatpush.msra.mxu0 %v885
    %1051 = vmatmul.f32.gmra.mxu0 %v806
    %v1052 = vpop.f32.mrf.mxu0
    %v1053 = vadd.f32 %v988, %v1052
    %1054 = vmatmul.f32.gmra.mxu0 %v809
    %v1055 = vpop.f32.mrf.mxu0
    %v1056 = vadd.f32 %v991, %v1055
    %1057 = vmatmul.f32.gmra.mxu0 %v812
    %v1058 = vpop.f32.mrf.mxu0
    %v1059 = vadd.f32 %v994, %v1058
    %1060 = vmatmul.f32.gmra.mxu0 %v815
    %v1061 = vpop.f32.mrf.mxu0
    %v1062 = vadd.f32 %v997, %v1061
    %1063 = vmatmul.f32.gmra.mxu0 %v818
    %v1064 = vpop.f32.mrf.mxu0
    %v1065 = vadd.f32 %v1000, %v1064
    %1066 = vmatmul.f32.gmra.mxu0 %v821
    %v1067 = vpop.f32.mrf.mxu0
    %v1068 = vadd.f32 %v1003, %v1067
    %1069 = vmatmul.f32.gmra.mxu0 %v824
    %v1070 = vpop.f32.mrf.mxu0
    %v1071 = vadd.f32 %v1006, %v1070
    %1072 = vmatmul.f32.gmra.mxu0 %v827
    %v1073 = vpop.f32.mrf.mxu0
    %v1074 = vadd.f32 %v1009, %v1073
    %1075 = vmatmul.f32.gmra.mxu0 %v830
    %v1076 = vpop.f32.mrf.mxu0
    %v1077 = vadd.f32 %v1012, %v1076
    %1078 = vmatmul.f32.gmra.mxu0 %v833
    %v1079 = vpop.f32.mrf.mxu0
    %v1080 = vadd.f32 %v1015, %v1079
    %1081 = vmatmul.f32.gmra.mxu0 %v836
    %v1082 = vpop.f32.mrf.mxu0
    %v1083 = vadd.f32 %v1018, %v1082
    %1084 = vmatmul.f32.gmra.mxu0 %v839
    %v1085 = vpop.f32.mrf.mxu0
    %v1086 = vadd.f32 %v1021, %v1085
    %1087 = vmatmul.f32.gmra.mxu0 %v842
    %v1088 = vpop.f32.mrf.mxu0
    %v1089 = vadd.f32 %v1024, %v1088
    %1090 = vmatmul.f32.gmra.mxu0 %v845
    %v1091 = vpop.f32.mrf.mxu0
    %v1092 = vadd.f32 %v1027, %v1091
    %1093 = vmatmul.f32.gmra.mxu0 %v848
    %v1094 = vpop.f32.mrf.mxu0
    %v1095 = vadd.f32 %v1030, %v1094
    %1096 = vmatmul.f32.gmra.mxu0 %v851
    %v1097 = vpop.f32.mrf.mxu0
    %v1098 = vadd.f32 %v1033, %v1097
    %1099 = vdwg.mxu0
    %v1100 = vlaneseq
    %v1101 = vand.u32 %v1100, 127
    %vm1102 = vcmp.lt.s32.totalorder %v1101, 8
    %v1103 = vsel %vm1102, %v1053, -inf
    %v1104 = vsel %vm1102, %v1056, -inf
    %v1105 = vsel %vm1102, %v1059, -inf
    %v1106 = vsel %vm1102, %v1062, -inf
    %v1107 = vsel %vm1102, %v1065, -inf
    %v1108 = vsel %vm1102, %v1068, -inf
    %v1109 = vsel %vm1102, %v1071, -inf
    %v1110 = vsel %vm1102, %v1074, -inf
    %v1111 = vsel %vm1102, %v1077, -inf
    %v1112 = vsel %vm1102, %v1080, -inf
    %v1113 = vsel %vm1102, %v1083, -inf
    %v1114 = vsel %vm1102, %v1086, -inf
    %v1115 = vsel %vm1102, %v1089, -inf
    %v1116 = vsel %vm1102, %v1092, -inf
    %v1117 = vsel %vm1102, %v1095, -inf
    %v1118 = vsel %vm1102, %v1098, -inf
    %1119 = vmax.xlane.f32.xlu0 %v1103
    %v1120 = vpop.xlane.xlu0 %1119
    %1121 = vmax.xlane.f32.xlu0 %v1104
    %v1122 = vpop.xlane.xlu0 %1121
    %1123 = vmax.xlane.f32.xlu0 %v1105
    %v1124 = vpop.xlane.xlu0 %1123
    %1125 = vmax.xlane.f32.xlu0 %v1106
    %v1126 = vpop.xlane.xlu0 %1125
    %1127 = vmax.xlane.f32.xlu0 %v1107
    %v1128 = vpop.xlane.xlu0 %1127
    %1129 = vmax.xlane.f32.xlu0 %v1108
    %v1130 = vpop.xlane.xlu0 %1129
    %1131 = vmax.xlane.f32.xlu0 %v1109
    %v1132 = vpop.xlane.xlu0 %1131
    %1133 = vmax.xlane.f32.xlu0 %v1110
    %v1134 = vpop.xlane.xlu0 %1133
    %1135 = vmax.xlane.f32.xlu0 %v1111
    %v1136 = vpop.xlane.xlu0 %1135
    %1137 = vmax.xlane.f32.xlu0 %v1112
    %v1138 = vpop.xlane.xlu0 %1137
    %1139 = vmax.xlane.f32.xlu0 %v1113
    %v1140 = vpop.xlane.xlu0 %1139
    %1141 = vmax.xlane.f32.xlu0 %v1114
    %v1142 = vpop.xlane.xlu0 %1141
    %1143 = vmax.xlane.f32.xlu0 %v1115
    %v1144 = vpop.xlane.xlu0 %1143
    %1145 = vmax.xlane.f32.xlu0 %v1116
    %v1146 = vpop.xlane.xlu0 %1145
    %1147 = vmax.xlane.f32.xlu0 %v1117
    %v1148 = vpop.xlane.xlu0 %1147
    %1149 = vmax.xlane.f32.xlu0 %v1118
    %v1150 = vpop.xlane.xlu0 %1149
    %v1151 = vsel %vm1102, %v1053, inf
    %v1152 = vsel %vm1102, %v1056, inf
    %v1153 = vsel %vm1102, %v1059, inf
    %v1154 = vsel %vm1102, %v1062, inf
    %v1155 = vsel %vm1102, %v1065, inf
    %v1156 = vsel %vm1102, %v1068, inf
    %v1157 = vsel %vm1102, %v1071, inf
    %v1158 = vsel %vm1102, %v1074, inf
    %v1159 = vsel %vm1102, %v1077, inf
    %v1160 = vsel %vm1102, %v1080, inf
    %v1161 = vsel %vm1102, %v1083, inf
    %v1162 = vsel %vm1102, %v1086, inf
    %v1163 = vsel %vm1102, %v1089, inf
    %v1164 = vsel %vm1102, %v1092, inf
    %v1165 = vsel %vm1102, %v1095, inf
    %v1166 = vsel %vm1102, %v1098, inf
    %1167 = vmin.xlane.f32.xlu0 %v1151
    %v1168 = vpop.xlane.xlu0 %1167
    %1169 = vmin.xlane.f32.xlu0 %v1152
    %v1170 = vpop.xlane.xlu0 %1169
    %1171 = vmin.xlane.f32.xlu0 %v1153
    %v1172 = vpop.xlane.xlu0 %1171
    %1173 = vmin.xlane.f32.xlu0 %v1154
    %v1174 = vpop.xlane.xlu0 %1173
    %1175 = vmin.xlane.f32.xlu0 %v1155
    %v1176 = vpop.xlane.xlu0 %1175
    %1177 = vmin.xlane.f32.xlu0 %v1156
    %v1178 = vpop.xlane.xlu0 %1177
    %1179 = vmin.xlane.f32.xlu0 %v1157
    %v1180 = vpop.xlane.xlu0 %1179
    %1181 = vmin.xlane.f32.xlu0 %v1158
    %v1182 = vpop.xlane.xlu0 %1181
    %1183 = vmin.xlane.f32.xlu0 %v1159
    %v1184 = vpop.xlane.xlu0 %1183
    %1185 = vmin.xlane.f32.xlu0 %v1160
    %v1186 = vpop.xlane.xlu0 %1185
    %1187 = vmin.xlane.f32.xlu0 %v1161
    %v1188 = vpop.xlane.xlu0 %1187
    %1189 = vmin.xlane.f32.xlu0 %v1162
    %v1190 = vpop.xlane.xlu0 %1189
    %1191 = vmin.xlane.f32.xlu0 %v1163
    %v1192 = vpop.xlane.xlu0 %1191
    %1193 = vmin.xlane.f32.xlu0 %v1164
    %v1194 = vpop.xlane.xlu0 %1193
    %1195 = vmin.xlane.f32.xlu0 %v1165
    %v1196 = vpop.xlane.xlu0 %1195
    %1197 = vmin.xlane.f32.xlu0 %v1166
    %v1198 = vpop.xlane.xlu0 %1197
    %v1199 = vsub.f32 %v1120, %v1168
    %v1200 = vsub.f32 %v1122, %v1170
    %v1201 = vsub.f32 %v1124, %v1172
    %v1202 = vsub.f32 %v1126, %v1174
    %v1203 = vsub.f32 %v1128, %v1176
    %v1204 = vsub.f32 %v1130, %v1178
    %v1205 = vsub.f32 %v1132, %v1180
    %v1206 = vsub.f32 %v1134, %v1182
    %v1207 = vsub.f32 %v1136, %v1184
    %v1208 = vsub.f32 %v1138, %v1186
    %v1209 = vsub.f32 %v1140, %v1188
    %v1210 = vsub.f32 %v1142, %v1190
    %v1211 = vsub.f32 %v1144, %v1192
    %v1212 = vsub.f32 %v1146, %v1194
    %v1213 = vsub.f32 %v1148, %v1196
    %v1214 = vsub.f32 %v1150, %v1198
    %vm1215 = vcmp.gt.f32.partialorder %v1199, 0.0
    %vm1216 = vcmp.gt.f32.partialorder %v1200, 0.0
    %vm1217 = vcmp.gt.f32.partialorder %v1201, 0.0
    %vm1218 = vcmp.gt.f32.partialorder %v1202, 0.0
    %vm1219 = vcmp.gt.f32.partialorder %v1203, 0.0
    %vm1220 = vcmp.gt.f32.partialorder %v1204, 0.0
    %vm1221 = vcmp.gt.f32.partialorder %v1205, 0.0
    %vm1222 = vcmp.gt.f32.partialorder %v1206, 0.0
    %vm1223 = vcmp.gt.f32.partialorder %v1207, 0.0
    %vm1224 = vcmp.gt.f32.partialorder %v1208, 0.0
    %vm1225 = vcmp.gt.f32.partialorder %v1209, 0.0
    %vm1226 = vcmp.gt.f32.partialorder %v1210, 0.0
    %vm1227 = vcmp.gt.f32.partialorder %v1211, 0.0
    %vm1228 = vcmp.gt.f32.partialorder %v1212, 0.0
    %vm1229 = vcmp.gt.f32.partialorder %v1213, 0.0
    %vm1230 = vcmp.gt.f32.partialorder %v1214, 0.0
    %v1231 = vsel %vm1215, %v1199, 1.0
    %v1232 = vsel %vm1216, %v1200, 1.0
    %v1233 = vsel %vm1217, %v1201, 1.0
    %v1234 = vsel %vm1218, %v1202, 1.0
    %v1235 = vsel %vm1219, %v1203, 1.0
    %v1236 = vsel %vm1220, %v1204, 1.0
    %v1237 = vsel %vm1221, %v1205, 1.0
    %v1238 = vsel %vm1222, %v1206, 1.0
    %v1239 = vsel %vm1223, %v1207, 1.0
    %v1240 = vsel %vm1224, %v1208, 1.0
    %v1241 = vsel %vm1225, %v1209, 1.0
    %v1242 = vsel %vm1226, %v1210, 1.0
    %v1243 = vsel %vm1227, %v1211, 1.0
    %v1244 = vsel %vm1228, %v1212, 1.0
    %v1245 = vsel %vm1229, %v1213, 1.0
    %v1246 = vsel %vm1230, %v1214, 1.0
    %v1247 = vrcp.pop %v1231
    %v1248 = vmul.f32 %v1231, %v1247
    %v1249 = vsub.f32 1.0, %v1248
    %v1250 = vmul.f32 %v1247, %v1249
    %v1251 = vadd.f32 %v1247, %v1250
    %vm1252 = vweird.f32 %v1231
    %vm1253 = vweird.f32 %v1247
    %vm1254 = vmor %vm1252, %vm1253
    %v1255 = vsel %vm1254, %v1247, %v1251
    %v1256 = vand.u32 2147483647, %v1231
    %vm1257 = vcmp.eq.f32.partialorder %v1256, 8.507059e+37
    %v1258 = vand.u32 %v1231, 2147483648
    %v1259 = vor.u32 1.1754944e-38, %v1258
    %v1260 = vsel %vm1257, %v1259, %v1255
    %v1261 = vrcp.pop %v1232
    %v1262 = vmul.f32 %v1232, %v1261
    %v1263 = vsub.f32 1.0, %v1262
    %v1264 = vmul.f32 %v1261, %v1263
    %v1265 = vadd.f32 %v1261, %v1264
    %vm1266 = vweird.f32 %v1232
    %vm1267 = vweird.f32 %v1261
    %vm1268 = vmor %vm1266, %vm1267
    %v1269 = vsel %vm1268, %v1261, %v1265
    %v1270 = vand.u32 2147483647, %v1232
    %vm1271 = vcmp.eq.f32.partialorder %v1270, 8.507059e+37
    %v1272 = vand.u32 %v1232, 2147483648
    %v1273 = vor.u32 1.1754944e-38, %v1272
    %v1274 = vsel %vm1271, %v1273, %v1269
    %v1275 = vrcp.pop %v1233
    %v1276 = vmul.f32 %v1233, %v1275
    %v1277 = vsub.f32 1.0, %v1276
    %v1278 = vmul.f32 %v1275, %v1277
    %v1279 = vadd.f32 %v1275, %v1278
    %vm1280 = vweird.f32 %v1233
    %vm1281 = vweird.f32 %v1275
    %vm1282 = vmor %vm1280, %vm1281
    %v1283 = vsel %vm1282, %v1275, %v1279
    %v1284 = vand.u32 2147483647, %v1233
    %vm1285 = vcmp.eq.f32.partialorder %v1284, 8.507059e+37
    %v1286 = vand.u32 %v1233, 2147483648
    %v1287 = vor.u32 1.1754944e-38, %v1286
    %v1288 = vsel %vm1285, %v1287, %v1283
    %v1289 = vrcp.pop %v1234
    %v1290 = vmul.f32 %v1234, %v1289
    %v1291 = vsub.f32 1.0, %v1290
    %v1292 = vmul.f32 %v1289, %v1291
    %v1293 = vadd.f32 %v1289, %v1292
    %vm1294 = vweird.f32 %v1234
    %vm1295 = vweird.f32 %v1289
    %vm1296 = vmor %vm1294, %vm1295
    %v1297 = vsel %vm1296, %v1289, %v1293
    %v1298 = vand.u32 2147483647, %v1234
    %vm1299 = vcmp.eq.f32.partialorder %v1298, 8.507059e+37
    %v1300 = vand.u32 %v1234, 2147483648
    %v1301 = vor.u32 1.1754944e-38, %v1300
    %v1302 = vsel %vm1299, %v1301, %v1297
    %v1303 = vrcp.pop %v1235
    %v1304 = vmul.f32 %v1235, %v1303
    %v1305 = vsub.f32 1.0, %v1304
    %v1306 = vmul.f32 %v1303, %v1305
    %v1307 = vadd.f32 %v1303, %v1306
    %vm1308 = vweird.f32 %v1235
    %vm1309 = vweird.f32 %v1303
    %vm1310 = vmor %vm1308, %vm1309
    %v1311 = vsel %vm1310, %v1303, %v1307
    %v1312 = vand.u32 2147483647, %v1235
    %vm1313 = vcmp.eq.f32.partialorder %v1312, 8.507059e+37
    %v1314 = vand.u32 %v1235, 2147483648
    %v1315 = vor.u32 1.1754944e-38, %v1314
    %v1316 = vsel %vm1313, %v1315, %v1311
    %v1317 = vrcp.pop %v1236
    %v1318 = vmul.f32 %v1236, %v1317
    %v1319 = vsub.f32 1.0, %v1318
    %v1320 = vmul.f32 %v1317, %v1319
    %v1321 = vadd.f32 %v1317, %v1320
    %vm1322 = vweird.f32 %v1236
    %vm1323 = vweird.f32 %v1317
    %vm1324 = vmor %vm1322, %vm1323
    %v1325 = vsel %vm1324, %v1317, %v1321
    %v1326 = vand.u32 2147483647, %v1236
    %vm1327 = vcmp.eq.f32.partialorder %v1326, 8.507059e+37
    %v1328 = vand.u32 %v1236, 2147483648
    %v1329 = vor.u32 1.1754944e-38, %v1328
    %v1330 = vsel %vm1327, %v1329, %v1325
    %v1331 = vrcp.pop %v1237
    %v1332 = vmul.f32 %v1237, %v1331
    %v1333 = vsub.f32 1.0, %v1332
    %v1334 = vmul.f32 %v1331, %v1333
    %v1335 = vadd.f32 %v1331, %v1334
    %vm1336 = vweird.f32 %v1237
    %vm1337 = vweird.f32 %v1331
    %vm1338 = vmor %vm1336, %vm1337
    %v1339 = vsel %vm1338, %v1331, %v1335
    %v1340 = vand.u32 2147483647, %v1237
    %vm1341 = vcmp.eq.f32.partialorder %v1340, 8.507059e+37
    %v1342 = vand.u32 %v1237, 2147483648
    %v1343 = vor.u32 1.1754944e-38, %v1342
    %v1344 = vsel %vm1341, %v1343, %v1339
    %v1345 = vrcp.pop %v1238
    %v1346 = vmul.f32 %v1238, %v1345
    %v1347 = vsub.f32 1.0, %v1346
    %v1348 = vmul.f32 %v1345, %v1347
    %v1349 = vadd.f32 %v1345, %v1348
    %vm1350 = vweird.f32 %v1238
    %vm1351 = vweird.f32 %v1345
    %vm1352 = vmor %vm1350, %vm1351
    %v1353 = vsel %vm1352, %v1345, %v1349
    %v1354 = vand.u32 2147483647, %v1238
    %vm1355 = vcmp.eq.f32.partialorder %v1354, 8.507059e+37
    %v1356 = vand.u32 %v1238, 2147483648
    %v1357 = vor.u32 1.1754944e-38, %v1356
    %v1358 = vsel %vm1355, %v1357, %v1353
    %v1359 = vrcp.pop %v1239
    %v1360 = vmul.f32 %v1239, %v1359
    %v1361 = vsub.f32 1.0, %v1360
    %v1362 = vmul.f32 %v1359, %v1361
    %v1363 = vadd.f32 %v1359, %v1362
    %vm1364 = vweird.f32 %v1239
    %vm1365 = vweird.f32 %v1359
    %vm1366 = vmor %vm1364, %vm1365
    %v1367 = vsel %vm1366, %v1359, %v1363
    %v1368 = vand.u32 2147483647, %v1239
    %vm1369 = vcmp.eq.f32.partialorder %v1368, 8.507059e+37
    %v1370 = vand.u32 %v1239, 2147483648
    %v1371 = vor.u32 1.1754944e-38, %v1370
    %v1372 = vsel %vm1369, %v1371, %v1367
    %v1373 = vrcp.pop %v1240
    %v1374 = vmul.f32 %v1240, %v1373
    %v1375 = vsub.f32 1.0, %v1374
    %v1376 = vmul.f32 %v1373, %v1375
    %v1377 = vadd.f32 %v1373, %v1376
    %vm1378 = vweird.f32 %v1240
    %vm1379 = vweird.f32 %v1373
    %vm1380 = vmor %vm1378, %vm1379
    %v1381 = vsel %vm1380, %v1373, %v1377
    %v1382 = vand.u32 2147483647, %v1240
    %vm1383 = vcmp.eq.f32.partialorder %v1382, 8.507059e+37
    %v1384 = vand.u32 %v1240, 2147483648
    %v1385 = vor.u32 1.1754944e-38, %v1384
    %v1386 = vsel %vm1383, %v1385, %v1381
    %v1387 = vrcp.pop %v1241
    %v1388 = vmul.f32 %v1241, %v1387
    %v1389 = vsub.f32 1.0, %v1388
    %v1390 = vmul.f32 %v1387, %v1389
    %v1391 = vadd.f32 %v1387, %v1390
    %vm1392 = vweird.f32 %v1241
    %vm1393 = vweird.f32 %v1387
    %vm1394 = vmor %vm1392, %vm1393
    %v1395 = vsel %vm1394, %v1387, %v1391
    %v1396 = vand.u32 2147483647, %v1241
    %vm1397 = vcmp.eq.f32.partialorder %v1396, 8.507059e+37
    %v1398 = vand.u32 %v1241, 2147483648
    %v1399 = vor.u32 1.1754944e-38, %v1398
    %v1400 = vsel %vm1397, %v1399, %v1395
    %v1401 = vrcp.pop %v1242
    %v1402 = vmul.f32 %v1242, %v1401
    %v1403 = vsub.f32 1.0, %v1402
    %v1404 = vmul.f32 %v1401, %v1403
    %v1405 = vadd.f32 %v1401, %v1404
    %vm1406 = vweird.f32 %v1242
    %vm1407 = vweird.f32 %v1401
    %vm1408 = vmor %vm1406, %vm1407
    %v1409 = vsel %vm1408, %v1401, %v1405
    %v1410 = vand.u32 2147483647, %v1242
    %vm1411 = vcmp.eq.f32.partialorder %v1410, 8.507059e+37
    %v1412 = vand.u32 %v1242, 2147483648
    %v1413 = vor.u32 1.1754944e-38, %v1412
    %v1414 = vsel %vm1411, %v1413, %v1409
    %v1415 = vrcp.pop %v1243
    %v1416 = vmul.f32 %v1243, %v1415
    %v1417 = vsub.f32 1.0, %v1416
    %v1418 = vmul.f32 %v1415, %v1417
    %v1419 = vadd.f32 %v1415, %v1418
    %vm1420 = vweird.f32 %v1243
    %vm1421 = vweird.f32 %v1415
    %vm1422 = vmor %vm1420, %vm1421
    %v1423 = vsel %vm1422, %v1415, %v1419
    %v1424 = vand.u32 2147483647, %v1243
    %vm1425 = vcmp.eq.f32.partialorder %v1424, 8.507059e+37
    %v1426 = vand.u32 %v1243, 2147483648
    %v1427 = vor.u32 1.1754944e-38, %v1426
    %v1428 = vsel %vm1425, %v1427, %v1423
    %v1429 = vrcp.pop %v1244
    %v1430 = vmul.f32 %v1244, %v1429
    %v1431 = vsub.f32 1.0, %v1430
    %v1432 = vmul.f32 %v1429, %v1431
    %v1433 = vadd.f32 %v1429, %v1432
    %vm1434 = vweird.f32 %v1244
    %vm1435 = vweird.f32 %v1429
    %vm1436 = vmor %vm1434, %vm1435
    %v1437 = vsel %vm1436, %v1429, %v1433
    %v1438 = vand.u32 2147483647, %v1244
    %vm1439 = vcmp.eq.f32.partialorder %v1438, 8.507059e+37
    %v1440 = vand.u32 %v1244, 2147483648
    %v1441 = vor.u32 1.1754944e-38, %v1440
    %v1442 = vsel %vm1439, %v1441, %v1437
    %v1443 = vrcp.pop %v1245
    %v1444 = vmul.f32 %v1245, %v1443
    %v1445 = vsub.f32 1.0, %v1444
    %v1446 = vmul.f32 %v1443, %v1445
    %v1447 = vadd.f32 %v1443, %v1446
    %vm1448 = vweird.f32 %v1245
    %vm1449 = vweird.f32 %v1443
    %vm1450 = vmor %vm1448, %vm1449
    %v1451 = vsel %vm1450, %v1443, %v1447
    %v1452 = vand.u32 2147483647, %v1245
    %vm1453 = vcmp.eq.f32.partialorder %v1452, 8.507059e+37
    %v1454 = vand.u32 %v1245, 2147483648
    %v1455 = vor.u32 1.1754944e-38, %v1454
    %v1456 = vsel %vm1453, %v1455, %v1451
    %v1457 = vrcp.pop %v1246
    %v1458 = vmul.f32 %v1246, %v1457
    %v1459 = vsub.f32 1.0, %v1458
    %v1460 = vmul.f32 %v1457, %v1459
    %v1461 = vadd.f32 %v1457, %v1460
    %vm1462 = vweird.f32 %v1246
    %vm1463 = vweird.f32 %v1457
    %vm1464 = vmor %vm1462, %vm1463
    %v1465 = vsel %vm1464, %v1457, %v1461
    %v1466 = vand.u32 2147483647, %v1246
    %vm1467 = vcmp.eq.f32.partialorder %v1466, 8.507059e+37
    %v1468 = vand.u32 %v1246, 2147483648
    %v1469 = vor.u32 1.1754944e-38, %v1468
    %v1470 = vsel %vm1467, %v1469, %v1465
    %v1471 = vsel %vm1215, 1, 0
    %v1472 = vsel %vm1216, 1, 0
    %v1473 = vsel %vm1217, 1, 0
    %v1474 = vsel %vm1218, 1, 0
    %v1475 = vsel %vm1219, 1, 0
    %v1476 = vsel %vm1220, 1, 0
    %v1477 = vsel %vm1221, 1, 0
    %v1478 = vsel %vm1222, 1, 0
    %v1479 = vsel %vm1223, 1, 0
    %v1480 = vsel %vm1224, 1, 0
    %v1481 = vsel %vm1225, 1, 0
    %v1482 = vsel %vm1226, 1, 0
    %v1483 = vsel %vm1227, 1, 0
    %v1484 = vsel %vm1228, 1, 0
    %v1485 = vsel %vm1229, 1, 0
    %v1486 = vsel %vm1230, 1, 0
    %vm1487 = vcmp.eq.s32.totalorder %v1471, 1
    %vm1488 = vcmp.eq.s32.totalorder %v1472, 1
    %vm1489 = vcmp.eq.s32.totalorder %v1473, 1
    %vm1490 = vcmp.eq.s32.totalorder %v1474, 1
    %vm1491 = vcmp.eq.s32.totalorder %v1475, 1
    %vm1492 = vcmp.eq.s32.totalorder %v1476, 1
    %vm1493 = vcmp.eq.s32.totalorder %v1477, 1
    %vm1494 = vcmp.eq.s32.totalorder %v1478, 1
    %vm1495 = vcmp.eq.s32.totalorder %v1479, 1
    %vm1496 = vcmp.eq.s32.totalorder %v1480, 1
    %vm1497 = vcmp.eq.s32.totalorder %v1481, 1
    %vm1498 = vcmp.eq.s32.totalorder %v1482, 1
    %vm1499 = vcmp.eq.s32.totalorder %v1483, 1
    %vm1500 = vcmp.eq.s32.totalorder %v1484, 1
    %vm1501 = vcmp.eq.s32.totalorder %v1485, 1
    %vm1502 = vcmp.eq.s32.totalorder %v1486, 1
    %vm1503 = vmand %vm1102, %vm1487
    %vm1504 = vmand %vm1102, %vm1488
    %vm1505 = vmand %vm1102, %vm1489
    %vm1506 = vmand %vm1102, %vm1490
    %vm1507 = vmand %vm1102, %vm1491
    %vm1508 = vmand %vm1102, %vm1492
    %vm1509 = vmand %vm1102, %vm1493
    %vm1510 = vmand %vm1102, %vm1494
    %vm1511 = vmand %vm1102, %vm1495
    %vm1512 = vmand %vm1102, %vm1496
    %vm1513 = vmand %vm1102, %vm1497
    %vm1514 = vmand %vm1102, %vm1498
    %vm1515 = vmand %vm1102, %vm1499
    %vm1516 = vmand %vm1102, %vm1500
    %vm1517 = vmand %vm1102, %vm1501
    %vm1518 = vmand %vm1102, %vm1502
    %v1519 = vsub.f32 %v1053, %v1168
    %v1520 = vsub.f32 %v1056, %v1170
    %v1521 = vsub.f32 %v1059, %v1172
    %v1522 = vsub.f32 %v1062, %v1174
    %v1523 = vsub.f32 %v1065, %v1176
    %v1524 = vsub.f32 %v1068, %v1178
    %v1525 = vsub.f32 %v1071, %v1180
    %v1526 = vsub.f32 %v1074, %v1182
    %v1527 = vsub.f32 %v1077, %v1184
    %v1528 = vsub.f32 %v1080, %v1186
    %v1529 = vsub.f32 %v1083, %v1188
    %v1530 = vsub.f32 %v1086, %v1190
    %v1531 = vsub.f32 %v1089, %v1192
    %v1532 = vsub.f32 %v1092, %v1194
    %v1533 = vsub.f32 %v1095, %v1196
    %v1534 = vsub.f32 %v1098, %v1198
    %v1535 = vmul.f32 %v1519, %v1260
    %v1536 = vmul.f32 %v1520, %v1274
    %v1537 = vmul.f32 %v1521, %v1288
    %v1538 = vmul.f32 %v1522, %v1302
    %v1539 = vmul.f32 %v1523, %v1316
    %v1540 = vmul.f32 %v1524, %v1330
    %v1541 = vmul.f32 %v1525, %v1344
    %v1542 = vmul.f32 %v1526, %v1358
    %v1543 = vmul.f32 %v1527, %v1372
    %v1544 = vmul.f32 %v1528, %v1386
    %v1545 = vmul.f32 %v1529, %v1400
    %v1546 = vmul.f32 %v1530, %v1414
    %v1547 = vmul.f32 %v1531, %v1428
    %v1548 = vmul.f32 %v1532, %v1442
    %v1549 = vmul.f32 %v1533, %v1456
    %v1550 = vmul.f32 %v1534, %v1470
    %v1551 = vsel %vm1503, %v1535, 0.0
    %v1552 = vsel %vm1504, %v1536, 0.0
    %v1553 = vsel %vm1505, %v1537, 0.0
    %v1554 = vsel %vm1506, %v1538, 0.0
    %v1555 = vsel %vm1507, %v1539, 0.0
    %v1556 = vsel %vm1508, %v1540, 0.0
    %v1557 = vsel %vm1509, %v1541, 0.0
    %v1558 = vsel %vm1510, %v1542, 0.0
    %v1559 = vsel %vm1511, %v1543, 0.0
    %v1560 = vsel %vm1512, %v1544, 0.0
    %v1561 = vsel %vm1513, %v1545, 0.0
    %v1562 = vsel %vm1514, %v1546, 0.0
    %v1563 = vsel %vm1515, %v1547, 0.0
    %v1564 = vsel %vm1516, %v1548, 0.0
    %v1565 = vsel %vm1517, %v1549, 0.0
    %v1566 = vsel %vm1518, %v1550, 0.0
    %v1567 = vmul.f32 %v1551, %v1551
    %v1568 = vmul.f32 %v1552, %v1552
    %v1569 = vmul.f32 %v1553, %v1553
    %v1570 = vmul.f32 %v1554, %v1554
    %v1571 = vmul.f32 %v1555, %v1555
    %v1572 = vmul.f32 %v1556, %v1556
    %v1573 = vmul.f32 %v1557, %v1557
    %v1574 = vmul.f32 %v1558, %v1558
    %v1575 = vmul.f32 %v1559, %v1559
    %v1576 = vmul.f32 %v1560, %v1560
    %v1577 = vmul.f32 %v1561, %v1561
    %v1578 = vmul.f32 %v1562, %v1562
    %v1579 = vmul.f32 %v1563, %v1563
    %v1580 = vmul.f32 %v1564, %v1564
    %v1581 = vmul.f32 %v1565, %v1565
    %v1582 = vmul.f32 %v1566, %v1566
    %1583 = vadd.xlane.f32.xlu0 %v1567
    %v1584 = vpop.xlane.xlu0 %1583
    %1585 = vadd.xlane.f32.xlu0 %v1568
    %v1586 = vpop.xlane.xlu0 %1585
    %1587 = vadd.xlane.f32.xlu0 %v1569
    %v1588 = vpop.xlane.xlu0 %1587
    %1589 = vadd.xlane.f32.xlu0 %v1570
    %v1590 = vpop.xlane.xlu0 %1589
    %1591 = vadd.xlane.f32.xlu0 %v1571
    %v1592 = vpop.xlane.xlu0 %1591
    %1593 = vadd.xlane.f32.xlu0 %v1572
    %v1594 = vpop.xlane.xlu0 %1593
    %1595 = vadd.xlane.f32.xlu0 %v1573
    %v1596 = vpop.xlane.xlu0 %1595
    %1597 = vadd.xlane.f32.xlu0 %v1574
    %v1598 = vpop.xlane.xlu0 %1597
    %1599 = vadd.xlane.f32.xlu0 %v1575
    %v1600 = vpop.xlane.xlu0 %1599
    %1601 = vadd.xlane.f32.xlu0 %v1576
    %v1602 = vpop.xlane.xlu0 %1601
    %1603 = vadd.xlane.f32.xlu0 %v1577
    %v1604 = vpop.xlane.xlu0 %1603
    %1605 = vadd.xlane.f32.xlu0 %v1578
    %v1606 = vpop.xlane.xlu0 %1605
    %1607 = vadd.xlane.f32.xlu0 %v1579
    %v1608 = vpop.xlane.xlu0 %1607
    %1609 = vadd.xlane.f32.xlu0 %v1580
    %v1610 = vpop.xlane.xlu0 %1609
    %1611 = vadd.xlane.f32.xlu0 %v1581
    %v1612 = vpop.xlane.xlu0 %1611
    %1613 = vadd.xlane.f32.xlu0 %v1582
    %v1614 = vpop.xlane.xlu0 %1613
    %v1615 = vmax.f32 %v1584, 1e-24
    %v1616 = vmax.f32 %v1586, 1e-24
    %v1617 = vmax.f32 %v1588, 1e-24
    %v1618 = vmax.f32 %v1590, 1e-24
    %v1619 = vmax.f32 %v1592, 1e-24
    %v1620 = vmax.f32 %v1594, 1e-24
    %v1621 = vmax.f32 %v1596, 1e-24
    %v1622 = vmax.f32 %v1598, 1e-24
    %v1623 = vmax.f32 %v1600, 1e-24
    %v1624 = vmax.f32 %v1602, 1e-24
    %v1625 = vmax.f32 %v1604, 1e-24
    %v1626 = vmax.f32 %v1606, 1e-24
    %v1627 = vmax.f32 %v1608, 1e-24
    %v1628 = vmax.f32 %v1610, 1e-24
    %v1629 = vmax.f32 %v1612, 1e-24
    %v1630 = vmax.f32 %v1614, 1e-24
    %v1631 = vrsqrt.pop %v1615
    %v1632 = vmul.f32 %v1631, %v1615
    %v1633 = vmul.f32 %v1632, %v1631
    %v1634 = vmul.f32 0.5, %v1633
    %v1635 = vsub.f32 1.5, %v1634
    %v1636 = vmul.f32 %v1631, %v1635
    %vm1637 = vweird.f32 %v1615
    %vm1638 = vweird.f32 %v1631
    %vm1639 = vmor %vm1637, %vm1638
    %v1640 = vsel %vm1639, %v1631, %v1636
    %v1641 = vrsqrt.pop %v1616
    %v1642 = vmul.f32 %v1641, %v1616
    %v1643 = vmul.f32 %v1642, %v1641
    %v1644 = vmul.f32 0.5, %v1643
    %v1645 = vsub.f32 1.5, %v1644
    %v1646 = vmul.f32 %v1641, %v1645
    %vm1647 = vweird.f32 %v1616
    %vm1648 = vweird.f32 %v1641
    %vm1649 = vmor %vm1647, %vm1648
    %v1650 = vsel %vm1649, %v1641, %v1646
    %v1651 = vrsqrt.pop %v1617
    %v1652 = vmul.f32 %v1651, %v1617
    %v1653 = vmul.f32 %v1652, %v1651
    %v1654 = vmul.f32 0.5, %v1653
    %v1655 = vsub.f32 1.5, %v1654
    %v1656 = vmul.f32 %v1651, %v1655
    %vm1657 = vweird.f32 %v1617
    %vm1658 = vweird.f32 %v1651
    %vm1659 = vmor %vm1657, %vm1658
    %v1660 = vsel %vm1659, %v1651, %v1656
    %v1661 = vrsqrt.pop %v1618
    %v1662 = vmul.f32 %v1661, %v1618
    %v1663 = vmul.f32 %v1662, %v1661
    %v1664 = vmul.f32 0.5, %v1663
    %v1665 = vsub.f32 1.5, %v1664
    %v1666 = vmul.f32 %v1661, %v1665
    %vm1667 = vweird.f32 %v1618
    %vm1668 = vweird.f32 %v1661
    %vm1669 = vmor %vm1667, %vm1668
    %v1670 = vsel %vm1669, %v1661, %v1666
    %v1671 = vrsqrt.pop %v1619
    %v1672 = vmul.f32 %v1671, %v1619
    %v1673 = vmul.f32 %v1672, %v1671
    %v1674 = vmul.f32 0.5, %v1673
    %v1675 = vsub.f32 1.5, %v1674
    %v1676 = vmul.f32 %v1671, %v1675
    %vm1677 = vweird.f32 %v1619
    %vm1678 = vweird.f32 %v1671
    %vm1679 = vmor %vm1677, %vm1678
    %v1680 = vsel %vm1679, %v1671, %v1676
    %v1681 = vrsqrt.pop %v1620
    %v1682 = vmul.f32 %v1681, %v1620
    %v1683 = vmul.f32 %v1682, %v1681
    %v1684 = vmul.f32 0.5, %v1683
    %v1685 = vsub.f32 1.5, %v1684
    %v1686 = vmul.f32 %v1681, %v1685
    %vm1687 = vweird.f32 %v1620
    %vm1688 = vweird.f32 %v1681
    %vm1689 = vmor %vm1687, %vm1688
    %v1690 = vsel %vm1689, %v1681, %v1686
    %v1691 = vrsqrt.pop %v1621
    %v1692 = vmul.f32 %v1691, %v1621
    %v1693 = vmul.f32 %v1692, %v1691
    %v1694 = vmul.f32 0.5, %v1693
    %v1695 = vsub.f32 1.5, %v1694
    %v1696 = vmul.f32 %v1691, %v1695
    %vm1697 = vweird.f32 %v1621
    %vm1698 = vweird.f32 %v1691
    %vm1699 = vmor %vm1697, %vm1698
    %v1700 = vsel %vm1699, %v1691, %v1696
    %v1701 = vrsqrt.pop %v1622
    %v1702 = vmul.f32 %v1701, %v1622
    %v1703 = vmul.f32 %v1702, %v1701
    %v1704 = vmul.f32 0.5, %v1703
    %v1705 = vsub.f32 1.5, %v1704
    %v1706 = vmul.f32 %v1701, %v1705
    %vm1707 = vweird.f32 %v1622
    %vm1708 = vweird.f32 %v1701
    %vm1709 = vmor %vm1707, %vm1708
    %v1710 = vsel %vm1709, %v1701, %v1706
    %v1711 = vrsqrt.pop %v1623
    %v1712 = vmul.f32 %v1711, %v1623
    %v1713 = vmul.f32 %v1712, %v1711
    %v1714 = vmul.f32 0.5, %v1713
    %v1715 = vsub.f32 1.5, %v1714
    %v1716 = vmul.f32 %v1711, %v1715
    %vm1717 = vweird.f32 %v1623
    %vm1718 = vweird.f32 %v1711
    %vm1719 = vmor %vm1717, %vm1718
    %v1720 = vsel %vm1719, %v1711, %v1716
    %v1721 = vrsqrt.pop %v1624
    %v1722 = vmul.f32 %v1721, %v1624
    %v1723 = vmul.f32 %v1722, %v1721
    %v1724 = vmul.f32 0.5, %v1723
    %v1725 = vsub.f32 1.5, %v1724
    %v1726 = vmul.f32 %v1721, %v1725
    %vm1727 = vweird.f32 %v1624
    %vm1728 = vweird.f32 %v1721
    %vm1729 = vmor %vm1727, %vm1728
    %v1730 = vsel %vm1729, %v1721, %v1726
    %v1731 = vrsqrt.pop %v1625
    %v1732 = vmul.f32 %v1731, %v1625
    %v1733 = vmul.f32 %v1732, %v1731
    %v1734 = vmul.f32 0.5, %v1733
    %v1735 = vsub.f32 1.5, %v1734
    %v1736 = vmul.f32 %v1731, %v1735
    %vm1737 = vweird.f32 %v1625
    %vm1738 = vweird.f32 %v1731
    %vm1739 = vmor %vm1737, %vm1738
    %v1740 = vsel %vm1739, %v1731, %v1736
    %v1741 = vrsqrt.pop %v1626
    %v1742 = vmul.f32 %v1741, %v1626
    %v1743 = vmul.f32 %v1742, %v1741
    %v1744 = vmul.f32 0.5, %v1743
    %v1745 = vsub.f32 1.5, %v1744
    %v1746 = vmul.f32 %v1741, %v1745
    %vm1747 = vweird.f32 %v1626
    %vm1748 = vweird.f32 %v1741
    %vm1749 = vmor %vm1747, %vm1748
    %v1750 = vsel %vm1749, %v1741, %v1746
    %v1751 = vrsqrt.pop %v1627
    %v1752 = vmul.f32 %v1751, %v1627
    %v1753 = vmul.f32 %v1752, %v1751
    %v1754 = vmul.f32 0.5, %v1753
    %v1755 = vsub.f32 1.5, %v1754
    %v1756 = vmul.f32 %v1751, %v1755
    %vm1757 = vweird.f32 %v1627
    %vm1758 = vweird.f32 %v1751
    %vm1759 = vmor %vm1757, %vm1758
    %v1760 = vsel %vm1759, %v1751, %v1756
    %v1761 = vrsqrt.pop %v1628
    %v1762 = vmul.f32 %v1761, %v1628
    %v1763 = vmul.f32 %v1762, %v1761
    %v1764 = vmul.f32 0.5, %v1763
    %v1765 = vsub.f32 1.5, %v1764
    %v1766 = vmul.f32 %v1761, %v1765
    %vm1767 = vweird.f32 %v1628
    %vm1768 = vweird.f32 %v1761
    %vm1769 = vmor %vm1767, %vm1768
    %v1770 = vsel %vm1769, %v1761, %v1766
    %v1771 = vrsqrt.pop %v1629
    %v1772 = vmul.f32 %v1771, %v1629
    %v1773 = vmul.f32 %v1772, %v1771
    %v1774 = vmul.f32 0.5, %v1773
    %v1775 = vsub.f32 1.5, %v1774
    %v1776 = vmul.f32 %v1771, %v1775
    %vm1777 = vweird.f32 %v1629
    %vm1778 = vweird.f32 %v1771
    %vm1779 = vmor %vm1777, %vm1778
    %v1780 = vsel %vm1779, %v1771, %v1776
    %v1781 = vrsqrt.pop %v1630
    %v1782 = vmul.f32 %v1781, %v1630
    %v1783 = vmul.f32 %v1782, %v1781
    %v1784 = vmul.f32 0.5, %v1783
    %v1785 = vsub.f32 1.5, %v1784
    %v1786 = vmul.f32 %v1781, %v1785
    %vm1787 = vweird.f32 %v1630
    %vm1788 = vweird.f32 %v1781
    %vm1789 = vmor %vm1787, %vm1788
    %v1790 = vsel %vm1789, %v1781, %v1786
    %v1791 = vmul.f32 %v1551, %v1640
    %v1792 = vmul.f32 %v1552, %v1650
    %v1793 = vmul.f32 %v1553, %v1660
    %v1794 = vmul.f32 %v1554, %v1670
    %v1795 = vmul.f32 %v1555, %v1680
    %v1796 = vmul.f32 %v1556, %v1690
    %v1797 = vmul.f32 %v1557, %v1700
    %v1798 = vmul.f32 %v1558, %v1710
    %v1799 = vmul.f32 %v1559, %v1720
    %v1800 = vmul.f32 %v1560, %v1730
    %v1801 = vmul.f32 %v1561, %v1740
    %v1802 = vmul.f32 %v1562, %v1750
    %v1803 = vmul.f32 %v1563, %v1760
    %v1804 = vmul.f32 %v1564, %v1770
    %v1805 = vmul.f32 %v1565, %v1780
    %v1806 = vmul.f32 %v1566, %v1790
    %1807 = vst [vmem:[#allocation10] sm:$0xff] %v1791
    %1808 = vst [vmem:[#allocation10 + $0x8] sm:$0xff] %v1792
    %1809 = vst [vmem:[#allocation10 + $0x10] sm:$0xff] %v1793
    %1810 = vst [vmem:[#allocation10 + $0x18] sm:$0xff] %v1794
    %1811 = vst [vmem:[#allocation10 + $0x20] sm:$0xff] %v1795
    %1812 = vst [vmem:[#allocation10 + $0x28] sm:$0xff] %v1796
    %1813 = vst [vmem:[#allocation10 + $0x30] sm:$0xff] %v1797
    %1814 = vst [vmem:[#allocation10 + $0x38] sm:$0xff] %v1798
    %1815 = vst [vmem:[#allocation10 + $0x40] sm:$0xff] %v1799
    %1816 = vst [vmem:[#allocation10 + $0x48] sm:$0xff] %v1800
    %1817 = vst [vmem:[#allocation10 + $0x50] sm:$0xff] %v1801
    %1818 = vst [vmem:[#allocation10 + $0x58] sm:$0xff] %v1802
    %1819 = vst [vmem:[#allocation10 + $0x60] sm:$0xff] %v1803
    %1820 = vst [vmem:[#allocation10 + $0x68] sm:$0xff] %v1804
    %1821 = vst [vmem:[#allocation10 + $0x70] sm:$0xff] %v1805
    %1822 = vst [vmem:[#allocation10 + $0x78] sm:$0xff] %v1806
    %v1823 = vld [vmem:[%s1] sm:$0xff]
    %v1824 = vld [vmem:[%s1 + $0x8] sm:$0xff]
    %v1825 = vld [vmem:[%s1 + $0x10] sm:$0xff]
    %v1826 = vld [vmem:[%s1 + $0x18] sm:$0xff]
    %v1827 = vld [vmem:[%s1 + $0x20] sm:$0xff]
    %v1828 = vld [vmem:[%s1 + $0x28] sm:$0xff]
    %v1829 = vld [vmem:[%s1 + $0x30] sm:$0xff]
    %v1830 = vld [vmem:[%s1 + $0x38] sm:$0xff]
    %v1831 = vld [vmem:[%s1 + $0x40] sm:$0xff]
    %v1832 = vld [vmem:[%s1 + $0x48] sm:$0xff]
    %v1833 = vld [vmem:[%s1 + $0x50] sm:$0xff]
    %v1834 = vld [vmem:[%s1 + $0x58] sm:$0xff]
    %v1835 = vld [vmem:[%s1 + $0x60] sm:$0xff]
    %v1836 = vld [vmem:[%s1 + $0x68] sm:$0xff]
    %v1837 = vld [vmem:[%s1 + $0x70] sm:$0xff]
    %v1838 = vld [vmem:[%s1 + $0x78] sm:$0xff]
    %1839 = vmatpush.msra.mxu0 %v1806
    %1840 = vmatpush.msra.mxu0 %v1805
    %1841 = vmatpush.msra.mxu0 %v1804
    %1842 = vmatpush.msra.mxu0 %v1803
    %1843 = vmatpush.msra.mxu0 %v1802
    %1844 = vmatpush.msra.mxu0 %v1801
    %1845 = vmatpush.msra.mxu0 %v1800
    %1846 = vmatpush.msra.mxu0 %v1799
    %1847 = vmatpush.msra.mxu0 %v1798
    %1848 = vmatpush.msra.mxu0 %v1797
    %1849 = vmatpush.msra.mxu0 %v1796
    %1850 = vmatpush.msra.mxu0 %v1795
    %1851 = vmatpush.msra.mxu0 %v1794
    %1852 = vmatpush.msra.mxu0 %v1793
    %1853 = vmatpush.msra.mxu0 %v1792
    %1854 = vmatpush.msra.mxu0 %v1791
    %1855 = vmatmul.f32.gmra.mxu0 %v1823
    %v1856 = vpop.f32.mrf.mxu0
    %v1857 = vadd.f32 0.0, %v1856
    %1858 = vmatmul.f32.gmra.mxu0 %v1824
    %v1859 = vpop.f32.mrf.mxu0
    %v1860 = vadd.f32 0.0, %v1859
    %1861 = vmatmul.f32.gmra.mxu0 %v1825
    %v1862 = vpop.f32.mrf.mxu0
    %v1863 = vadd.f32 0.0, %v1862
    %1864 = vmatmul.f32.gmra.mxu0 %v1826
    %v1865 = vpop.f32.mrf.mxu0
    %v1866 = vadd.f32 0.0, %v1865
    %1867 = vmatmul.f32.gmra.mxu0 %v1827
    %v1868 = vpop.f32.mrf.mxu0
    %v1869 = vadd.f32 0.0, %v1868
    %1870 = vmatmul.f32.gmra.mxu0 %v1828
    %v1871 = vpop.f32.mrf.mxu0
    %v1872 = vadd.f32 0.0, %v1871
    %1873 = vmatmul.f32.gmra.mxu0 %v1829
    %v1874 = vpop.f32.mrf.mxu0
    %v1875 = vadd.f32 0.0, %v1874
    %1876 = vmatmul.f32.gmra.mxu0 %v1830
    %v1877 = vpop.f32.mrf.mxu0
    %v1878 = vadd.f32 0.0, %v1877
    %1879 = vmatmul.f32.gmra.mxu0 %v1831
    %v1880 = vpop.f32.mrf.mxu0
    %v1881 = vadd.f32 0.0, %v1880
    %1882 = vmatmul.f32.gmra.mxu0 %v1832
    %v1883 = vpop.f32.mrf.mxu0
    %v1884 = vadd.f32 0.0, %v1883
    %1885 = vmatmul.f32.gmra.mxu0 %v1833
    %v1886 = vpop.f32.mrf.mxu0
    %v1887 = vadd.f32 0.0, %v1886
    %1888 = vmatmul.f32.gmra.mxu0 %v1834
    %v1889 = vpop.f32.mrf.mxu0
    %v1890 = vadd.f32 0.0, %v1889
    %1891 = vmatmul.f32.gmra.mxu0 %v1835
    %v1892 = vpop.f32.mrf.mxu0
    %v1893 = vadd.f32 0.0, %v1892
    %1894 = vmatmul.f32.gmra.mxu0 %v1836
    %v1895 = vpop.f32.mrf.mxu0
    %v1896 = vadd.f32 0.0, %v1895
    %1897 = vmatmul.f32.gmra.mxu0 %v1837
    %v1898 = vpop.f32.mrf.mxu0
    %v1899 = vadd.f32 0.0, %v1898
    %1900 = vmatmul.f32.gmra.mxu0 %v1838
    %v1901 = vpop.f32.mrf.mxu0
    %v1902 = vadd.f32 0.0, %v1901
    %1903 = vdwg.mxu0
    %v1904 = vld [vmem:[%s199] sm:$0xff]
    %v1905 = vld [vmem:[%s199 + $0x8] sm:$0xff]
    %v1906 = vld [vmem:[%s199 + $0x10] sm:$0xff]
    %v1907 = vld [vmem:[%s199 + $0x18] sm:$0xff]
    %v1908 = vld [vmem:[%s199 + $0x20] sm:$0xff]
    %v1909 = vld [vmem:[%s199 + $0x28] sm:$0xff]
    %v1910 = vld [vmem:[%s199 + $0x30] sm:$0xff]
    %v1911 = vld [vmem:[%s199 + $0x38] sm:$0xff]
    %v1912 = vld [vmem:[%s199 + $0x40] sm:$0xff]
    %v1913 = vld [vmem:[%s199 + $0x48] sm:$0xff]
    %v1914 = vld [vmem:[%s199 + $0x50] sm:$0xff]
    %v1915 = vld [vmem:[%s199 + $0x58] sm:$0xff]
    %v1916 = vld [vmem:[%s199 + $0x60] sm:$0xff]
    %v1917 = vld [vmem:[%s199 + $0x68] sm:$0xff]
    %v1918 = vld [vmem:[%s199 + $0x70] sm:$0xff]
    %v1919 = vld [vmem:[%s199 + $0x78] sm:$0xff]
    %1920 = vmatpush.msra.mxu0 %v1806
    %1921 = vmatpush.msra.mxu0 %v1805
    %1922 = vmatpush.msra.mxu0 %v1804
    %1923 = vmatpush.msra.mxu0 %v1803
    %1924 = vmatpush.msra.mxu0 %v1802
    %1925 = vmatpush.msra.mxu0 %v1801
    %1926 = vmatpush.msra.mxu0 %v1800
    %1927 = vmatpush.msra.mxu0 %v1799
    %1928 = vmatpush.msra.mxu0 %v1798
    %1929 = vmatpush.msra.mxu0 %v1797
    %1930 = vmatpush.msra.mxu0 %v1796
    %1931 = vmatpush.msra.mxu0 %v1795
    %1932 = vmatpush.msra.mxu0 %v1794
    %1933 = vmatpush.msra.mxu0 %v1793
    %1934 = vmatpush.msra.mxu0 %v1792
    %1935 = vmatpush.msra.mxu0 %v1791
    %1936 = vmatmul.f32.gmra.mxu0 %v1904
    %v1937 = vpop.f32.mrf.mxu0
    %v1938 = vadd.f32 0.0, %v1937
    %1939 = vmatmul.f32.gmra.mxu0 %v1905
    %v1940 = vpop.f32.mrf.mxu0
    %v1941 = vadd.f32 0.0, %v1940
    %1942 = vmatmul.f32.gmra.mxu0 %v1906
    %v1943 = vpop.f32.mrf.mxu0
    %v1944 = vadd.f32 0.0, %v1943
    %1945 = vmatmul.f32.gmra.mxu0 %v1907
    %v1946 = vpop.f32.mrf.mxu0
    %v1947 = vadd.f32 0.0, %v1946
    %1948 = vmatmul.f32.gmra.mxu0 %v1908
    %v1949 = vpop.f32.mrf.mxu0
    %v1950 = vadd.f32 0.0, %v1949
    %1951 = vmatmul.f32.gmra.mxu0 %v1909
    %v1952 = vpop.f32.mrf.mxu0
    %v1953 = vadd.f32 0.0, %v1952
    %1954 = vmatmul.f32.gmra.mxu0 %v1910
    %v1955 = vpop.f32.mrf.mxu0
    %v1956 = vadd.f32 0.0, %v1955
    %1957 = vmatmul.f32.gmra.mxu0 %v1911
    %v1958 = vpop.f32.mrf.mxu0
    %v1959 = vadd.f32 0.0, %v1958
    %1960 = vmatmul.f32.gmra.mxu0 %v1912
    %v1961 = vpop.f32.mrf.mxu0
    %v1962 = vadd.f32 0.0, %v1961
    %1963 = vmatmul.f32.gmra.mxu0 %v1913
    %v1964 = vpop.f32.mrf.mxu0
    %v1965 = vadd.f32 0.0, %v1964
    %1966 = vmatmul.f32.gmra.mxu0 %v1914
    %v1967 = vpop.f32.mrf.mxu0
    %v1968 = vadd.f32 0.0, %v1967
    %1969 = vmatmul.f32.gmra.mxu0 %v1915
    %v1970 = vpop.f32.mrf.mxu0
    %v1971 = vadd.f32 0.0, %v1970
    %1972 = vmatmul.f32.gmra.mxu0 %v1916
    %v1973 = vpop.f32.mrf.mxu0
    %v1974 = vadd.f32 0.0, %v1973
    %1975 = vmatmul.f32.gmra.mxu0 %v1917
    %v1976 = vpop.f32.mrf.mxu0
    %v1977 = vadd.f32 0.0, %v1976
    %1978 = vmatmul.f32.gmra.mxu0 %v1918
    %v1979 = vpop.f32.mrf.mxu0
    %v1980 = vadd.f32 0.0, %v1979
    %1981 = vmatmul.f32.gmra.mxu0 %v1919
    %v1982 = vpop.f32.mrf.mxu0
    %v1983 = vadd.f32 0.0, %v1982
    %1984 = vdwg.mxu0
    %v1985 = vld [vmem:[%s281] sm:$0xff]
    %v1986 = vld [vmem:[%s281 + $0x8] sm:$0xff]
    %v1987 = vld [vmem:[%s281 + $0x10] sm:$0xff]
    %v1988 = vld [vmem:[%s281 + $0x18] sm:$0xff]
    %v1989 = vld [vmem:[%s281 + $0x20] sm:$0xff]
    %v1990 = vld [vmem:[%s281 + $0x28] sm:$0xff]
    %v1991 = vld [vmem:[%s281 + $0x30] sm:$0xff]
    %v1992 = vld [vmem:[%s281 + $0x38] sm:$0xff]
    %v1993 = vld [vmem:[%s281 + $0x40] sm:$0xff]
    %v1994 = vld [vmem:[%s281 + $0x48] sm:$0xff]
    %v1995 = vld [vmem:[%s281 + $0x50] sm:$0xff]
    %v1996 = vld [vmem:[%s281 + $0x58] sm:$0xff]
    %v1997 = vld [vmem:[%s281 + $0x60] sm:$0xff]
    %v1998 = vld [vmem:[%s281 + $0x68] sm:$0xff]
    %v1999 = vld [vmem:[%s281 + $0x70] sm:$0xff]
    %v2000 = vld [vmem:[%s281 + $0x78] sm:$0xff]
    %2001 = vmatpush.msra.mxu0 %v1806
    %2002 = vmatpush.msra.mxu0 %v1805
    %2003 = vmatpush.msra.mxu0 %v1804
    %2004 = vmatpush.msra.mxu0 %v1803
    %2005 = vmatpush.msra.mxu0 %v1802
    %2006 = vmatpush.msra.mxu0 %v1801
    %2007 = vmatpush.msra.mxu0 %v1800
    %2008 = vmatpush.msra.mxu0 %v1799
    %2009 = vmatpush.msra.mxu0 %v1798
    %2010 = vmatpush.msra.mxu0 %v1797
    %2011 = vmatpush.msra.mxu0 %v1796
    %2012 = vmatpush.msra.mxu0 %v1795
    %2013 = vmatpush.msra.mxu0 %v1794
    %2014 = vmatpush.msra.mxu0 %v1793
    %2015 = vmatpush.msra.mxu0 %v1792
    %2016 = vmatpush.msra.mxu0 %v1791
    %2017 = vmatmul.f32.gmra.mxu0 %v1985
    %v2018 = vpop.f32.mrf.mxu0
    %v2019 = vadd.f32 0.0, %v2018
    %2020 = vmatmul.f32.gmra.mxu0 %v1986
    %v2021 = vpop.f32.mrf.mxu0
    %v2022 = vadd.f32 0.0, %v2021
    %2023 = vmatmul.f32.gmra.mxu0 %v1987
    %v2024 = vpop.f32.mrf.mxu0
    %v2025 = vadd.f32 0.0, %v2024
    %2026 = vmatmul.f32.gmra.mxu0 %v1988
    %v2027 = vpop.f32.mrf.mxu0
    %v2028 = vadd.f32 0.0, %v2027
    %2029 = vmatmul.f32.gmra.mxu0 %v1989
    %v2030 = vpop.f32.mrf.mxu0
    %v2031 = vadd.f32 0.0, %v2030
    %2032 = vmatmul.f32.gmra.mxu0 %v1990
    %v2033 = vpop.f32.mrf.mxu0
    %v2034 = vadd.f32 0.0, %v2033
    %2035 = vmatmul.f32.gmra.mxu0 %v1991
    %v2036 = vpop.f32.mrf.mxu0
    %v2037 = vadd.f32 0.0, %v2036
    %2038 = vmatmul.f32.gmra.mxu0 %v1992
    %v2039 = vpop.f32.mrf.mxu0
    %v2040 = vadd.f32 0.0, %v2039
    %2041 = vmatmul.f32.gmra.mxu0 %v1993
    %v2042 = vpop.f32.mrf.mxu0
    %v2043 = vadd.f32 0.0, %v2042
    %2044 = vmatmul.f32.gmra.mxu0 %v1994
    %v2045 = vpop.f32.mrf.mxu0
    %v2046 = vadd.f32 0.0, %v2045
    %2047 = vmatmul.f32.gmra.mxu0 %v1995
    %v2048 = vpop.f32.mrf.mxu0
    %v2049 = vadd.f32 0.0, %v2048
    %2050 = vmatmul.f32.gmra.mxu0 %v1996
    %v2051 = vpop.f32.mrf.mxu0
    %v2052 = vadd.f32 0.0, %v2051
    %2053 = vmatmul.f32.gmra.mxu0 %v1997
    %v2054 = vpop.f32.mrf.mxu0
    %v2055 = vadd.f32 0.0, %v2054
    %2056 = vmatmul.f32.gmra.mxu0 %v1998
    %v2057 = vpop.f32.mrf.mxu0
    %v2058 = vadd.f32 0.0, %v2057
    %2059 = vmatmul.f32.gmra.mxu0 %v1999
    %v2060 = vpop.f32.mrf.mxu0
    %v2061 = vadd.f32 0.0, %v2060
    %2062 = vmatmul.f32.gmra.mxu0 %v2000
    %v2063 = vpop.f32.mrf.mxu0
    %v2064 = vadd.f32 0.0, %v2063
    %2065 = vdwg.mxu0
    %v2066 = vld [vmem:[#allocation7] sm:$0xff]
    %v2067 = vld [vmem:[#allocation7 + $0x8] sm:$0xff]
    %v2068 = vld [vmem:[#allocation7 + $0x10] sm:$0xff]
    %v2069 = vld [vmem:[#allocation7 + $0x18] sm:$0xff]
    %v2070 = vld [vmem:[#allocation7 + $0x20] sm:$0xff]
    %v2071 = vld [vmem:[#allocation7 + $0x28] sm:$0xff]
    %v2072 = vld [vmem:[#allocation7 + $0x30] sm:$0xff]
    %v2073 = vld [vmem:[#allocation7 + $0x38] sm:$0xff]
    %v2074 = vld [vmem:[#allocation7 + $0x40] sm:$0xff]
    %v2075 = vld [vmem:[#allocation7 + $0x48] sm:$0xff]
    %v2076 = vld [vmem:[#allocation7 + $0x50] sm:$0xff]
    %v2077 = vld [vmem:[#allocation7 + $0x58] sm:$0xff]
    %v2078 = vld [vmem:[#allocation7 + $0x60] sm:$0xff]
    %v2079 = vld [vmem:[#allocation7 + $0x68] sm:$0xff]
    %v2080 = vld [vmem:[#allocation7 + $0x70] sm:$0xff]
    %v2081 = vld [vmem:[#allocation7 + $0x78] sm:$0xff]
    %v2082 = vld [vmem:[#allocation7 + $0x80] sm:$0xff]
    %v2083 = vld [vmem:[#allocation7 + $0x88] sm:$0xff]
    %v2084 = vld [vmem:[#allocation7 + $0x90] sm:$0xff]
    %v2085 = vld [vmem:[#allocation7 + $0x98] sm:$0xff]
    %v2086 = vld [vmem:[#allocation7 + $0xa0] sm:$0xff]
    %v2087 = vld [vmem:[#allocation7 + $0xa8] sm:$0xff]
    %v2088 = vld [vmem:[#allocation7 + $0xb0] sm:$0xff]
    %v2089 = vld [vmem:[#allocation7 + $0xb8] sm:$0xff]
    %v2090 = vld [vmem:[#allocation7 + $0xc0] sm:$0xff]
    %v2091 = vld [vmem:[#allocation7 + $0xc8] sm:$0xff]
    %v2092 = vld [vmem:[#allocation7 + $0xd0] sm:$0xff]
    %v2093 = vld [vmem:[#allocation7 + $0xd8] sm:$0xff]
    %v2094 = vld [vmem:[#allocation7 + $0xe0] sm:$0xff]
    %v2095 = vld [vmem:[#allocation7 + $0xe8] sm:$0xff]
    %v2096 = vld [vmem:[#allocation7 + $0xf0] sm:$0xff]
    %v2097 = vld [vmem:[#allocation7 + $0xf8] sm:$0xff]
    %v2098 = vld [vmem:[#allocation7 + $0x100] sm:$0xff]
    %v2099 = vld [vmem:[#allocation7 + $0x108] sm:$0xff]
    %v2100 = vld [vmem:[#allocation7 + $0x110] sm:$0xff]
    %v2101 = vld [vmem:[#allocation7 + $0x118] sm:$0xff]
    %v2102 = vld [vmem:[#allocation7 + $0x120] sm:$0xff]
    %v2103 = vld [vmem:[#allocation7 + $0x128] sm:$0xff]
    %v2104 = vld [vmem:[#allocation7 + $0x130] sm:$0xff]
    %v2105 = vld [vmem:[#allocation7 + $0x138] sm:$0xff]
    %v2106 = vld [vmem:[#allocation7 + $0x140] sm:$0xff]
    %v2107 = vld [vmem:[#allocation7 + $0x148] sm:$0xff]
    %v2108 = vld [vmem:[#allocation7 + $0x150] sm:$0xff]
    %v2109 = vld [vmem:[#allocation7 + $0x158] sm:$0xff]
    %v2110 = vld [vmem:[#allocation7 + $0x160] sm:$0xff]
    %v2111 = vld [vmem:[#allocation7 + $0x168] sm:$0xff]
    %v2112 = vld [vmem:[#allocation7 + $0x170] sm:$0xff]
    %v2113 = vld [vmem:[#allocation7 + $0x178] sm:$0xff]
    %v2114 = vld [vmem:[%s7] sm:$0x1]
    %v2116 = vperm.slane %v2114, 0
    %2118 = vmatpush.msra.mxu0 %v2081
    %2119 = vmatpush.msra.mxu0 %v2080
    %2120 = vmatpush.msra.mxu0 %v2079
    %2121 = vmatpush.msra.mxu0 %v2078
    %2122 = vmatpush.msra.mxu0 %v2077
    %2123 = vmatpush.msra.mxu0 %v2076
    %2124 = vmatpush.msra.mxu0 %v2075
    %2125 = vmatpush.msra.mxu0 %v2074
    %2126 = vmatpush.msra.mxu0 %v2073
    %2127 = vmatpush.msra.mxu0 %v2072
    %2128 = vmatpush.msra.mxu0 %v2071
    %2129 = vmatpush.msra.mxu0 %v2070
    %2130 = vmatpush.msra.mxu0 %v2069
    %2131 = vmatpush.msra.mxu0 %v2068
    %2132 = vmatpush.msra.mxu0 %v2067
    %2133 = vmatpush.msra.mxu0 %v2066
    %2134 = vmatmul.f32.gmra.mxu0 %v1857
    %v2135 = vpop.f32.mrf.mxu0
    %v2136 = vadd.f32 %v2116, %v2135
    %2137 = vmatmul.f32.gmra.mxu0 %v1860
    %v2138 = vpop.f32.mrf.mxu0
    %v2139 = vadd.f32 %v2116, %v2138
    %2140 = vmatmul.f32.gmra.mxu0 %v1863
    %v2141 = vpop.f32.mrf.mxu0
    %v2142 = vadd.f32 %v2116, %v2141
    %2143 = vmatmul.f32.gmra.mxu0 %v1866
    %v2144 = vpop.f32.mrf.mxu0
    %v2145 = vadd.f32 %v2116, %v2144
    %2146 = vmatmul.f32.gmra.mxu0 %v1869
    %v2147 = vpop.f32.mrf.mxu0
    %v2148 = vadd.f32 %v2116, %v2147
    %2149 = vmatmul.f32.gmra.mxu0 %v1872
    %v2150 = vpop.f32.mrf.mxu0
    %v2151 = vadd.f32 %v2116, %v2150
    %2152 = vmatmul.f32.gmra.mxu0 %v1875
    %v2153 = vpop.f32.mrf.mxu0
    %v2154 = vadd.f32 %v2116, %v2153
    %2155 = vmatmul.f32.gmra.mxu0 %v1878
    %v2156 = vpop.f32.mrf.mxu0
    %v2157 = vadd.f32 %v2116, %v2156
    %2158 = vmatmul.f32.gmra.mxu0 %v1881
    %v2159 = vpop.f32.mrf.mxu0
    %v2160 = vadd.f32 %v2116, %v2159
    %2161 = vmatmul.f32.gmra.mxu0 %v1884
    %v2162 = vpop.f32.mrf.mxu0
    %v2163 = vadd.f32 %v2116, %v2162
    %2164 = vmatmul.f32.gmra.mxu0 %v1887
    %v2165 = vpop.f32.mrf.mxu0
    %v2166 = vadd.f32 %v2116, %v2165
    %2167 = vmatmul.f32.gmra.mxu0 %v1890
    %v2168 = vpop.f32.mrf.mxu0
    %v2169 = vadd.f32 %v2116, %v2168
    %2170 = vmatmul.f32.gmra.mxu0 %v1893
    %v2171 = vpop.f32.mrf.mxu0
    %v2172 = vadd.f32 %v2116, %v2171
    %2173 = vmatmul.f32.gmra.mxu0 %v1896
    %v2174 = vpop.f32.mrf.mxu0
    %v2175 = vadd.f32 %v2116, %v2174
    %2176 = vmatmul.f32.gmra.mxu0 %v1899
    %v2177 = vpop.f32.mrf.mxu0
    %v2178 = vadd.f32 %v2116, %v2177
    %2179 = vmatmul.f32.gmra.mxu0 %v1902
    %v2180 = vpop.f32.mrf.mxu0
    %v2181 = vadd.f32 %v2116, %v2180
    %2182 = vdwg.mxu0
    %2183 = vmatpush.msra.mxu0 %v2097
    %2184 = vmatpush.msra.mxu0 %v2096
    %2185 = vmatpush.msra.mxu0 %v2095
    %2186 = vmatpush.msra.mxu0 %v2094
    %2187 = vmatpush.msra.mxu0 %v2093
    %2188 = vmatpush.msra.mxu0 %v2092
    %2189 = vmatpush.msra.mxu0 %v2091
    %2190 = vmatpush.msra.mxu0 %v2090
    %2191 = vmatpush.msra.mxu0 %v2089
    %2192 = vmatpush.msra.mxu0 %v2088
    %2193 = vmatpush.msra.mxu0 %v2087
    %2194 = vmatpush.msra.mxu0 %v2086
    %2195 = vmatpush.msra.mxu0 %v2085
    %2196 = vmatpush.msra.mxu0 %v2084
    %2197 = vmatpush.msra.mxu0 %v2083
    %2198 = vmatpush.msra.mxu0 %v2082
    %2199 = vmatmul.f32.gmra.mxu0 %v1938
    %v2200 = vpop.f32.mrf.mxu0
    %v2201 = vadd.f32 %v2136, %v2200
    %2202 = vmatmul.f32.gmra.mxu0 %v1941
    %v2203 = vpop.f32.mrf.mxu0
    %v2204 = vadd.f32 %v2139, %v2203
    %2205 = vmatmul.f32.gmra.mxu0 %v1944
    %v2206 = vpop.f32.mrf.mxu0
    %v2207 = vadd.f32 %v2142, %v2206
    %2208 = vmatmul.f32.gmra.mxu0 %v1947
    %v2209 = vpop.f32.mrf.mxu0
    %v2210 = vadd.f32 %v2145, %v2209
    %2211 = vmatmul.f32.gmra.mxu0 %v1950
    %v2212 = vpop.f32.mrf.mxu0
    %v2213 = vadd.f32 %v2148, %v2212
    %2214 = vmatmul.f32.gmra.mxu0 %v1953
    %v2215 = vpop.f32.mrf.mxu0
    %v2216 = vadd.f32 %v2151, %v2215
    %2217 = vmatmul.f32.gmra.mxu0 %v1956
    %v2218 = vpop.f32.mrf.mxu0
    %v2219 = vadd.f32 %v2154, %v2218
    %2220 = vmatmul.f32.gmra.mxu0 %v1959
    %v2221 = vpop.f32.mrf.mxu0
    %v2222 = vadd.f32 %v2157, %v2221
    %2223 = vmatmul.f32.gmra.mxu0 %v1962
    %v2224 = vpop.f32.mrf.mxu0
    %v2225 = vadd.f32 %v2160, %v2224
    %2226 = vmatmul.f32.gmra.mxu0 %v1965
    %v2227 = vpop.f32.mrf.mxu0
    %v2228 = vadd.f32 %v2163, %v2227
    %2229 = vmatmul.f32.gmra.mxu0 %v1968
    %v2230 = vpop.f32.mrf.mxu0
    %v2231 = vadd.f32 %v2166, %v2230
    %2232 = vmatmul.f32.gmra.mxu0 %v1971
    %v2233 = vpop.f32.mrf.mxu0
    %v2234 = vadd.f32 %v2169, %v2233
    %2235 = vmatmul.f32.gmra.mxu0 %v1974
    %v2236 = vpop.f32.mrf.mxu0
    %v2237 = vadd.f32 %v2172, %v2236
    %2238 = vmatmul.f32.gmra.mxu0 %v1977
    %v2239 = vpop.f32.mrf.mxu0
    %v2240 = vadd.f32 %v2175, %v2239
    %2241 = vmatmul.f32.gmra.mxu0 %v1980
    %v2242 = vpop.f32.mrf.mxu0
    %v2243 = vadd.f32 %v2178, %v2242
    %2244 = vmatmul.f32.gmra.mxu0 %v1983
    %v2245 = vpop.f32.mrf.mxu0
    %v2246 = vadd.f32 %v2181, %v2245
    %2247 = vdwg.mxu0
    %2248 = vmatpush.msra.mxu0 %v2113
    %2249 = vmatpush.msra.mxu0 %v2112
    %2250 = vmatpush.msra.mxu0 %v2111
    %2251 = vmatpush.msra.mxu0 %v2110
    %2252 = vmatpush.msra.mxu0 %v2109
    %2253 = vmatpush.msra.mxu0 %v2108
    %2254 = vmatpush.msra.mxu0 %v2107
    %2255 = vmatpush.msra.mxu0 %v2106
    %2256 = vmatpush.msra.mxu0 %v2105
    %2257 = vmatpush.msra.mxu0 %v2104
    %2258 = vmatpush.msra.mxu0 %v2103
    %2259 = vmatpush.msra.mxu0 %v2102
    %2260 = vmatpush.msra.mxu0 %v2101
    %2261 = vmatpush.msra.mxu0 %v2100
    %2262 = vmatpush.msra.mxu0 %v2099
    %2263 = vmatpush.msra.mxu0 %v2098
    %2264 = vmatmul.f32.gmra.mxu0 %v2019
    %v2265 = vpop.f32.mrf.mxu0
    %v2266 = vadd.f32 %v2201, %v2265
    %2267 = vmatmul.f32.gmra.mxu0 %v2022
    %v2268 = vpop.f32.mrf.mxu0
    %v2269 = vadd.f32 %v2204, %v2268
    %2270 = vmatmul.f32.gmra.mxu0 %v2025
    %v2271 = vpop.f32.mrf.mxu0
    %v2272 = vadd.f32 %v2207, %v2271
    %2273 = vmatmul.f32.gmra.mxu0 %v2028
    %v2274 = vpop.f32.mrf.mxu0
    %v2275 = vadd.f32 %v2210, %v2274
    %2276 = vmatmul.f32.gmra.mxu0 %v2031
    %v2277 = vpop.f32.mrf.mxu0
    %v2278 = vadd.f32 %v2213, %v2277
    %2279 = vmatmul.f32.gmra.mxu0 %v2034
    %v2280 = vpop.f32.mrf.mxu0
    %v2281 = vadd.f32 %v2216, %v2280
    %2282 = vmatmul.f32.gmra.mxu0 %v2037
    %v2283 = vpop.f32.mrf.mxu0
    %v2284 = vadd.f32 %v2219, %v2283
    %2285 = vmatmul.f32.gmra.mxu0 %v2040
    %v2286 = vpop.f32.mrf.mxu0
    %v2287 = vadd.f32 %v2222, %v2286
    %2288 = vmatmul.f32.gmra.mxu0 %v2043
    %v2289 = vpop.f32.mrf.mxu0
    %v2290 = vadd.f32 %v2225, %v2289
    %2291 = vmatmul.f32.gmra.mxu0 %v2046
    %v2292 = vpop.f32.mrf.mxu0
    %v2293 = vadd.f32 %v2228, %v2292
    %2294 = vmatmul.f32.gmra.mxu0 %v2049
    %v2295 = vpop.f32.mrf.mxu0
    %v2296 = vadd.f32 %v2231, %v2295
    %2297 = vmatmul.f32.gmra.mxu0 %v2052
    %v2298 = vpop.f32.mrf.mxu0
    %v2299 = vadd.f32 %v2234, %v2298
    %2300 = vmatmul.f32.gmra.mxu0 %v2055
    %v2301 = vpop.f32.mrf.mxu0
    %v2302 = vadd.f32 %v2237, %v2301
    %2303 = vmatmul.f32.gmra.mxu0 %v2058
    %v2304 = vpop.f32.mrf.mxu0
    %v2305 = vadd.f32 %v2240, %v2304
    %2306 = vmatmul.f32.gmra.mxu0 %v2061
    %v2307 = vpop.f32.mrf.mxu0
    %v2308 = vadd.f32 %v2243, %v2307
    %2309 = vmatmul.f32.gmra.mxu0 %v2064
    %v2310 = vpop.f32.mrf.mxu0
    %v2311 = vadd.f32 %v2246, %v2310
    %2312 = vdwg.mxu0
    %vm2313 = vcmp.gt.f32.partialorder %v2266, 0.0
    %vm2314 = vcmp.gt.f32.partialorder %v2269, 0.0
    %vm2315 = vcmp.gt.f32.partialorder %v2272, 0.0
    %vm2316 = vcmp.gt.f32.partialorder %v2275, 0.0
    %vm2317 = vcmp.gt.f32.partialorder %v2278, 0.0
    %vm2318 = vcmp.gt.f32.partialorder %v2281, 0.0
    %vm2319 = vcmp.gt.f32.partialorder %v2284, 0.0
    %vm2320 = vcmp.gt.f32.partialorder %v2287, 0.0
    %vm2321 = vcmp.gt.f32.partialorder %v2290, 0.0
    %vm2322 = vcmp.gt.f32.partialorder %v2293, 0.0
    %vm2323 = vcmp.gt.f32.partialorder %v2296, 0.0
    %vm2324 = vcmp.gt.f32.partialorder %v2299, 0.0
    %vm2325 = vcmp.gt.f32.partialorder %v2302, 0.0
    %vm2326 = vcmp.gt.f32.partialorder %v2305, 0.0
    %vm2327 = vcmp.gt.f32.partialorder %v2308, 0.0
    %vm2328 = vcmp.gt.f32.partialorder %v2311, 0.0
    %v2329 = vmul.f32 %v2266, 0.01
    %v2330 = vmul.f32 %v2269, 0.01
    %v2331 = vmul.f32 %v2272, 0.01
    %v2332 = vmul.f32 %v2275, 0.01
    %v2333 = vmul.f32 %v2278, 0.01
    %v2334 = vmul.f32 %v2281, 0.01
    %v2335 = vmul.f32 %v2284, 0.01
    %v2336 = vmul.f32 %v2287, 0.01
    %v2337 = vmul.f32 %v2290, 0.01
    %v2338 = vmul.f32 %v2293, 0.01
    %v2339 = vmul.f32 %v2296, 0.01
    %v2340 = vmul.f32 %v2299, 0.01
    %v2341 = vmul.f32 %v2302, 0.01
    %v2342 = vmul.f32 %v2305, 0.01
    %v2343 = vmul.f32 %v2308, 0.01
    %v2344 = vmul.f32 %v2311, 0.01
    %v2345 = vsel %vm2313, %v2266, %v2329
    %v2346 = vsel %vm2314, %v2269, %v2330
    %v2347 = vsel %vm2315, %v2272, %v2331
    %v2348 = vsel %vm2316, %v2275, %v2332
    %v2349 = vsel %vm2317, %v2278, %v2333
    %v2350 = vsel %vm2318, %v2281, %v2334
    %v2351 = vsel %vm2319, %v2284, %v2335
    %v2352 = vsel %vm2320, %v2287, %v2336
    %v2353 = vsel %vm2321, %v2290, %v2337
    %v2354 = vsel %vm2322, %v2293, %v2338
    %v2355 = vsel %vm2323, %v2296, %v2339
    %v2356 = vsel %vm2324, %v2299, %v2340
    %v2357 = vsel %vm2325, %v2302, %v2341
    %v2358 = vsel %vm2326, %v2305, %v2342
    %v2359 = vsel %vm2327, %v2308, %v2343
    %v2360 = vsel %vm2328, %v2311, %v2344
    %2361 = vmatpush.msra.mxu0 %v2360
    %2362 = vmatpush.msra.mxu0 %v2359
    %2363 = vmatpush.msra.mxu0 %v2358
    %2364 = vmatpush.msra.mxu0 %v2357
    %2365 = vmatpush.msra.mxu0 %v2356
    %2366 = vmatpush.msra.mxu0 %v2355
    %2367 = vmatpush.msra.mxu0 %v2354
    %2368 = vmatpush.msra.mxu0 %v2353
    %2369 = vmatpush.msra.mxu0 %v2352
    %2370 = vmatpush.msra.mxu0 %v2351
    %2371 = vmatpush.msra.mxu0 %v2350
    %2372 = vmatpush.msra.mxu0 %v2349
    %2373 = vmatpush.msra.mxu0 %v2348
    %2374 = vmatpush.msra.mxu0 %v2347
    %2375 = vmatpush.msra.mxu0 %v2346
    %2376 = vmatpush.msra.mxu0 %v2345
    %2377 = vmatmul.f32.gmra.mxu0 %v1823
    %v2378 = vpop.f32.mrf.mxu0
    %v2379 = vadd.f32 0.0, %v2378
    %2380 = vmatmul.f32.gmra.mxu0 %v1824
    %v2381 = vpop.f32.mrf.mxu0
    %v2382 = vadd.f32 0.0, %v2381
    %2383 = vmatmul.f32.gmra.mxu0 %v1825
    %v2384 = vpop.f32.mrf.mxu0
    %v2385 = vadd.f32 0.0, %v2384
    %2386 = vmatmul.f32.gmra.mxu0 %v1826
    %v2387 = vpop.f32.mrf.mxu0
    %v2388 = vadd.f32 0.0, %v2387
    %2389 = vmatmul.f32.gmra.mxu0 %v1827
    %v2390 = vpop.f32.mrf.mxu0
    %v2391 = vadd.f32 0.0, %v2390
    %2392 = vmatmul.f32.gmra.mxu0 %v1828
    %v2393 = vpop.f32.mrf.mxu0
    %v2394 = vadd.f32 0.0, %v2393
    %2395 = vmatmul.f32.gmra.mxu0 %v1829
    %v2396 = vpop.f32.mrf.mxu0
    %v2397 = vadd.f32 0.0, %v2396
    %2398 = vmatmul.f32.gmra.mxu0 %v1830
    %v2399 = vpop.f32.mrf.mxu0
    %v2400 = vadd.f32 0.0, %v2399
    %2401 = vmatmul.f32.gmra.mxu0 %v1831
    %v2402 = vpop.f32.mrf.mxu0
    %v2403 = vadd.f32 0.0, %v2402
    %2404 = vmatmul.f32.gmra.mxu0 %v1832
    %v2405 = vpop.f32.mrf.mxu0
    %v2406 = vadd.f32 0.0, %v2405
    %2407 = vmatmul.f32.gmra.mxu0 %v1833
    %v2408 = vpop.f32.mrf.mxu0
    %v2409 = vadd.f32 0.0, %v2408
    %2410 = vmatmul.f32.gmra.mxu0 %v1834
    %v2411 = vpop.f32.mrf.mxu0
    %v2412 = vadd.f32 0.0, %v2411
    %2413 = vmatmul.f32.gmra.mxu0 %v1835
    %v2414 = vpop.f32.mrf.mxu0
    %v2415 = vadd.f32 0.0, %v2414
    %2416 = vmatmul.f32.gmra.mxu0 %v1836
    %v2417 = vpop.f32.mrf.mxu0
    %v2418 = vadd.f32 0.0, %v2417
    %2419 = vmatmul.f32.gmra.mxu0 %v1837
    %v2420 = vpop.f32.mrf.mxu0
    %v2421 = vadd.f32 0.0, %v2420
    %2422 = vmatmul.f32.gmra.mxu0 %v1838
    %v2423 = vpop.f32.mrf.mxu0
    %v2424 = vadd.f32 0.0, %v2423
    %2425 = vdwg.mxu0
    %2426 = vmatpush.msra.mxu0 %v2360
    %2427 = vmatpush.msra.mxu0 %v2359
    %2428 = vmatpush.msra.mxu0 %v2358
    %2429 = vmatpush.msra.mxu0 %v2357
    %2430 = vmatpush.msra.mxu0 %v2356
    %2431 = vmatpush.msra.mxu0 %v2355
    %2432 = vmatpush.msra.mxu0 %v2354
    %2433 = vmatpush.msra.mxu0 %v2353
    %2434 = vmatpush.msra.mxu0 %v2352
    %2435 = vmatpush.msra.mxu0 %v2351
    %2436 = vmatpush.msra.mxu0 %v2350
    %2437 = vmatpush.msra.mxu0 %v2349
    %2438 = vmatpush.msra.mxu0 %v2348
    %2439 = vmatpush.msra.mxu0 %v2347
    %2440 = vmatpush.msra.mxu0 %v2346
    %2441 = vmatpush.msra.mxu0 %v2345
    %2442 = vmatmul.f32.gmra.mxu0 %v1904
    %v2443 = vpop.f32.mrf.mxu0
    %v2444 = vadd.f32 0.0, %v2443
    %2445 = vmatmul.f32.gmra.mxu0 %v1905
    %v2446 = vpop.f32.mrf.mxu0
    %v2447 = vadd.f32 0.0, %v2446
    %2448 = vmatmul.f32.gmra.mxu0 %v1906
    %v2449 = vpop.f32.mrf.mxu0
    %v2450 = vadd.f32 0.0, %v2449
    %2451 = vmatmul.f32.gmra.mxu0 %v1907
    %v2452 = vpop.f32.mrf.mxu0
    %v2453 = vadd.f32 0.0, %v2452
    %2454 = vmatmul.f32.gmra.mxu0 %v1908
    %v2455 = vpop.f32.mrf.mxu0
    %v2456 = vadd.f32 0.0, %v2455
    %2457 = vmatmul.f32.gmra.mxu0 %v1909
    %v2458 = vpop.f32.mrf.mxu0
    %v2459 = vadd.f32 0.0, %v2458
    %2460 = vmatmul.f32.gmra.mxu0 %v1910
    %v2461 = vpop.f32.mrf.mxu0
    %v2462 = vadd.f32 0.0, %v2461
    %2463 = vmatmul.f32.gmra.mxu0 %v1911
    %v2464 = vpop.f32.mrf.mxu0
    %v2465 = vadd.f32 0.0, %v2464
    %2466 = vmatmul.f32.gmra.mxu0 %v1912
    %v2467 = vpop.f32.mrf.mxu0
    %v2468 = vadd.f32 0.0, %v2467
    %2469 = vmatmul.f32.gmra.mxu0 %v1913
    %v2470 = vpop.f32.mrf.mxu0
    %v2471 = vadd.f32 0.0, %v2470
    %2472 = vmatmul.f32.gmra.mxu0 %v1914
    %v2473 = vpop.f32.mrf.mxu0
    %v2474 = vadd.f32 0.0, %v2473
    %2475 = vmatmul.f32.gmra.mxu0 %v1915
    %v2476 = vpop.f32.mrf.mxu0
    %v2477 = vadd.f32 0.0, %v2476
    %2478 = vmatmul.f32.gmra.mxu0 %v1916
    %v2479 = vpop.f32.mrf.mxu0
    %v2480 = vadd.f32 0.0, %v2479
    %2481 = vmatmul.f32.gmra.mxu0 %v1917
    %v2482 = vpop.f32.mrf.mxu0
    %v2483 = vadd.f32 0.0, %v2482
    %2484 = vmatmul.f32.gmra.mxu0 %v1918
    %v2485 = vpop.f32.mrf.mxu0
    %v2486 = vadd.f32 0.0, %v2485
    %2487 = vmatmul.f32.gmra.mxu0 %v1919
    %v2488 = vpop.f32.mrf.mxu0
    %v2489 = vadd.f32 0.0, %v2488
    %2490 = vdwg.mxu0
    %2491 = vmatpush.msra.mxu0 %v2360
    %2492 = vmatpush.msra.mxu0 %v2359
    %2493 = vmatpush.msra.mxu0 %v2358
    %2494 = vmatpush.msra.mxu0 %v2357
    %2495 = vmatpush.msra.mxu0 %v2356
    %2496 = vmatpush.msra.mxu0 %v2355
    %2497 = vmatpush.msra.mxu0 %v2354
    %2498 = vmatpush.msra.mxu0 %v2353
    %2499 = vmatpush.msra.mxu0 %v2352
    %2500 = vmatpush.msra.mxu0 %v2351
    %2501 = vmatpush.msra.mxu0 %v2350
    %2502 = vmatpush.msra.mxu0 %v2349
    %2503 = vmatpush.msra.mxu0 %v2348
    %2504 = vmatpush.msra.mxu0 %v2347
    %2505 = vmatpush.msra.mxu0 %v2346
    %2506 = vmatpush.msra.mxu0 %v2345
    %2507 = vmatmul.f32.gmra.mxu0 %v1985
    %v2508 = vpop.f32.mrf.mxu0
    %v2509 = vadd.f32 0.0, %v2508
    %2510 = vmatmul.f32.gmra.mxu0 %v1986
    %v2511 = vpop.f32.mrf.mxu0
    %v2512 = vadd.f32 0.0, %v2511
    %2513 = vmatmul.f32.gmra.mxu0 %v1987
    %v2514 = vpop.f32.mrf.mxu0
    %v2515 = vadd.f32 0.0, %v2514
    %2516 = vmatmul.f32.gmra.mxu0 %v1988
    %v2517 = vpop.f32.mrf.mxu0
    %v2518 = vadd.f32 0.0, %v2517
    %2519 = vmatmul.f32.gmra.mxu0 %v1989
    %v2520 = vpop.f32.mrf.mxu0
    %v2521 = vadd.f32 0.0, %v2520
    %2522 = vmatmul.f32.gmra.mxu0 %v1990
    %v2523 = vpop.f32.mrf.mxu0
    %v2524 = vadd.f32 0.0, %v2523
    %2525 = vmatmul.f32.gmra.mxu0 %v1991
    %v2526 = vpop.f32.mrf.mxu0
    %v2527 = vadd.f32 0.0, %v2526
    %2528 = vmatmul.f32.gmra.mxu0 %v1992
    %v2529 = vpop.f32.mrf.mxu0
    %v2530 = vadd.f32 0.0, %v2529
    %2531 = vmatmul.f32.gmra.mxu0 %v1993
    %v2532 = vpop.f32.mrf.mxu0
    %v2533 = vadd.f32 0.0, %v2532
    %2534 = vmatmul.f32.gmra.mxu0 %v1994
    %v2535 = vpop.f32.mrf.mxu0
    %v2536 = vadd.f32 0.0, %v2535
    %2537 = vmatmul.f32.gmra.mxu0 %v1995
    %v2538 = vpop.f32.mrf.mxu0
    %v2539 = vadd.f32 0.0, %v2538
    %2540 = vmatmul.f32.gmra.mxu0 %v1996
    %v2541 = vpop.f32.mrf.mxu0
    %v2542 = vadd.f32 0.0, %v2541
    %2543 = vmatmul.f32.gmra.mxu0 %v1997
    %v2544 = vpop.f32.mrf.mxu0
    %v2545 = vadd.f32 0.0, %v2544
    %2546 = vmatmul.f32.gmra.mxu0 %v1998
    %v2547 = vpop.f32.mrf.mxu0
    %v2548 = vadd.f32 0.0, %v2547
    %2549 = vmatmul.f32.gmra.mxu0 %v1999
    %v2550 = vpop.f32.mrf.mxu0
    %v2551 = vadd.f32 0.0, %v2550
    %2552 = vmatmul.f32.gmra.mxu0 %v2000
    %v2553 = vpop.f32.mrf.mxu0
    %v2554 = vadd.f32 0.0, %v2553
    %2555 = vdwg.mxu0
    %v2556 = vld [vmem:[#allocation8] sm:$0xff]
    %v2557 = vld [vmem:[#allocation8 + $0x8] sm:$0xff]
    %v2558 = vld [vmem:[#allocation8 + $0x10] sm:$0xff]
    %v2559 = vld [vmem:[#allocation8 + $0x18] sm:$0xff]
    %v2560 = vld [vmem:[#allocation8 + $0x20] sm:$0xff]
    %v2561 = vld [vmem:[#allocation8 + $0x28] sm:$0xff]
    %v2562 = vld [vmem:[#allocation8 + $0x30] sm:$0xff]
    %v2563 = vld [vmem:[#allocation8 + $0x38] sm:$0xff]
    %v2564 = vld [vmem:[#allocation8 + $0x40] sm:$0xff]
    %v2565 = vld [vmem:[#allocation8 + $0x48] sm:$0xff]
    %v2566 = vld [vmem:[#allocation8 + $0x50] sm:$0xff]
    %v2567 = vld [vmem:[#allocation8 + $0x58] sm:$0xff]
    %v2568 = vld [vmem:[#allocation8 + $0x60] sm:$0xff]
    %v2569 = vld [vmem:[#allocation8 + $0x68] sm:$0xff]
    %v2570 = vld [vmem:[#allocation8 + $0x70] sm:$0xff]
    %v2571 = vld [vmem:[#allocation8 + $0x78] sm:$0xff]
    %v2572 = vld [vmem:[#allocation8 + $0x80] sm:$0xff]
    %v2573 = vld [vmem:[#allocation8 + $0x88] sm:$0xff]
    %v2574 = vld [vmem:[#allocation8 + $0x90] sm:$0xff]
    %v2575 = vld [vmem:[#allocation8 + $0x98] sm:$0xff]
    %v2576 = vld [vmem:[#allocation8 + $0xa0] sm:$0xff]
    %v2577 = vld [vmem:[#allocation8 + $0xa8] sm:$0xff]
    %v2578 = vld [vmem:[#allocation8 + $0xb0] sm:$0xff]
    %v2579 = vld [vmem:[#allocation8 + $0xb8] sm:$0xff]
    %v2580 = vld [vmem:[#allocation8 + $0xc0] sm:$0xff]
    %v2581 = vld [vmem:[#allocation8 + $0xc8] sm:$0xff]
    %v2582 = vld [vmem:[#allocation8 + $0xd0] sm:$0xff]
    %v2583 = vld [vmem:[#allocation8 + $0xd8] sm:$0xff]
    %v2584 = vld [vmem:[#allocation8 + $0xe0] sm:$0xff]
    %v2585 = vld [vmem:[#allocation8 + $0xe8] sm:$0xff]
    %v2586 = vld [vmem:[#allocation8 + $0xf0] sm:$0xff]
    %v2587 = vld [vmem:[#allocation8 + $0xf8] sm:$0xff]
    %v2588 = vld [vmem:[#allocation8 + $0x100] sm:$0xff]
    %v2589 = vld [vmem:[#allocation8 + $0x108] sm:$0xff]
    %v2590 = vld [vmem:[#allocation8 + $0x110] sm:$0xff]
    %v2591 = vld [vmem:[#allocation8 + $0x118] sm:$0xff]
    %v2592 = vld [vmem:[#allocation8 + $0x120] sm:$0xff]
    %v2593 = vld [vmem:[#allocation8 + $0x128] sm:$0xff]
    %v2594 = vld [vmem:[#allocation8 + $0x130] sm:$0xff]
    %v2595 = vld [vmem:[#allocation8 + $0x138] sm:$0xff]
    %v2596 = vld [vmem:[#allocation8 + $0x140] sm:$0xff]
    %v2597 = vld [vmem:[#allocation8 + $0x148] sm:$0xff]
    %v2598 = vld [vmem:[#allocation8 + $0x150] sm:$0xff]
    %v2599 = vld [vmem:[#allocation8 + $0x158] sm:$0xff]
    %v2600 = vld [vmem:[#allocation8 + $0x160] sm:$0xff]
    %v2601 = vld [vmem:[#allocation8 + $0x168] sm:$0xff]
    %v2602 = vld [vmem:[#allocation8 + $0x170] sm:$0xff]
    %v2603 = vld [vmem:[#allocation8 + $0x178] sm:$0xff]
    %v2604 = vld [vmem:[%s9] sm:$0x1]
    %v2606 = vperm.slane %v2604, 0
    %2608 = vmatpush.msra.mxu0 %v2571
    %2609 = vmatpush.msra.mxu0 %v2570
    %2610 = vmatpush.msra.mxu0 %v2569
    %2611 = vmatpush.msra.mxu0 %v2568
    %2612 = vmatpush.msra.mxu0 %v2567
    %2613 = vmatpush.msra.mxu0 %v2566
    %2614 = vmatpush.msra.mxu0 %v2565
    %2615 = vmatpush.msra.mxu0 %v2564
    %2616 = vmatpush.msra.mxu0 %v2563
    %2617 = vmatpush.msra.mxu0 %v2562
    %2618 = vmatpush.msra.mxu0 %v2561
    %2619 = vmatpush.msra.mxu0 %v2560
    %2620 = vmatpush.msra.mxu0 %v2559
    %2621 = vmatpush.msra.mxu0 %v2558
    %2622 = vmatpush.msra.mxu0 %v2557
    %2623 = vmatpush.msra.mxu0 %v2556
    %2624 = vmatmul.f32.gmra.mxu0 %v2379
    %v2625 = vpop.f32.mrf.mxu0
    %v2626 = vadd.f32 %v2606, %v2625
    %2627 = vmatmul.f32.gmra.mxu0 %v2382
    %v2628 = vpop.f32.mrf.mxu0
    %v2629 = vadd.f32 %v2606, %v2628
    %2630 = vmatmul.f32.gmra.mxu0 %v2385
    %v2631 = vpop.f32.mrf.mxu0
    %v2632 = vadd.f32 %v2606, %v2631
    %2633 = vmatmul.f32.gmra.mxu0 %v2388
    %v2634 = vpop.f32.mrf.mxu0
    %v2635 = vadd.f32 %v2606, %v2634
    %2636 = vmatmul.f32.gmra.mxu0 %v2391
    %v2637 = vpop.f32.mrf.mxu0
    %v2638 = vadd.f32 %v2606, %v2637
    %2639 = vmatmul.f32.gmra.mxu0 %v2394
    %v2640 = vpop.f32.mrf.mxu0
    %v2641 = vadd.f32 %v2606, %v2640
    %2642 = vmatmul.f32.gmra.mxu0 %v2397
    %v2643 = vpop.f32.mrf.mxu0
    %v2644 = vadd.f32 %v2606, %v2643
    %2645 = vmatmul.f32.gmra.mxu0 %v2400
    %v2646 = vpop.f32.mrf.mxu0
    %v2647 = vadd.f32 %v2606, %v2646
    %2648 = vmatmul.f32.gmra.mxu0 %v2403
    %v2649 = vpop.f32.mrf.mxu0
    %v2650 = vadd.f32 %v2606, %v2649
    %2651 = vmatmul.f32.gmra.mxu0 %v2406
    %v2652 = vpop.f32.mrf.mxu0
    %v2653 = vadd.f32 %v2606, %v2652
    %2654 = vmatmul.f32.gmra.mxu0 %v2409
    %v2655 = vpop.f32.mrf.mxu0
    %v2656 = vadd.f32 %v2606, %v2655
    %2657 = vmatmul.f32.gmra.mxu0 %v2412
    %v2658 = vpop.f32.mrf.mxu0
    %v2659 = vadd.f32 %v2606, %v2658
    %2660 = vmatmul.f32.gmra.mxu0 %v2415
    %v2661 = vpop.f32.mrf.mxu0
    %v2662 = vadd.f32 %v2606, %v2661
    %2663 = vmatmul.f32.gmra.mxu0 %v2418
    %v2664 = vpop.f32.mrf.mxu0
    %v2665 = vadd.f32 %v2606, %v2664
    %2666 = vmatmul.f32.gmra.mxu0 %v2421
    %v2667 = vpop.f32.mrf.mxu0
    %v2668 = vadd.f32 %v2606, %v2667
    %2669 = vmatmul.f32.gmra.mxu0 %v2424
    %v2670 = vpop.f32.mrf.mxu0
    %v2671 = vadd.f32 %v2606, %v2670
    %2672 = vdwg.mxu0
    %2673 = vmatpush.msra.mxu0 %v2587
    %2674 = vmatpush.msra.mxu0 %v2586
    %2675 = vmatpush.msra.mxu0 %v2585
    %2676 = vmatpush.msra.mxu0 %v2584
    %2677 = vmatpush.msra.mxu0 %v2583
    %2678 = vmatpush.msra.mxu0 %v2582
    %2679 = vmatpush.msra.mxu0 %v2581
    %2680 = vmatpush.msra.mxu0 %v2580
    %2681 = vmatpush.msra.mxu0 %v2579
    %2682 = vmatpush.msra.mxu0 %v2578
    %2683 = vmatpush.msra.mxu0 %v2577
    %2684 = vmatpush.msra.mxu0 %v2576
    %2685 = vmatpush.msra.mxu0 %v2575
    %2686 = vmatpush.msra.mxu0 %v2574
    %2687 = vmatpush.msra.mxu0 %v2573
    %2688 = vmatpush.msra.mxu0 %v2572
    %2689 = vmatmul.f32.gmra.mxu0 %v2444
    %v2690 = vpop.f32.mrf.mxu0
    %v2691 = vadd.f32 %v2626, %v2690
    %2692 = vmatmul.f32.gmra.mxu0 %v2447
    %v2693 = vpop.f32.mrf.mxu0
    %v2694 = vadd.f32 %v2629, %v2693
    %2695 = vmatmul.f32.gmra.mxu0 %v2450
    %v2696 = vpop.f32.mrf.mxu0
    %v2697 = vadd.f32 %v2632, %v2696
    %2698 = vmatmul.f32.gmra.mxu0 %v2453
    %v2699 = vpop.f32.mrf.mxu0
    %v2700 = vadd.f32 %v2635, %v2699
    %2701 = vmatmul.f32.gmra.mxu0 %v2456
    %v2702 = vpop.f32.mrf.mxu0
    %v2703 = vadd.f32 %v2638, %v2702
    %2704 = vmatmul.f32.gmra.mxu0 %v2459
    %v2705 = vpop.f32.mrf.mxu0
    %v2706 = vadd.f32 %v2641, %v2705
    %2707 = vmatmul.f32.gmra.mxu0 %v2462
    %v2708 = vpop.f32.mrf.mxu0
    %v2709 = vadd.f32 %v2644, %v2708
    %2710 = vmatmul.f32.gmra.mxu0 %v2465
    %v2711 = vpop.f32.mrf.mxu0
    %v2712 = vadd.f32 %v2647, %v2711
    %2713 = vmatmul.f32.gmra.mxu0 %v2468
    %v2714 = vpop.f32.mrf.mxu0
    %v2715 = vadd.f32 %v2650, %v2714
    %2716 = vmatmul.f32.gmra.mxu0 %v2471
    %v2717 = vpop.f32.mrf.mxu0
    %v2718 = vadd.f32 %v2653, %v2717
    %2719 = vmatmul.f32.gmra.mxu0 %v2474
    %v2720 = vpop.f32.mrf.mxu0
    %v2721 = vadd.f32 %v2656, %v2720
    %2722 = vmatmul.f32.gmra.mxu0 %v2477
    %v2723 = vpop.f32.mrf.mxu0
    %v2724 = vadd.f32 %v2659, %v2723
    %2725 = vmatmul.f32.gmra.mxu0 %v2480
    %v2726 = vpop.f32.mrf.mxu0
    %v2727 = vadd.f32 %v2662, %v2726
    %2728 = vmatmul.f32.gmra.mxu0 %v2483
    %v2729 = vpop.f32.mrf.mxu0
    %v2730 = vadd.f32 %v2665, %v2729
    %2731 = vmatmul.f32.gmra.mxu0 %v2486
    %v2732 = vpop.f32.mrf.mxu0
    %v2733 = vadd.f32 %v2668, %v2732
    %2734 = vmatmul.f32.gmra.mxu0 %v2489
    %v2735 = vpop.f32.mrf.mxu0
    %v2736 = vadd.f32 %v2671, %v2735
    %2737 = vdwg.mxu0
    %2738 = vmatpush.msra.mxu0 %v2603
    %2739 = vmatpush.msra.mxu0 %v2602
    %2740 = vmatpush.msra.mxu0 %v2601
    %2741 = vmatpush.msra.mxu0 %v2600
    %2742 = vmatpush.msra.mxu0 %v2599
    %2743 = vmatpush.msra.mxu0 %v2598
    %2744 = vmatpush.msra.mxu0 %v2597
    %2745 = vmatpush.msra.mxu0 %v2596
    %2746 = vmatpush.msra.mxu0 %v2595
    %2747 = vmatpush.msra.mxu0 %v2594
    %2748 = vmatpush.msra.mxu0 %v2593
    %2749 = vmatpush.msra.mxu0 %v2592
    %2750 = vmatpush.msra.mxu0 %v2591
    %2751 = vmatpush.msra.mxu0 %v2590
    %2752 = vmatpush.msra.mxu0 %v2589
    %2753 = vmatpush.msra.mxu0 %v2588
    %2754 = vmatmul.f32.gmra.mxu0 %v2509
    %v2755 = vpop.f32.mrf.mxu0
    %v2756 = vadd.f32 %v2691, %v2755
    %2757 = vmatmul.f32.gmra.mxu0 %v2512
    %v2758 = vpop.f32.mrf.mxu0
    %v2759 = vadd.f32 %v2694, %v2758
    %2760 = vmatmul.f32.gmra.mxu0 %v2515
    %v2761 = vpop.f32.mrf.mxu0
    %v2762 = vadd.f32 %v2697, %v2761
    %2763 = vmatmul.f32.gmra.mxu0 %v2518
    %v2764 = vpop.f32.mrf.mxu0
    %v2765 = vadd.f32 %v2700, %v2764
    %2766 = vmatmul.f32.gmra.mxu0 %v2521
    %v2767 = vpop.f32.mrf.mxu0
    %v2768 = vadd.f32 %v2703, %v2767
    %2769 = vmatmul.f32.gmra.mxu0 %v2524
    %v2770 = vpop.f32.mrf.mxu0
    %v2771 = vadd.f32 %v2706, %v2770
    %2772 = vmatmul.f32.gmra.mxu0 %v2527
    %v2773 = vpop.f32.mrf.mxu0
    %v2774 = vadd.f32 %v2709, %v2773
    %2775 = vmatmul.f32.gmra.mxu0 %v2530
    %v2776 = vpop.f32.mrf.mxu0
    %v2777 = vadd.f32 %v2712, %v2776
    %2778 = vmatmul.f32.gmra.mxu0 %v2533
    %v2779 = vpop.f32.mrf.mxu0
    %v2780 = vadd.f32 %v2715, %v2779
    %2781 = vmatmul.f32.gmra.mxu0 %v2536
    %v2782 = vpop.f32.mrf.mxu0
    %v2783 = vadd.f32 %v2718, %v2782
    %2784 = vmatmul.f32.gmra.mxu0 %v2539
    %v2785 = vpop.f32.mrf.mxu0
    %v2786 = vadd.f32 %v2721, %v2785
    %2787 = vmatmul.f32.gmra.mxu0 %v2542
    %v2788 = vpop.f32.mrf.mxu0
    %v2789 = vadd.f32 %v2724, %v2788
    %2790 = vmatmul.f32.gmra.mxu0 %v2545
    %v2791 = vpop.f32.mrf.mxu0
    %v2792 = vadd.f32 %v2727, %v2791
    %2793 = vmatmul.f32.gmra.mxu0 %v2548
    %v2794 = vpop.f32.mrf.mxu0
    %v2795 = vadd.f32 %v2730, %v2794
    %2796 = vmatmul.f32.gmra.mxu0 %v2551
    %v2797 = vpop.f32.mrf.mxu0
    %v2798 = vadd.f32 %v2733, %v2797
    %2799 = vmatmul.f32.gmra.mxu0 %v2554
    %v2800 = vpop.f32.mrf.mxu0
    %v2801 = vadd.f32 %v2736, %v2800
    %2802 = vdwg.mxu0
    %2803 = vst [vmem:[#allocation11] sm:$0xff] %v2756
    %2804 = vst [vmem:[#allocation11 + $0x8] sm:$0xff] %v2759
    %2805 = vst [vmem:[#allocation11 + $0x10] sm:$0xff] %v2762
    %2806 = vst [vmem:[#allocation11 + $0x18] sm:$0xff] %v2765
    %2807 = vst [vmem:[#allocation11 + $0x20] sm:$0xff] %v2768
    %2808 = vst [vmem:[#allocation11 + $0x28] sm:$0xff] %v2771
    %2809 = vst [vmem:[#allocation11 + $0x30] sm:$0xff] %v2774
    %2810 = vst [vmem:[#allocation11 + $0x38] sm:$0xff] %v2777
    %2811 = vst [vmem:[#allocation11 + $0x40] sm:$0xff] %v2780
    %2812 = vst [vmem:[#allocation11 + $0x48] sm:$0xff] %v2783
    %2813 = vst [vmem:[#allocation11 + $0x50] sm:$0xff] %v2786
    %2814 = vst [vmem:[#allocation11 + $0x58] sm:$0xff] %v2789
    %2815 = vst [vmem:[#allocation11 + $0x60] sm:$0xff] %v2792
    %2816 = vst [vmem:[#allocation11 + $0x68] sm:$0xff] %v2795
    %2817 = vst [vmem:[#allocation11 + $0x70] sm:$0xff] %v2798
    %2818 = vst [vmem:[#allocation11 + $0x78] sm:$0xff] %v2801
    // Predicated region
    $region58: #{gcned_forward_padded.1} parent=1 // pred_check
      _
    $region59: #{gcned_forward_padded.1} parent=1 // pred_check_branch
      %2820 = sbr.rel (0) target = $region61
    $region60: #{gcned_forward_padded.1} parent=1 // pred_region
      %2822 = vsyncadd [#allocation4], 0
      %s2823 = sshll.u32 [#allocation10], 4
      %s2824 = int_to_ptr.vmem [resolvable:$true] %s2823
      %s2825 = sshll.u32 %s10, 4
      %s2826 = int_to_ptr.hbm [resolvable:$true] %s2825
      %2831 = dma.vmem_to_hbm [thread:$0]  %s2824, 2048, %s2826, [#allocation4], 128, 128, 8
    $region61: #{gcned_forward_padded.1} parent=1 // pred_fallthru
      _
    // Predicated region
    $region62: #{gcned_forward_padded.1} parent=1 // pred_check
      _
    $region63: #{gcned_forward_padded.1} parent=1 // pred_check_branch
      %2833 = sbr.rel (0) target = $region65
    $region64: #{gcned_forward_padded.1} parent=1 // pred_region
      %2835 = vsyncadd [#allocation12], 0
      %s2836 = sshll.u32 [#allocation11], 4
      %s2837 = int_to_ptr.vmem [resolvable:$true] %s2836
      %s2838 = sshll.u32 %s11, 4
      %s2839 = int_to_ptr.hbm [resolvable:$true] %s2838
      %2844 = dma.vmem_to_hbm [thread:$0]  %s2837, 2048, %s2839, [#allocation12], 128, 128, 8
    $region65: #{gcned_forward_padded.1} parent=1 // pred_fallthru
      _
    // Predicated region
    $region66: #{gcned_forward_padded.1} parent=1 // pred_check
      _
    $region67: #{gcned_forward_padded.1} parent=1 // pred_check_branch
      %2846 = sbr.rel (0) target = $region69
    $region68: #{gcned_forward_padded.1} parent=1 // pred_region
      %2848 = dma.done [#allocation4], 2048
    $region69: #{gcned_forward_padded.1} parent=1 // pred_fallthru
      _
    // Predicated region
    $region70: #{gcned_forward_padded.1} parent=1 // pred_check
      _
    $region71: #{gcned_forward_padded.1} parent=1 // pred_check_branch
      %2850 = sbr.rel (0) target = $region73
    $region72: #{gcned_forward_padded.1} parent=1 // pred_region
      %2852 = dma.done [#allocation12], 2048
    $region73: #{gcned_forward_padded.1} parent=1 // pred_fallthru
      _
    %2853 = vsyncpa [#allocation3], 1
    %2854 = vsyncpa [#allocation6], 1
    %2855 = vsyncpa [#allocation9], 1
    %2856 = vsyncpa [#allocation4], 1
    %2857 = vsyncpa [#allocation12], 1

</llo_original>
